<compile_context>
chip_gen: v5e
topology: v5e:2x2
jax: 0.10.0
libtpu: 0.0.40
codegen_flags: <defaults>
</compile_context>

<pallas_src>
import jax
import jax.numpy as jnp
import numpy as np
from jax.experimental import pallas as pl
from jax.experimental.pallas import tpu as pltpu

# Logical LeNet-5 sizes.
NUM_CLASSES = 10
C1, C2, C3, F1 = 6, 16, 120, 84
# Kernel-side (TPU-friendly) sizes.
IMG = 32              # input is 32x32
NPIX = IMG * IMG      # 1024 lanes: every spatial map lives in this flattened frame
C1P = 8               # conv1 channels padded 6 -> 8
K1P = 32              # conv1 taps padded 25 -> 32
K2 = 25 * C1P         # 200 = conv2 taps (25) x padded in-channels (8)
P3 = 32               # pooled 5x5 conv2 map: 25 positions padded to 32 lanes
NCP = 128             # padded feature / class width (120->128, 84->128, 10->128)


# --------------------------------------------------------------------------
# The fused kernel: one grid step == one image, weights VMEM-resident.
# --------------------------------------------------------------------------
def _lenet5_kernel(x_ref, w1_ref, b1_ref, w2_ref, b2_ref, pool_ref,
                   w3_ref, b3_ref, w4_ref, b4_ref, w5_ref, b5_ref,
                   o_ref, xt_ref, kt_ref):
    def shl(a, k):
        """y[..., p] = a[..., p + k] (lane shift; wrap never reaches valid lanes)."""
        if k == 0:
            return a
        return pltpu.roll(a, shift=(-k) % a.shape[-1], axis=1)

    x = x_ref[0]                                               # (1, 1024) flattened image

    # ---- conv1 (1->6, 5x5) + tanh: in-kernel tap matrix -> one MXU GEMM ------
    xt_ref[pl.ds(25, K1P - 25), :] = jnp.zeros((K1P - 25, NPIX), jnp.float32)
    for ki in range(5):
        for kj in range(5):
            xt_ref[pl.ds(5 * ki + kj, 1), :] = shl(x, IMG * ki + kj)
    a1 = jnp.tanh(jnp.dot(w1_ref[...], xt_ref[...],
                          preferred_element_type=jnp.float32) + b1_ref[...])   # (8, 1024)

    # ---- avgpool1 (2x2 / 2): 3 lane shifts; result stays in the 32x32 frame,
    #      valid pooled pixels sit at lanes 64*oh + 2*ow. -----------------------
    a1p = 0.25 * (a1 + shl(a1, 1) + shl(a1, IMG) + shl(a1, IMG + 1))           # (8, 1024)

    # ---- conv2 (6->16, 5x5 on the pooled map) + tanh: taps are lane shifts of
    #      64u + 2v (pool-grid neighbours are 2 apart in the original frame). --
    for u in range(5):
        for v in range(5):
            kt_ref[pl.ds(C1P * (5 * u + v), C1P), :] = shl(a1p, 2 * IMG * u + 2 * v)
    a2 = jnp.tanh(jnp.dot(w2_ref[...], kt_ref[...],
                          preferred_element_type=jnp.float32) + b2_ref[...])   # (16, 1024)

    # ---- avgpool2 + gather of the 5x5 map, folded into ONE selection GEMM ----
    pooled = jnp.dot(a2, pool_ref[...], preferred_element_type=jnp.float32)    # (16, 32)

    # ---- conv3 (16->120 dense over the 5x5x16 map) + tanh --------------------
    z3 = b3_ref[...]                                                           # (1, 128)
    for ci in range(C2):
        tmp = jnp.dot(pooled, w3_ref[ci], preferred_element_type=jnp.float32)  # (16, 128)
        z3 = z3 + tmp[ci:ci + 1, :]
    h = jnp.broadcast_to(jnp.tanh(z3), (8, NCP))        # M>=8 keeps the MXU happy

    # ---- fc1 + tanh, fc2, masked softmax -------------------------------------
    h = jnp.tanh(jnp.dot(h, w4_ref[...], preferred_element_type=jnp.float32) + b4_ref[...])
    logits = jnp.dot(h, w5_ref[...], preferred_element_type=jnp.float32) + b5_ref[...]
    lane = jax.lax.broadcasted_iota(jnp.int32, logits.shape, 1)
    logits = jnp.where(lane < NUM_CLASSES, logits, -1e30)      # hide 118 padded classes
    m = jnp.max(logits, axis=-1, keepdims=True)
    e = jnp.exp(logits - m)
    probs = e / jnp.sum(e, axis=-1, keepdims=True)
    o_ref[0] = probs[0:1, :].astype(o_ref.dtype)


# --------------------------------------------------------------------------
# pallas_call wrapper (single launch, grid over the batch).
# --------------------------------------------------------------------------
def lenet5_forward(x, kp):
    """x: [B, 1, 32, 32] float32 -> class probabilities [B, 10]."""
    b = x.shape[0]
    xflat = x.astype(jnp.float32).reshape(b, 1, NPIX)

    def fullspec(a):
        return pl.BlockSpec(a.shape, lambda i, nd=a.ndim: (0,) * nd)

    flops_per_img = 2 * (C1P * K1P * NPIX + C2 * K2 * NPIX + C2 * NPIX * P3
                         + C2 * (C2 * P3 * NCP) + 2 * 8 * NCP * NCP)
    out = pl.pallas_call(
        _lenet5_kernel,
        out_shape=jax.ShapeDtypeStruct((b, 1, NCP), jnp.float32),
        grid_spec=pltpu.PrefetchScalarGridSpec(
            num_scalar_prefetch=0,
            grid=(b,),
            in_specs=[
                pl.BlockSpec((1, 1, NPIX), lambda i: (i, 0, 0)),   # one image / step
                fullspec(kp["w1"]), fullspec(kp["b1"]),
                fullspec(kp["w2"]), fullspec(kp["b2"]),
                fullspec(kp["pool"]),
                fullspec(kp["w3"]), fullspec(kp["b3"]),
                fullspec(kp["w4"]), fullspec(kp["b4"]),
                fullspec(kp["w5"]), fullspec(kp["b5"]),
            ],
            out_specs=pl.BlockSpec((1, 1, NCP), lambda i: (i, 0, 0)),
            scratch_shapes=[
                pltpu.VMEM((K1P, NPIX), jnp.float32),   # conv1 tap matrix (128 KiB)
                pltpu.VMEM((K2, NPIX), jnp.float32),    # conv2 tap matrix (800 KiB)
            ],
        ),
        compiler_params=pltpu.CompilerParams(dimension_semantics=("parallel",)),
        cost_estimate=pl.CostEstimate(
            flops=b * flops_per_img,
            transcendentals=b * (C1P * NPIX + C2 * NPIX + 3 * 8 * NCP),
            bytes_accessed=4 * (b * (NPIX + NCP) + K1P * C1P + C2 * K2 + NPIX * P3
                                + C2 * P3 * NCP + 2 * NCP * NCP)),
    )(xflat, kp["w1"], kp["b1"], kp["w2"], kp["b2"], kp["pool"],
      kp["w3"], kp["b3"], kp["w4"], kp["b4"], kp["w5"], kp["b5"])
    return out[:, 0, :NUM_CLASSES]


# --------------------------------------------------------------------------
# Parameters (PyTorch layout) and their kernel-side packing.
# --------------------------------------------------------------------------
def init_lenet5_params(key):
    """U(-1/sqrt(fan_in), 1/sqrt(fan_in)) init, mirroring nn.Conv2d / nn.Linear."""
    ks = jax.random.split(key, 10)

    def u(k, shape, fan_in):
        bound = 1.0 / (fan_in ** 0.5)
        return jax.random.uniform(k, shape, jnp.float32, -bound, bound)

    return {
        "conv1_w": u(ks[0], (C1, 1, 5, 5), 25),       "conv1_b": u(ks[1], (C1,), 25),
        "conv2_w": u(ks[2], (C2, C1, 5, 5), C1 * 25), "conv2_b": u(ks[3], (C2,), C1 * 25),
        "conv3_w": u(ks[4], (C3, C2, 5, 5), C2 * 25), "conv3_b": u(ks[5], (C3,), C2 * 25),
        "fc1_w": u(ks[6], (F1, C3), C3),              "fc1_b": u(ks[7], (F1,), C3),
        "fc2_w": u(ks[8], (NUM_CLASSES, F1), F1),     "fc2_b": u(ks[9], (NUM_CLASSES,), F1),
    }


def prepare_kernel_weights(p):
    f32 = jnp.float32

    # conv1: [6,1,5,5] -> (8, 32) GEMM weight (rows = out-ch, cols = tap 5*ki+kj).
    w1 = p["conv1_w"][:, 0].reshape(C1, 25)
    w1 = jnp.pad(w1, ((0, C1P - C1), (0, K1P - 25))).astype(f32)
    b1 = jnp.pad(p["conv1_b"], (0, C1P - C1)).reshape(C1P, 1).astype(f32)

    # conv2: [16,6,5,5] -> (16, 200) with column index 8*(5u+v)+ci.
    w2 = jnp.pad(p["conv2_w"].transpose(0, 2, 3, 1),
                 ((0, 0), (0, 0), (0, 0), (0, C1P - C1)))
    w2 = w2.reshape(C2, K2).astype(f32)
    b2 = p["conv2_b"].reshape(C2, 1).astype(f32)

    # avgpool2 + "gather the 5x5 map" folded into one (1024, 32) selection matrix:
    # column 5i+j averages the 4 conv2 outputs of pool window (i, j), which live
    # at lanes 128i + 4j + {0, 2, 64, 66} of the flattened 32x32 frame.
    pool = np.zeros((NPIX, P3), np.float32)
    for i in range(5):
        for j in range(5):
            base = 4 * IMG * i + 4 * j
            for off in (0, 2, 2 * IMG, 2 * IMG + 2):
                pool[base + off, 5 * i + j] = 0.25
    pool = jnp.asarray(pool)

    # conv3: [120,16,5,5] -> (16, 32, 128): w3[ci, 5i+j, c3].
    w3 = p["conv3_w"].transpose(1, 2, 3, 0).reshape(C2, 25, C3)
    w3 = jnp.pad(w3, ((0, 0), (0, P3 - 25), (0, NCP - C3))).astype(f32)
    b3 = jnp.pad(p["conv3_b"], (0, NCP - C3)).reshape(1, NCP).astype(f32)

    # fc1: [84,120] -> (128,128);  fc2: [10,84] -> (128,128)  (zero padding).
    w4 = jnp.pad(p["fc1_w"].T, ((0, NCP - C3), (0, NCP - F1))).astype(f32)
    b4 = jnp.pad(p["fc1_b"], (0, NCP - F1)).reshape(1, NCP).astype(f32)
    w5 = jnp.pad(p["fc2_w"].T, ((0, NCP - F1), (0, NCP - NUM_CLASSES))).astype(f32)
    b5 = jnp.pad(p["fc2_b"], (0, NCP - NUM_CLASSES)).reshape(1, NCP).astype(f32)

    return {"w1": w1, "b1": b1, "w2": w2, "b2": b2, "pool": pool,
            "w3": w3, "b3": b3, "w4": w4, "b4": b4, "w5": w5, "b5": b5}


# --------------------------------------------------------------------------
# Pure-JAX reference (PyTorch semantics, HIGHEST precision).
# --------------------------------------------------------------------------
def lenet5_reference(x, p):
    hp = jax.lax.Precision.HIGHEST

    def conv(h, w, b):
        y = jax.lax.conv_general_dilated(
            h, w, window_strides=(1, 1), padding="VALID",
            dimension_numbers=("NCHW", "OIHW", "NCHW"), precision=hp)
        return y + b[None, :, None, None]

    def avgpool(h):
        return jax.lax.reduce_window(h, 0.0, jax.lax.add,
                                     (1, 1, 2, 2), (1, 1, 2, 2), "VALID") * 0.25

    h = jnp.tanh(conv(x, p["conv1_w"], p["conv1_b"]))
    h = avgpool(h)
    h = jnp.tanh(conv(h, p["conv2_w"], p["conv2_b"]))
    h = avgpool(h)
    h = jnp.tanh(conv(h, p["conv3_w"], p["conv3_b"]))
    h = h.reshape(h.shape[0], -1)                                   # [B, 120]
    h = jnp.tanh(jnp.dot(h, p["fc1_w"].T, precision=hp) + p["fc1_b"])
    logits = jnp.dot(h, p["fc2_w"].T, precision=hp) + p["fc2_b"]
    return jax.nn.softmax(logits, axis=1)


if __name__ == "__main__":
    key = jax.random.PRNGKey(0)
    pkey, xkey = jax.random.split(key)
    params = init_lenet5_params(pkey)
    kparams = prepare_kernel_weights(params)

    B = 4
    x = jax.random.normal(xkey, (B, 1, 32, 32), jnp.float32)

    fwd = jax.jit(lenet5_forward)
    out = jax.block_until_ready(fwd(x, kparams))

    ref = lenet5_reference(x, params)
    assert out.shape == (B, NUM_CLASSES)
    assert bool(jnp.all(jnp.isfinite(out)))
    assert jnp.allclose(jnp.sum(out, axis=1), 1.0, atol=1e-4)
    assert jnp.allclose(out, ref, atol=2e-3, rtol=2e-3), (
        f"max abs diff {float(jnp.max(jnp.abs(out - ref)))}")
    print("KERNEL_OK")
</pallas_src>

<mosaic_0001>
module attributes {stable_mosaic.version = 11 : i64} {
  func.func @_lenet5_kernel(%arg0: i32, %arg1: memref<1x1x1024xf32, #tpu.memory_space<vmem>>, %arg2: memref<8x32xf32, #tpu.memory_space<vmem>>, %arg3: memref<8x1xf32, #tpu.memory_space<vmem>>, %arg4: memref<16x200xf32, #tpu.memory_space<vmem>>, %arg5: memref<16x1xf32, #tpu.memory_space<vmem>>, %arg6: memref<1024x32xf32, #tpu.memory_space<vmem>>, %arg7: memref<16x32x128xf32, #tpu.memory_space<vmem>>, %arg8: memref<1x128xf32, #tpu.memory_space<vmem>>, %arg9: memref<128x128xf32, #tpu.memory_space<vmem>>, %arg10: memref<1x128xf32, #tpu.memory_space<vmem>>, %arg11: memref<128x128xf32, #tpu.memory_space<vmem>>, %arg12: memref<1x128xf32, #tpu.memory_space<vmem>>, %arg13: memref<1x1x128xf32, #tpu.memory_space<vmem>>, %arg14: memref<32x1024xf32, #tpu.memory_space<vmem>>, %arg15: memref<200x1024xf32, #tpu.memory_space<vmem>>) attributes {dimension_semantics = [#tpu.dimension_semantics<parallel>], iteration_bounds = array<i64: 4>, scalar_prefetch = 0 : i64, scratch_operands = 2 : i64, tpu.core_type = #tpu.core_type<tc>, window_params = [{transform_indices = @transform_0, window_bounds = array<i64: 1, 1, 1024>}, {pipeline_mode = #tpu.pipeline_mode<synchronous>, transform_indices = @transform_1, window_bounds = array<i64: 8, 32>}, {pipeline_mode = #tpu.pipeline_mode<synchronous>, transform_indices = @transform_2, window_bounds = array<i64: 8, 1>}, {pipeline_mode = #tpu.pipeline_mode<synchronous>, transform_indices = @transform_3, window_bounds = array<i64: 16, 200>}, {pipeline_mode = #tpu.pipeline_mode<synchronous>, transform_indices = @transform_4, window_bounds = array<i64: 16, 1>}, {pipeline_mode = #tpu.pipeline_mode<synchronous>, transform_indices = @transform_5, window_bounds = array<i64: 1024, 32>}, {pipeline_mode = #tpu.pipeline_mode<synchronous>, transform_indices = @transform_6, window_bounds = array<i64: 16, 32, 128>}, {pipeline_mode = #tpu.pipeline_mode<synchronous>, transform_indices = @transform_7, window_bounds = array<i64: 1, 128>}, {pipeline_mode = #tpu.pipeline_mode<synchronous>, transform_indices = @transform_8, window_bounds = array<i64: 128, 128>}, {pipeline_mode = #tpu.pipeline_mode<synchronous>, transform_indices = @transform_9, window_bounds = array<i64: 1, 128>}, {pipeline_mode = #tpu.pipeline_mode<synchronous>, transform_indices = @transform_10, window_bounds = array<i64: 128, 128>}, {pipeline_mode = #tpu.pipeline_mode<synchronous>, transform_indices = @transform_11, window_bounds = array<i64: 1, 128>}, {transform_indices = @transform_12, window_bounds = array<i64: 1, 1, 128>}]} {
    %c0 = arith.constant 0 : index
    %c0_0 = arith.constant 0 : index
    %c0_1 = arith.constant 0 : index
    %0 = vector.load %arg1[%c0, %c0_0, %c0_1] : memref<1x1x1024xf32, #tpu.memory_space<vmem>>, vector<1x1x1024xf32>
    %1 = vector.shape_cast %0 : vector<1x1x1024xf32> to vector<1x1024xf32>
    %cst = arith.constant 0.000000e+00 : f32
    %2 = vector.broadcast %cst : f32 to vector<7x1024xf32>
    %c25 = arith.constant 25 : index
    %c0_2 = arith.constant 0 : index
    %3 = vector.load %arg14[%c25, %c0_2] : memref<32x1024xf32, #tpu.memory_space<vmem>>, vector<7x1024xf32>
    tpu.vector_store %arg14[%c25, %c0_2], %2 {strides = array<i32>} : memref<32x1024xf32, #tpu.memory_space<vmem>>, vector<7x1024xf32>,
    %c0_3 = arith.constant 0 : index
    %c0_4 = arith.constant 0 : index
    %4 = vector.load %arg14[%c0_3, %c0_4] : memref<32x1024xf32, #tpu.memory_space<vmem>>, vector<1x1024xf32>
    tpu.vector_store %arg14[%c0_3, %c0_4], %1 {strides = array<i32>} : memref<32x1024xf32, #tpu.memory_space<vmem>>, vector<1x1024xf32>,
    %c1023_i32 = arith.constant 1023 : i32
    %5 = tpu.dynamic_rotate %1 by %c1023_i32 dim 1 : vector<1x1024xf32>, i32 -> vector<1x1024xf32>
    %c1 = arith.constant 1 : index
    %c0_5 = arith.constant 0 : index
    %6 = vector.load %arg14[%c1, %c0_5] : memref<32x1024xf32, #tpu.memory_space<vmem>>, vector<1x1024xf32>
    tpu.vector_store %arg14[%c1, %c0_5], %5 {strides = array<i32>} : memref<32x1024xf32, #tpu.memory_space<vmem>>, vector<1x1024xf32>,
    %c1022_i32 = arith.constant 1022 : i32
    %7 = tpu.dynamic_rotate %1 by %c1022_i32 dim 1 : vector<1x1024xf32>, i32 -> vector<1x1024xf32>
    %c2 = arith.constant 2 : index
    %c0_6 = arith.constant 0 : index
    %8 = vector.load %arg14[%c2, %c0_6] : memref<32x1024xf32, #tpu.memory_space<vmem>>, vector<1x1024xf32>
    tpu.vector_store %arg14[%c2, %c0_6], %7 {strides = array<i32>} : memref<32x1024xf32, #tpu.memory_space<vmem>>, vector<1x1024xf32>,
    %c1021_i32 = arith.constant 1021 : i32
    %9 = tpu.dynamic_rotate %1 by %c1021_i32 dim 1 : vector<1x1024xf32>, i32 -> vector<1x1024xf32>
    %c3 = arith.constant 3 : index
    %c0_7 = arith.constant 0 : index
    %10 = vector.load %arg14[%c3, %c0_7] : memref<32x1024xf32, #tpu.memory_space<vmem>>, vector<1x1024xf32>
    tpu.vector_store %arg14[%c3, %c0_7], %9 {strides = array<i32>} : memref<32x1024xf32, #tpu.memory_space<vmem>>, vector<1x1024xf32>,
    %c1020_i32 = arith.constant 1020 : i32
    %11 = tpu.dynamic_rotate %1 by %c1020_i32 dim 1 : vector<1x1024xf32>, i32 -> vector<1x1024xf32>
    %c4 = arith.constant 4 : index
    %c0_8 = arith.constant 0 : index
    %12 = vector.load %arg14[%c4, %c0_8] : memref<32x1024xf32, #tpu.memory_space<vmem>>, vector<1x1024xf32>
    tpu.vector_store %arg14[%c4, %c0_8], %11 {strides = array<i32>} : memref<32x1024xf32, #tpu.memory_space<vmem>>, vector<1x1024xf32>,
    %c992_i32 = arith.constant 992 : i32
    %13 = tpu.dynamic_rotate %1 by %c992_i32 dim 1 : vector<1x1024xf32>, i32 -> vector<1x1024xf32>
    %c5 = arith.constant 5 : index
    %c0_9 = arith.constant 0 : index
    %14 = vector.load %arg14[%c5, %c0_9] : memref<32x1024xf32, #tpu.memory_space<vmem>>, vector<1x1024xf32>
    tpu.vector_store %arg14[%c5, %c0_9], %13 {strides = array<i32>} : memref<32x1024xf32, #tpu.memory_space<vmem>>, vector<1x1024xf32>,
    %c991_i32 = arith.constant 991 : i32
    %15 = tpu.dynamic_rotate %1 by %c991_i32 dim 1 : vector<1x1024xf32>, i32 -> vector<1x1024xf32>
    %c6 = arith.constant 6 : index
    %c0_10 = arith.constant 0 : index
    %16 = vector.load %arg14[%c6, %c0_10] : memref<32x1024xf32, #tpu.memory_space<vmem>>, vector<1x1024xf32>
    tpu.vector_store %arg14[%c6, %c0_10], %15 {strides = array<i32>} : memref<32x1024xf32, #tpu.memory_space<vmem>>, vector<1x1024xf32>,
    %c990_i32 = arith.constant 990 : i32
    %17 = tpu.dynamic_rotate %1 by %c990_i32 dim 1 : vector<1x1024xf32>, i32 -> vector<1x1024xf32>
    %c7 = arith.constant 7 : index
    %c0_11 = arith.constant 0 : index
    %18 = vector.load %arg14[%c7, %c0_11] : memref<32x1024xf32, #tpu.memory_space<vmem>>, vector<1x1024xf32>
    tpu.vector_store %arg14[%c7, %c0_11], %17 {strides = array<i32>} : memref<32x1024xf32, #tpu.memory_space<vmem>>, vector<1x1024xf32>,
    %c989_i32 = arith.constant 989 : i32
    %19 = tpu.dynamic_rotate %1 by %c989_i32 dim 1 : vector<1x1024xf32>, i32 -> vector<1x1024xf32>
    %c8 = arith.constant 8 : index
    %c0_12 = arith.constant 0 : index
    %20 = vector.load %arg14[%c8, %c0_12] : memref<32x1024xf32, #tpu.memory_space<vmem>>, vector<1x1024xf32>
    tpu.vector_store %arg14[%c8, %c0_12], %19 {strides = array<i32>} : memref<32x1024xf32, #tpu.memory_space<vmem>>, vector<1x1024xf32>,
    %c988_i32 = arith.constant 988 : i32
    %21 = tpu.dynamic_rotate %1 by %c988_i32 dim 1 : vector<1x1024xf32>, i32 -> vector<1x1024xf32>
    %c9 = arith.constant 9 : index
    %c0_13 = arith.constant 0 : index
    %22 = vector.load %arg14[%c9, %c0_13] : memref<32x1024xf32, #tpu.memory_space<vmem>>, vector<1x1024xf32>
    tpu.vector_store %arg14[%c9, %c0_13], %21 {strides = array<i32>} : memref<32x1024xf32, #tpu.memory_space<vmem>>, vector<1x1024xf32>,
    %c960_i32 = arith.constant 960 : i32
    %23 = tpu.dynamic_rotate %1 by %c960_i32 dim 1 : vector<1x1024xf32>, i32 -> vector<1x1024xf32>
    %c10 = arith.constant 10 : index
    %c0_14 = arith.constant 0 : index
    %24 = vector.load %arg14[%c10, %c0_14] : memref<32x1024xf32, #tpu.memory_space<vmem>>, vector<1x1024xf32>
    tpu.vector_store %arg14[%c10, %c0_14], %23 {strides = array<i32>} : memref<32x1024xf32, #tpu.memory_space<vmem>>, vector<1x1024xf32>,
    %c959_i32 = arith.constant 959 : i32
    %25 = tpu.dynamic_rotate %1 by %c959_i32 dim 1 : vector<1x1024xf32>, i32 -> vector<1x1024xf32>
    %c11 = arith.constant 11 : index
    %c0_15 = arith.constant 0 : index
    %26 = vector.load %arg14[%c11, %c0_15] : memref<32x1024xf32, #tpu.memory_space<vmem>>, vector<1x1024xf32>
    tpu.vector_store %arg14[%c11, %c0_15], %25 {strides = array<i32>} : memref<32x1024xf32, #tpu.memory_space<vmem>>, vector<1x1024xf32>,
    %c958_i32 = arith.constant 958 : i32
    %27 = tpu.dynamic_rotate %1 by %c958_i32 dim 1 : vector<1x1024xf32>, i32 -> vector<1x1024xf32>
    %c12 = arith.constant 12 : index
    %c0_16 = arith.constant 0 : index
    %28 = vector.load %arg14[%c12, %c0_16] : memref<32x1024xf32, #tpu.memory_space<vmem>>, vector<1x1024xf32>
    tpu.vector_store %arg14[%c12, %c0_16], %27 {strides = array<i32>} : memref<32x1024xf32, #tpu.memory_space<vmem>>, vector<1x1024xf32>,
    %c957_i32 = arith.constant 957 : i32
    %29 = tpu.dynamic_rotate %1 by %c957_i32 dim 1 : vector<1x1024xf32>, i32 -> vector<1x1024xf32>
    %c13 = arith.constant 13 : index
    %c0_17 = arith.constant 0 : index
    %30 = vector.load %arg14[%c13, %c0_17] : memref<32x1024xf32, #tpu.memory_space<vmem>>, vector<1x1024xf32>
    tpu.vector_store %arg14[%c13, %c0_17], %29 {strides = array<i32>} : memref<32x1024xf32, #tpu.memory_space<vmem>>, vector<1x1024xf32>,
    %c956_i32 = arith.constant 956 : i32
    %31 = tpu.dynamic_rotate %1 by %c956_i32 dim 1 : vector<1x1024xf32>, i32 -> vector<1x1024xf32>
    %c14 = arith.constant 14 : index
    %c0_18 = arith.constant 0 : index
    %32 = vector.load %arg14[%c14, %c0_18] : memref<32x1024xf32, #tpu.memory_space<vmem>>, vector<1x1024xf32>
    tpu.vector_store %arg14[%c14, %c0_18], %31 {strides = array<i32>} : memref<32x1024xf32, #tpu.memory_space<vmem>>, vector<1x1024xf32>,
    %c928_i32 = arith.constant 928 : i32
    %33 = tpu.dynamic_rotate %1 by %c928_i32 dim 1 : vector<1x1024xf32>, i32 -> vector<1x1024xf32>
    %c15 = arith.constant 15 : index
    %c0_19 = arith.constant 0 : index
    %34 = vector.load %arg14[%c15, %c0_19] : memref<32x1024xf32, #tpu.memory_space<vmem>>, vector<1x1024xf32>
    tpu.vector_store %arg14[%c15, %c0_19], %33 {strides = array<i32>} : memref<32x1024xf32, #tpu.memory_space<vmem>>, vector<1x1024xf32>,
    %c927_i32 = arith.constant 927 : i32
    %35 = tpu.dynamic_rotate %1 by %c927_i32 dim 1 : vector<1x1024xf32>, i32 -> vector<1x1024xf32>
    %c16 = arith.constant 16 : index
    %c0_20 = arith.constant 0 : index
    %36 = vector.load %arg14[%c16, %c0_20] : memref<32x1024xf32, #tpu.memory_space<vmem>>, vector<1x1024xf32>
    tpu.vector_store %arg14[%c16, %c0_20], %35 {strides = array<i32>} : memref<32x1024xf32, #tpu.memory_space<vmem>>, vector<1x1024xf32>,
    %c926_i32 = arith.constant 926 : i32
    %37 = tpu.dynamic_rotate %1 by %c926_i32 dim 1 : vector<1x1024xf32>, i32 -> vector<1x1024xf32>
    %c17 = arith.constant 17 : index
    %c0_21 = arith.constant 0 : index
    %38 = vector.load %arg14[%c17, %c0_21] : memref<32x1024xf32, #tpu.memory_space<vmem>>, vector<1x1024xf32>
    tpu.vector_store %arg14[%c17, %c0_21], %37 {strides = array<i32>} : memref<32x1024xf32, #tpu.memory_space<vmem>>, vector<1x1024xf32>,
    %c925_i32 = arith.constant 925 : i32
    %39 = tpu.dynamic_rotate %1 by %c925_i32 dim 1 : vector<1x1024xf32>, i32 -> vector<1x1024xf32>
    %c18 = arith.constant 18 : index
    %c0_22 = arith.constant 0 : index
    %40 = vector.load %arg14[%c18, %c0_22] : memref<32x1024xf32, #tpu.memory_space<vmem>>, vector<1x1024xf32>
    tpu.vector_store %arg14[%c18, %c0_22], %39 {strides = array<i32>} : memref<32x1024xf32, #tpu.memory_space<vmem>>, vector<1x1024xf32>,
    %c924_i32 = arith.constant 924 : i32
    %41 = tpu.dynamic_rotate %1 by %c924_i32 dim 1 : vector<1x1024xf32>, i32 -> vector<1x1024xf32>
    %c19 = arith.constant 19 : index
    %c0_23 = arith.constant 0 : index
    %42 = vector.load %arg14[%c19, %c0_23] : memref<32x1024xf32, #tpu.memory_space<vmem>>, vector<1x1024xf32>
    tpu.vector_store %arg14[%c19, %c0_23], %41 {strides = array<i32>} : memref<32x1024xf32, #tpu.memory_space<vmem>>, vector<1x1024xf32>,
    %c896_i32 = arith.constant 896 : i32
    %43 = tpu.dynamic_rotate %1 by %c896_i32 dim 1 : vector<1x1024xf32>, i32 -> vector<1x1024xf32>
    %c20 = arith.constant 20 : index
    %c0_24 = arith.constant 0 : index
    %44 = vector.load %arg14[%c20, %c0_24] : memref<32x1024xf32, #tpu.memory_space<vmem>>, vector<1x1024xf32>
    tpu.vector_store %arg14[%c20, %c0_24], %43 {strides = array<i32>} : memref<32x1024xf32, #tpu.memory_space<vmem>>, vector<1x1024xf32>,
    %c895_i32 = arith.constant 895 : i32
    %45 = tpu.dynamic_rotate %1 by %c895_i32 dim 1 : vector<1x1024xf32>, i32 -> vector<1x1024xf32>
    %c21 = arith.constant 21 : index
    %c0_25 = arith.constant 0 : index
    %46 = vector.load %arg14[%c21, %c0_25] : memref<32x1024xf32, #tpu.memory_space<vmem>>, vector<1x1024xf32>
    tpu.vector_store %arg14[%c21, %c0_25], %45 {strides = array<i32>} : memref<32x1024xf32, #tpu.memory_space<vmem>>, vector<1x1024xf32>,
    %c894_i32 = arith.constant 894 : i32
    %47 = tpu.dynamic_rotate %1 by %c894_i32 dim 1 : vector<1x1024xf32>, i32 -> vector<1x1024xf32>
    %c22 = arith.constant 22 : index
    %c0_26 = arith.constant 0 : index
    %48 = vector.load %arg14[%c22, %c0_26] : memref<32x1024xf32, #tpu.memory_space<vmem>>, vector<1x1024xf32>
    tpu.vector_store %arg14[%c22, %c0_26], %47 {strides = array<i32>} : memref<32x1024xf32, #tpu.memory_space<vmem>>, vector<1x1024xf32>,
    %c893_i32 = arith.constant 893 : i32
    %49 = tpu.dynamic_rotate %1 by %c893_i32 dim 1 : vector<1x1024xf32>, i32 -> vector<1x1024xf32>
    %c23 = arith.constant 23 : index
    %c0_27 = arith.constant 0 : index
    %50 = vector.load %arg14[%c23, %c0_27] : memref<32x1024xf32, #tpu.memory_space<vmem>>, vector<1x1024xf32>
    tpu.vector_store %arg14[%c23, %c0_27], %49 {strides = array<i32>} : memref<32x1024xf32, #tpu.memory_space<vmem>>, vector<1x1024xf32>,
    %c892_i32 = arith.constant 892 : i32
    %51 = tpu.dynamic_rotate %1 by %c892_i32 dim 1 : vector<1x1024xf32>, i32 -> vector<1x1024xf32>
    %c24 = arith.constant 24 : index
    %c0_28 = arith.constant 0 : index
    %52 = vector.load %arg14[%c24, %c0_28] : memref<32x1024xf32, #tpu.memory_space<vmem>>, vector<1x1024xf32>
    tpu.vector_store %arg14[%c24, %c0_28], %51 {strides = array<i32>} : memref<32x1024xf32, #tpu.memory_space<vmem>>, vector<1x1024xf32>,
    %c0_29 = arith.constant 0 : index
    %c0_30 = arith.constant 0 : index
    %53 = vector.load %arg2[%c0_29, %c0_30] : memref<8x32xf32, #tpu.memory_space<vmem>>, vector<8x32xf32>
    %c0_31 = arith.constant 0 : index
    %c0_32 = arith.constant 0 : index
    %54 = vector.load %arg14[%c0_31, %c0_32] : memref<32x1024xf32, #tpu.memory_space<vmem>>, vector<32x1024xf32>
    %cst_33 = arith.constant dense<0.000000e+00> : vector<8x1024xf32>
    %55 = tpu.matmul %53, %54, %cst_33 {dimension_numbers = #tpu.dot_dimension_numbers<[1], [0], [0], [1], [0, 0, 1, 1], [], []>} : vector<8x32xf32>, vector<32x1024xf32>, vector<8x1024xf32> -> vector<8x1024xf32>
    %c0_34 = arith.constant 0 : index
    %c0_35 = arith.constant 0 : index
    %56 = vector.load %arg3[%c0_34, %c0_35] : memref<8x1xf32, #tpu.memory_space<vmem>>, vector<8x1xf32>
    %57 = vector.broadcast %56 : vector<8x1xf32> to vector<8x1024xf32>
    %58 = arith.addf %55, %57 : vector<8x1024xf32>
    %59 = math.tanh %58 : vector<8x1024xf32>
    %c1023_i32_36 = arith.constant 1023 : i32
    %60 = tpu.dynamic_rotate %59 by %c1023_i32_36 dim 1 : vector<8x1024xf32>, i32 -> vector<8x1024xf32>
    %61 = arith.addf %59, %60 : vector<8x1024xf32>
    %c992_i32_37 = arith.constant 992 : i32
    %62 = tpu.dynamic_rotate %59 by %c992_i32_37 dim 1 : vector<8x1024xf32>, i32 -> vector<8x1024xf32>
    %63 = arith.addf %61, %62 : vector<8x1024xf32>
    %c991_i32_38 = arith.constant 991 : i32
    %64 = tpu.dynamic_rotate %59 by %c991_i32_38 dim 1 : vector<8x1024xf32>, i32 -> vector<8x1024xf32>
    %65 = arith.addf %63, %64 : vector<8x1024xf32>
    %cst_39 = arith.constant 2.500000e-01 : f32
    %66 = vector.broadcast %cst_39 : f32 to vector<8x1024xf32>
    %67 = arith.mulf %66, %65 : vector<8x1024xf32>
    %c0_40 = arith.constant 0 : index
    %c0_41 = arith.constant 0 : index
    %68 = vector.load %arg15[%c0_40, %c0_41] : memref<200x1024xf32, #tpu.memory_space<vmem>>, vector<8x1024xf32>
    tpu.vector_store %arg15[%c0_40, %c0_41], %67 {strides = array<i32>} : memref<200x1024xf32, #tpu.memory_space<vmem>>, vector<8x1024xf32>,
    %c1022_i32_42 = arith.constant 1022 : i32
    %69 = tpu.dynamic_rotate %67 by %c1022_i32_42 dim 1 : vector<8x1024xf32>, i32 -> vector<8x1024xf32>
    %c8_43 = arith.constant 8 : index
    %c0_44 = arith.constant 0 : index
    %70 = vector.load %arg15[%c8_43, %c0_44] : memref<200x1024xf32, #tpu.memory_space<vmem>>, vector<8x1024xf32>
    tpu.vector_store %arg15[%c8_43, %c0_44], %69 {strides = array<i32>} : memref<200x1024xf32, #tpu.memory_space<vmem>>, vector<8x1024xf32>,
    %c1020_i32_45 = arith.constant 1020 : i32
    %71 = tpu.dynamic_rotate %67 by %c1020_i32_45 dim 1 : vector<8x1024xf32>, i32 -> vector<8x1024xf32>
    %c16_46 = arith.constant 16 : index
    %c0_47 = arith.constant 0 : index
    %72 = vector.load %arg15[%c16_46, %c0_47] : memref<200x1024xf32, #tpu.memory_space<vmem>>, vector<8x1024xf32>
    tpu.vector_store %arg15[%c16_46, %c0_47], %71 {strides = array<i32>} : memref<200x1024xf32, #tpu.memory_space<vmem>>, vector<8x1024xf32>,
    %c1018_i32 = arith.constant 1018 : i32
    %73 = tpu.dynamic_rotate %67 by %c1018_i32 dim 1 : vector<8x1024xf32>, i32 -> vector<8x1024xf32>
    %c24_48 = arith.constant 24 : index
    %c0_49 = arith.constant 0 : index
    %74 = vector.load %arg15[%c24_48, %c0_49] : memref<200x1024xf32, #tpu.memory_space<vmem>>, vector<8x1024xf32>
    tpu.vector_store %arg15[%c24_48, %c0_49], %73 {strides = array<i32>} : memref<200x1024xf32, #tpu.memory_space<vmem>>, vector<8x1024xf32>,
    %c1016_i32 = arith.constant 1016 : i32
    %75 = tpu.dynamic_rotate %67 by %c1016_i32 dim 1 : vector<8x1024xf32>, i32 -> vector<8x1024xf32>
    %c32 = arith.constant 32 : index
    %c0_50 = arith.constant 0 : index
    %76 = vector.load %arg15[%c32, %c0_50] : memref<200x1024xf32, #tpu.memory_space<vmem>>, vector<8x1024xf32>
    tpu.vector_store %arg15[%c32, %c0_50], %75 {strides = array<i32>} : memref<200x1024xf32, #tpu.memory_space<vmem>>, vector<8x1024xf32>,
    %c960_i32_51 = arith.constant 960 : i32
    %77 = tpu.dynamic_rotate %67 by %c960_i32_51 dim 1 : vector<8x1024xf32>, i32 -> vector<8x1024xf32>
    %c40 = arith.constant 40 : index
    %c0_52 = arith.constant 0 : index
    %78 = vector.load %arg15[%c40, %c0_52] : memref<200x1024xf32, #tpu.memory_space<vmem>>, vector<8x1024xf32>
    tpu.vector_store %arg15[%c40, %c0_52], %77 {strides = array<i32>} : memref<200x1024xf32, #tpu.memory_space<vmem>>, vector<8x1024xf32>,
    %c958_i32_53 = arith.constant 958 : i32
    %79 = tpu.dynamic_rotate %67 by %c958_i32_53 dim 1 : vector<8x1024xf32>, i32 -> vector<8x1024xf32>
    %c48 = arith.constant 48 : index
    %c0_54 = arith.constant 0 : index
    %80 = vector.load %arg15[%c48, %c0_54] : memref<200x1024xf32, #tpu.memory_space<vmem>>, vector<8x1024xf32>
    tpu.vector_store %arg15[%c48, %c0_54], %79 {strides = array<i32>} : memref<200x1024xf32, #tpu.memory_space<vmem>>, vector<8x1024xf32>,
    %c956_i32_55 = arith.constant 956 : i32
    %81 = tpu.dynamic_rotate %67 by %c956_i32_55 dim 1 : vector<8x1024xf32>, i32 -> vector<8x1024xf32>
    %c56 = arith.constant 56 : index
    %c0_56 = arith.constant 0 : index
    %82 = vector.load %arg15[%c56, %c0_56] : memref<200x1024xf32, #tpu.memory_space<vmem>>, vector<8x1024xf32>
    tpu.vector_store %arg15[%c56, %c0_56], %81 {strides = array<i32>} : memref<200x1024xf32, #tpu.memory_space<vmem>>, vector<8x1024xf32>,
    %c954_i32 = arith.constant 954 : i32
    %83 = tpu.dynamic_rotate %67 by %c954_i32 dim 1 : vector<8x1024xf32>, i32 -> vector<8x1024xf32>
    %c64 = arith.constant 64 : index
    %c0_57 = arith.constant 0 : index
    %84 = vector.load %arg15[%c64, %c0_57] : memref<200x1024xf32, #tpu.memory_space<vmem>>, vector<8x1024xf32>
    tpu.vector_store %arg15[%c64, %c0_57], %83 {strides = array<i32>} : memref<200x1024xf32, #tpu.memory_space<vmem>>, vector<8x1024xf32>,
    %c952_i32 = arith.constant 952 : i32
    %85 = tpu.dynamic_rotate %67 by %c952_i32 dim 1 : vector<8x1024xf32>, i32 -> vector<8x1024xf32>
    %c72 = arith.constant 72 : index
    %c0_58 = arith.constant 0 : index
    %86 = vector.load %arg15[%c72, %c0_58] : memref<200x1024xf32, #tpu.memory_space<vmem>>, vector<8x1024xf32>
    tpu.vector_store %arg15[%c72, %c0_58], %85 {strides = array<i32>} : memref<200x1024xf32, #tpu.memory_space<vmem>>, vector<8x1024xf32>,
    %c896_i32_59 = arith.constant 896 : i32
    %87 = tpu.dynamic_rotate %67 by %c896_i32_59 dim 1 : vector<8x1024xf32>, i32 -> vector<8x1024xf32>
    %c80 = arith.constant 80 : index
    %c0_60 = arith.constant 0 : index
    %88 = vector.load %arg15[%c80, %c0_60] : memref<200x1024xf32, #tpu.memory_space<vmem>>, vector<8x1024xf32>
    tpu.vector_store %arg15[%c80, %c0_60], %87 {strides = array<i32>} : memref<200x1024xf32, #tpu.memory_space<vmem>>, vector<8x1024xf32>,
    %c894_i32_61 = arith.constant 894 : i32
    %89 = tpu.dynamic_rotate %67 by %c894_i32_61 dim 1 : vector<8x1024xf32>, i32 -> vector<8x1024xf32>
    %c88 = arith.constant 88 : index
    %c0_62 = arith.constant 0 : index
    %90 = vector.load %arg15[%c88, %c0_62] : memref<200x1024xf32, #tpu.memory_space<vmem>>, vector<8x1024xf32>
    tpu.vector_store %arg15[%c88, %c0_62], %89 {strides = array<i32>} : memref<200x1024xf32, #tpu.memory_space<vmem>>, vector<8x1024xf32>,
    %c892_i32_63 = arith.constant 892 : i32
    %91 = tpu.dynamic_rotate %67 by %c892_i32_63 dim 1 : vector<8x1024xf32>, i32 -> vector<8x1024xf32>
    %c96 = arith.constant 96 : index
    %c0_64 = arith.constant 0 : index
    %92 = vector.load %arg15[%c96, %c0_64] : memref<200x1024xf32, #tpu.memory_space<vmem>>, vector<8x1024xf32>
    tpu.vector_store %arg15[%c96, %c0_64], %91 {strides = array<i32>} : memref<200x1024xf32, #tpu.memory_space<vmem>>, vector<8x1024xf32>,
    %c890_i32 = arith.constant 890 : i32
    %93 = tpu.dynamic_rotate %67 by %c890_i32 dim 1 : vector<8x1024xf32>, i32 -> vector<8x1024xf32>
    %c104 = arith.constant 104 : index
    %c0_65 = arith.constant 0 : index
    %94 = vector.load %arg15[%c104, %c0_65] : memref<200x1024xf32, #tpu.memory_space<vmem>>, vector<8x1024xf32>
    tpu.vector_store %arg15[%c104, %c0_65], %93 {strides = array<i32>} : memref<200x1024xf32, #tpu.memory_space<vmem>>, vector<8x1024xf32>,
    %c888_i32 = arith.constant 888 : i32
    %95 = tpu.dynamic_rotate %67 by %c888_i32 dim 1 : vector<8x1024xf32>, i32 -> vector<8x1024xf32>
    %c112 = arith.constant 112 : index
    %c0_66 = arith.constant 0 : index
    %96 = vector.load %arg15[%c112, %c0_66] : memref<200x1024xf32, #tpu.memory_space<vmem>>, vector<8x1024xf32>
    tpu.vector_store %arg15[%c112, %c0_66], %95 {strides = array<i32>} : memref<200x1024xf32, #tpu.memory_space<vmem>>, vector<8x1024xf32>,
    %c832_i32 = arith.constant 832 : i32
    %97 = tpu.dynamic_rotate %67 by %c832_i32 dim 1 : vector<8x1024xf32>, i32 -> vector<8x1024xf32>
    %c120 = arith.constant 120 : index
    %c0_67 = arith.constant 0 : index
    %98 = vector.load %arg15[%c120, %c0_67] : memref<200x1024xf32, #tpu.memory_space<vmem>>, vector<8x1024xf32>
    tpu.vector_store %arg15[%c120, %c0_67], %97 {strides = array<i32>} : memref<200x1024xf32, #tpu.memory_space<vmem>>, vector<8x1024xf32>,
    %c830_i32 = arith.constant 830 : i32
    %99 = tpu.dynamic_rotate %67 by %c830_i32 dim 1 : vector<8x1024xf32>, i32 -> vector<8x1024xf32>
    %c128 = arith.constant 128 : index
    %c0_68 = arith.constant 0 : index
    %100 = vector.load %arg15[%c128, %c0_68] : memref<200x1024xf32, #tpu.memory_space<vmem>>, vector<8x1024xf32>
    tpu.vector_store %arg15[%c128, %c0_68], %99 {strides = array<i32>} : memref<200x1024xf32, #tpu.memory_space<vmem>>, vector<8x1024xf32>,
    %c828_i32 = arith.constant 828 : i32
    %101 = tpu.dynamic_rotate %67 by %c828_i32 dim 1 : vector<8x1024xf32>, i32 -> vector<8x1024xf32>
    %c136 = arith.constant 136 : index
    %c0_69 = arith.constant 0 : index
    %102 = vector.load %arg15[%c136, %c0_69] : memref<200x1024xf32, #tpu.memory_space<vmem>>, vector<8x1024xf32>
    tpu.vector_store %arg15[%c136, %c0_69], %101 {strides = array<i32>} : memref<200x1024xf32, #tpu.memory_space<vmem>>, vector<8x1024xf32>,
    %c826_i32 = arith.constant 826 : i32
    %103 = tpu.dynamic_rotate %67 by %c826_i32 dim 1 : vector<8x1024xf32>, i32 -> vector<8x1024xf32>
    %c144 = arith.constant 144 : index
    %c0_70 = arith.constant 0 : index
    %104 = vector.load %arg15[%c144, %c0_70] : memref<200x1024xf32, #tpu.memory_space<vmem>>, vector<8x1024xf32>
    tpu.vector_store %arg15[%c144, %c0_70], %103 {strides = array<i32>} : memref<200x1024xf32, #tpu.memory_space<vmem>>, vector<8x1024xf32>,
    %c824_i32 = arith.constant 824 : i32
    %105 = tpu.dynamic_rotate %67 by %c824_i32 dim 1 : vector<8x1024xf32>, i32 -> vector<8x1024xf32>
    %c152 = arith.constant 152 : index
    %c0_71 = arith.constant 0 : index
    %106 = vector.load %arg15[%c152, %c0_71] : memref<200x1024xf32, #tpu.memory_space<vmem>>, vector<8x1024xf32>
    tpu.vector_store %arg15[%c152, %c0_71], %105 {strides = array<i32>} : memref<200x1024xf32, #tpu.memory_space<vmem>>, vector<8x1024xf32>,
    %c768_i32 = arith.constant 768 : i32
    %107 = tpu.dynamic_rotate %67 by %c768_i32 dim 1 : vector<8x1024xf32>, i32 -> vector<8x1024xf32>
    %c160 = arith.constant 160 : index
    %c0_72 = arith.constant 0 : index
    %108 = vector.load %arg15[%c160, %c0_72] : memref<200x1024xf32, #tpu.memory_space<vmem>>, vector<8x1024xf32>
    tpu.vector_store %arg15[%c160, %c0_72], %107 {strides = array<i32>} : memref<200x1024xf32, #tpu.memory_space<vmem>>, vector<8x1024xf32>,
    %c766_i32 = arith.constant 766 : i32
    %109 = tpu.dynamic_rotate %67 by %c766_i32 dim 1 : vector<8x1024xf32>, i32 -> vector<8x1024xf32>
    %c168 = arith.constant 168 : index
    %c0_73 = arith.constant 0 : index
    %110 = vector.load %arg15[%c168, %c0_73] : memref<200x1024xf32, #tpu.memory_space<vmem>>, vector<8x1024xf32>
    tpu.vector_store %arg15[%c168, %c0_73], %109 {strides = array<i32>} : memref<200x1024xf32, #tpu.memory_space<vmem>>, vector<8x1024xf32>,
    %c764_i32 = arith.constant 764 : i32
    %111 = tpu.dynamic_rotate %67 by %c764_i32 dim 1 : vector<8x1024xf32>, i32 -> vector<8x1024xf32>
    %c176 = arith.constant 176 : index
    %c0_74 = arith.constant 0 : index
    %112 = vector.load %arg15[%c176, %c0_74] : memref<200x1024xf32, #tpu.memory_space<vmem>>, vector<8x1024xf32>
    tpu.vector_store %arg15[%c176, %c0_74], %111 {strides = array<i32>} : memref<200x1024xf32, #tpu.memory_space<vmem>>, vector<8x1024xf32>,
    %c762_i32 = arith.constant 762 : i32
    %113 = tpu.dynamic_rotate %67 by %c762_i32 dim 1 : vector<8x1024xf32>, i32 -> vector<8x1024xf32>
    %c184 = arith.constant 184 : index
    %c0_75 = arith.constant 0 : index
    %114 = vector.load %arg15[%c184, %c0_75] : memref<200x1024xf32, #tpu.memory_space<vmem>>, vector<8x1024xf32>
    tpu.vector_store %arg15[%c184, %c0_75], %113 {strides = array<i32>} : memref<200x1024xf32, #tpu.memory_space<vmem>>, vector<8x1024xf32>,
    %c760_i32 = arith.constant 760 : i32
    %115 = tpu.dynamic_rotate %67 by %c760_i32 dim 1 : vector<8x1024xf32>, i32 -> vector<8x1024xf32>
    %c192 = arith.constant 192 : index
    %c0_76 = arith.constant 0 : index
    %116 = vector.load %arg15[%c192, %c0_76] : memref<200x1024xf32, #tpu.memory_space<vmem>>, vector<8x1024xf32>
    tpu.vector_store %arg15[%c192, %c0_76], %115 {strides = array<i32>} : memref<200x1024xf32, #tpu.memory_space<vmem>>, vector<8x1024xf32>,
    %c0_77 = arith.constant 0 : index
    %c0_78 = arith.constant 0 : index
    %117 = vector.load %arg4[%c0_77, %c0_78] : memref<16x200xf32, #tpu.memory_space<vmem>>, vector<16x200xf32>
    %c0_79 = arith.constant 0 : index
    %c0_80 = arith.constant 0 : index
    %118 = vector.load %arg15[%c0_79, %c0_80] : memref<200x1024xf32, #tpu.memory_space<vmem>>, vector<200x1024xf32>
    %cst_81 = arith.constant dense<0.000000e+00> : vector<16x1024xf32>
    %119 = tpu.matmul %117, %118, %cst_81 {dimension_numbers = #tpu.dot_dimension_numbers<[1], [0], [0], [1], [0, 0, 1, 1], [], []>} : vector<16x200xf32>, vector<200x1024xf32>, vector<16x1024xf32> -> vector<16x1024xf32>
    %c0_82 = arith.constant 0 : index
    %c0_83 = arith.constant 0 : index
    %120 = vector.load %arg5[%c0_82, %c0_83] : memref<16x1xf32, #tpu.memory_space<vmem>>, vector<16x1xf32>
    %121 = vector.broadcast %120 : vector<16x1xf32> to vector<16x1024xf32>
    %122 = arith.addf %119, %121 : vector<16x1024xf32>
    %123 = math.tanh %122 : vector<16x1024xf32>
    %c0_84 = arith.constant 0 : index
    %c0_85 = arith.constant 0 : index
    %124 = vector.load %arg6[%c0_84, %c0_85] : memref<1024x32xf32, #tpu.memory_space<vmem>>, vector<1024x32xf32>
    %cst_86 = arith.constant dense<0.000000e+00> : vector<16x32xf32>
    %125 = tpu.matmul %123, %124, %cst_86 {dimension_numbers = #tpu.dot_dimension_numbers<[1], [0], [0], [1], [0, 0, 1, 1], [], []>} : vector<16x1024xf32>, vector<1024x32xf32>, vector<16x32xf32> -> vector<16x32xf32>
    %c0_87 = arith.constant 0 : index
    %c0_88 = arith.constant 0 : index
    %126 = vector.load %arg8[%c0_87, %c0_88] : memref<1x128xf32, #tpu.memory_space<vmem>>, vector<1x128xf32>
    %c0_89 = arith.constant 0 : index
    %c0_90 = arith.constant 0 : index
    %c0_91 = arith.constant 0 : index
    %127 = vector.load %arg7[%c0_89, %c0_90, %c0_91] : memref<16x32x128xf32, #tpu.memory_space<vmem>>, vector<1x32x128xf32>
    %128 = vector.shape_cast %127 : vector<1x32x128xf32> to vector<32x128xf32>
    %cst_92 = arith.constant dense<0.000000e+00> : vector<16x128xf32>
    %129 = tpu.matmul %125, %128, %cst_92 {dimension_numbers = #tpu.dot_dimension_numbers<[1], [0], [0], [1], [0, 0, 1, 1], [], []>} : vector<16x32xf32>, vector<32x128xf32>, vector<16x128xf32> -> vector<16x128xf32>
    %130 = vector.extract_strided_slice %129 {offsets = [0, 0], sizes = [1, 128], strides = [1, 1]} : vector<16x128xf32> to vector<1x128xf32>
    %131 = arith.addf %126, %130 : vector<1x128xf32>
    %c1_93 = arith.constant 1 : index
    %c0_94 = arith.constant 0 : index
    %c0_95 = arith.constant 0 : index
    %132 = vector.load %arg7[%c1_93, %c0_94, %c0_95] : memref<16x32x128xf32, #tpu.memory_space<vmem>>, vector<1x32x128xf32>
    %133 = vector.shape_cast %132 : vector<1x32x128xf32> to vector<32x128xf32>
    %cst_96 = arith.constant dense<0.000000e+00> : vector<16x128xf32>
    %134 = tpu.matmul %125, %133, %cst_96 {dimension_numbers = #tpu.dot_dimension_numbers<[1], [0], [0], [1], [0, 0, 1, 1], [], []>} : vector<16x32xf32>, vector<32x128xf32>, vector<16x128xf32> -> vector<16x128xf32>
    %135 = vector.extract_strided_slice %134 {offsets = [1, 0], sizes = [1, 128], strides = [1, 1]} : vector<16x128xf32> to vector<1x128xf32>
    %136 = arith.addf %131, %135 : vector<1x128xf32>
    %c2_97 = arith.constant 2 : index
    %c0_98 = arith.constant 0 : index
    %c0_99 = arith.constant 0 : index
    %137 = vector.load %arg7[%c2_97, %c0_98, %c0_99] : memref<16x32x128xf32, #tpu.memory_space<vmem>>, vector<1x32x128xf32>
    %138 = vector.shape_cast %137 : vector<1x32x128xf32> to vector<32x128xf32>
    %cst_100 = arith.constant dense<0.000000e+00> : vector<16x128xf32>
    %139 = tpu.matmul %125, %138, %cst_100 {dimension_numbers = #tpu.dot_dimension_numbers<[1], [0], [0], [1], [0, 0, 1, 1], [], []>} : vector<16x32xf32>, vector<32x128xf32>, vector<16x128xf32> -> vector<16x128xf32>
    %140 = vector.extract_strided_slice %139 {offsets = [2, 0], sizes = [1, 128], strides = [1, 1]} : vector<16x128xf32> to vector<1x128xf32>
    %141 = arith.addf %136, %140 : vector<1x128xf32>
    %c3_101 = arith.constant 3 : index
    %c0_102 = arith.constant 0 : index
    %c0_103 = arith.constant 0 : index
    %142 = vector.load %arg7[%c3_101, %c0_102, %c0_103] : memref<16x32x128xf32, #tpu.memory_space<vmem>>, vector<1x32x128xf32>
    %143 = vector.shape_cast %142 : vector<1x32x128xf32> to vector<32x128xf32>
    %cst_104 = arith.constant dense<0.000000e+00> : vector<16x128xf32>
    %144 = tpu.matmul %125, %143, %cst_104 {dimension_numbers = #tpu.dot_dimension_numbers<[1], [0], [0], [1], [0, 0, 1, 1], [], []>} : vector<16x32xf32>, vector<32x128xf32>, vector<16x128xf32> -> vector<16x128xf32>
    %145 = vector.extract_strided_slice %144 {offsets = [3, 0], sizes = [1, 128], strides = [1, 1]} : vector<16x128xf32> to vector<1x128xf32>
    %146 = arith.addf %141, %145 : vector<1x128xf32>
    %c4_105 = arith.constant 4 : index
    %c0_106 = arith.constant 0 : index
    %c0_107 = arith.constant 0 : index
    %147 = vector.load %arg7[%c4_105, %c0_106, %c0_107] : memref<16x32x128xf32, #tpu.memory_space<vmem>>, vector<1x32x128xf32>
    %148 = vector.shape_cast %147 : vector<1x32x128xf32> to vector<32x128xf32>
    %cst_108 = arith.constant dense<0.000000e+00> : vector<16x128xf32>
    %149 = tpu.matmul %125, %148, %cst_108 {dimension_numbers = #tpu.dot_dimension_numbers<[1], [0], [0], [1], [0, 0, 1, 1], [], []>} : vector<16x32xf32>, vector<32x128xf32>, vector<16x128xf32> -> vector<16x128xf32>
    %150 = vector.extract_strided_slice %149 {offsets = [4, 0], sizes = [1, 128], strides = [1, 1]} : vector<16x128xf32> to vector<1x128xf32>
    %151 = arith.addf %146, %150 : vector<1x128xf32>
    %c5_109 = arith.constant 5 : index
    %c0_110 = arith.constant 0 : index
    %c0_111 = arith.constant 0 : index
    %152 = vector.load %arg7[%c5_109, %c0_110, %c0_111] : memref<16x32x128xf32, #tpu.memory_space<vmem>>, vector<1x32x128xf32>
    %153 = vector.shape_cast %152 : vector<1x32x128xf32> to vector<32x128xf32>
    %cst_112 = arith.constant dense<0.000000e+00> : vector<16x128xf32>
    %154 = tpu.matmul %125, %153, %cst_112 {dimension_numbers = #tpu.dot_dimension_numbers<[1], [0], [0], [1], [0, 0, 1, 1], [], []>} : vector<16x32xf32>, vector<32x128xf32>, vector<16x128xf32> -> vector<16x128xf32>
    %155 = vector.extract_strided_slice %154 {offsets = [5, 0], sizes = [1, 128], strides = [1, 1]} : vector<16x128xf32> to vector<1x128xf32>
    %156 = arith.addf %151, %155 : vector<1x128xf32>
    %c6_113 = arith.constant 6 : index
    %c0_114 = arith.constant 0 : index
    %c0_115 = arith.constant 0 : index
    %157 = vector.load %arg7[%c6_113, %c0_114, %c0_115] : memref<16x32x128xf32, #tpu.memory_space<vmem>>, vector<1x32x128xf32>
    %158 = vector.shape_cast %157 : vector<1x32x128xf32> to vector<32x128xf32>
    %cst_116 = arith.constant dense<0.000000e+00> : vector<16x128xf32>
    %159 = tpu.matmul %125, %158, %cst_116 {dimension_numbers = #tpu.dot_dimension_numbers<[1], [0], [0], [1], [0, 0, 1, 1], [], []>} : vector<16x32xf32>, vector<32x128xf32>, vector<16x128xf32> -> vector<16x128xf32>
    %160 = vector.extract_strided_slice %159 {offsets = [6, 0], sizes = [1, 128], strides = [1, 1]} : vector<16x128xf32> to vector<1x128xf32>
    %161 = arith.addf %156, %160 : vector<1x128xf32>
    %c7_117 = arith.constant 7 : index
    %c0_118 = arith.constant 0 : index
    %c0_119 = arith.constant 0 : index
    %162 = vector.load %arg7[%c7_117, %c0_118, %c0_119] : memref<16x32x128xf32, #tpu.memory_space<vmem>>, vector<1x32x128xf32>
    %163 = vector.shape_cast %162 : vector<1x32x128xf32> to vector<32x128xf32>
    %cst_120 = arith.constant dense<0.000000e+00> : vector<16x128xf32>
    %164 = tpu.matmul %125, %163, %cst_120 {dimension_numbers = #tpu.dot_dimension_numbers<[1], [0], [0], [1], [0, 0, 1, 1], [], []>} : vector<16x32xf32>, vector<32x128xf32>, vector<16x128xf32> -> vector<16x128xf32>
    %165 = vector.extract_strided_slice %164 {offsets = [7, 0], sizes = [1, 128], strides = [1, 1]} : vector<16x128xf32> to vector<1x128xf32>
    %166 = arith.addf %161, %165 : vector<1x128xf32>
    %c8_121 = arith.constant 8 : index
    %c0_122 = arith.constant 0 : index
    %c0_123 = arith.constant 0 : index
    %167 = vector.load %arg7[%c8_121, %c0_122, %c0_123] : memref<16x32x128xf32, #tpu.memory_space<vmem>>, vector<1x32x128xf32>
    %168 = vector.shape_cast %167 : vector<1x32x128xf32> to vector<32x128xf32>
    %cst_124 = arith.constant dense<0.000000e+00> : vector<16x128xf32>
    %169 = tpu.matmul %125, %168, %cst_124 {dimension_numbers = #tpu.dot_dimension_numbers<[1], [0], [0], [1], [0, 0, 1, 1], [], []>} : vector<16x32xf32>, vector<32x128xf32>, vector<16x128xf32> -> vector<16x128xf32>
    %170 = vector.extract_strided_slice %169 {offsets = [8, 0], sizes = [1, 128], strides = [1, 1]} : vector<16x128xf32> to vector<1x128xf32>
    %171 = arith.addf %166, %170 : vector<1x128xf32>
    %c9_125 = arith.constant 9 : index
    %c0_126 = arith.constant 0 : index
    %c0_127 = arith.constant 0 : index
    %172 = vector.load %arg7[%c9_125, %c0_126, %c0_127] : memref<16x32x128xf32, #tpu.memory_space<vmem>>, vector<1x32x128xf32>
    %173 = vector.shape_cast %172 : vector<1x32x128xf32> to vector<32x128xf32>
    %cst_128 = arith.constant dense<0.000000e+00> : vector<16x128xf32>
    %174 = tpu.matmul %125, %173, %cst_128 {dimension_numbers = #tpu.dot_dimension_numbers<[1], [0], [0], [1], [0, 0, 1, 1], [], []>} : vector<16x32xf32>, vector<32x128xf32>, vector<16x128xf32> -> vector<16x128xf32>
    %175 = vector.extract_strided_slice %174 {offsets = [9, 0], sizes = [1, 128], strides = [1, 1]} : vector<16x128xf32> to vector<1x128xf32>
    %176 = arith.addf %171, %175 : vector<1x128xf32>
    %c10_129 = arith.constant 10 : index
    %c0_130 = arith.constant 0 : index
    %c0_131 = arith.constant 0 : index
    %177 = vector.load %arg7[%c10_129, %c0_130, %c0_131] : memref<16x32x128xf32, #tpu.memory_space<vmem>>, vector<1x32x128xf32>
    %178 = vector.shape_cast %177 : vector<1x32x128xf32> to vector<32x128xf32>
    %cst_132 = arith.constant dense<0.000000e+00> : vector<16x128xf32>
    %179 = tpu.matmul %125, %178, %cst_132 {dimension_numbers = #tpu.dot_dimension_numbers<[1], [0], [0], [1], [0, 0, 1, 1], [], []>} : vector<16x32xf32>, vector<32x128xf32>, vector<16x128xf32> -> vector<16x128xf32>
    %180 = vector.extract_strided_slice %179 {offsets = [10, 0], sizes = [1, 128], strides = [1, 1]} : vector<16x128xf32> to vector<1x128xf32>
    %181 = arith.addf %176, %180 : vector<1x128xf32>
    %c11_133 = arith.constant 11 : index
    %c0_134 = arith.constant 0 : index
    %c0_135 = arith.constant 0 : index
    %182 = vector.load %arg7[%c11_133, %c0_134, %c0_135] : memref<16x32x128xf32, #tpu.memory_space<vmem>>, vector<1x32x128xf32>
    %183 = vector.shape_cast %182 : vector<1x32x128xf32> to vector<32x128xf32>
    %cst_136 = arith.constant dense<0.000000e+00> : vector<16x128xf32>
    %184 = tpu.matmul %125, %183, %cst_136 {dimension_numbers = #tpu.dot_dimension_numbers<[1], [0], [0], [1], [0, 0, 1, 1], [], []>} : vector<16x32xf32>, vector<32x128xf32>, vector<16x128xf32> -> vector<16x128xf32>
    %185 = vector.extract_strided_slice %184 {offsets = [11, 0], sizes = [1, 128], strides = [1, 1]} : vector<16x128xf32> to vector<1x128xf32>
    %186 = arith.addf %181, %185 : vector<1x128xf32>
    %c12_137 = arith.constant 12 : index
    %c0_138 = arith.constant 0 : index
    %c0_139 = arith.constant 0 : index
    %187 = vector.load %arg7[%c12_137, %c0_138, %c0_139] : memref<16x32x128xf32, #tpu.memory_space<vmem>>, vector<1x32x128xf32>
    %188 = vector.shape_cast %187 : vector<1x32x128xf32> to vector<32x128xf32>
    %cst_140 = arith.constant dense<0.000000e+00> : vector<16x128xf32>
    %189 = tpu.matmul %125, %188, %cst_140 {dimension_numbers = #tpu.dot_dimension_numbers<[1], [0], [0], [1], [0, 0, 1, 1], [], []>} : vector<16x32xf32>, vector<32x128xf32>, vector<16x128xf32> -> vector<16x128xf32>
    %190 = vector.extract_strided_slice %189 {offsets = [12, 0], sizes = [1, 128], strides = [1, 1]} : vector<16x128xf32> to vector<1x128xf32>
    %191 = arith.addf %186, %190 : vector<1x128xf32>
    %c13_141 = arith.constant 13 : index
    %c0_142 = arith.constant 0 : index
    %c0_143 = arith.constant 0 : index
    %192 = vector.load %arg7[%c13_141, %c0_142, %c0_143] : memref<16x32x128xf32, #tpu.memory_space<vmem>>, vector<1x32x128xf32>
    %193 = vector.shape_cast %192 : vector<1x32x128xf32> to vector<32x128xf32>
    %cst_144 = arith.constant dense<0.000000e+00> : vector<16x128xf32>
    %194 = tpu.matmul %125, %193, %cst_144 {dimension_numbers = #tpu.dot_dimension_numbers<[1], [0], [0], [1], [0, 0, 1, 1], [], []>} : vector<16x32xf32>, vector<32x128xf32>, vector<16x128xf32> -> vector<16x128xf32>
    %195 = vector.extract_strided_slice %194 {offsets = [13, 0], sizes = [1, 128], strides = [1, 1]} : vector<16x128xf32> to vector<1x128xf32>
    %196 = arith.addf %191, %195 : vector<1x128xf32>
    %c14_145 = arith.constant 14 : index
    %c0_146 = arith.constant 0 : index
    %c0_147 = arith.constant 0 : index
    %197 = vector.load %arg7[%c14_145, %c0_146, %c0_147] : memref<16x32x128xf32, #tpu.memory_space<vmem>>, vector<1x32x128xf32>
    %198 = vector.shape_cast %197 : vector<1x32x128xf32> to vector<32x128xf32>
    %cst_148 = arith.constant dense<0.000000e+00> : vector<16x128xf32>
    %199 = tpu.matmul %125, %198, %cst_148 {dimension_numbers = #tpu.dot_dimension_numbers<[1], [0], [0], [1], [0, 0, 1, 1], [], []>} : vector<16x32xf32>, vector<32x128xf32>, vector<16x128xf32> -> vector<16x128xf32>
    %200 = vector.extract_strided_slice %199 {offsets = [14, 0], sizes = [1, 128], strides = [1, 1]} : vector<16x128xf32> to vector<1x128xf32>
    %201 = arith.addf %196, %200 : vector<1x128xf32>
    %c15_149 = arith.constant 15 : index
    %c0_150 = arith.constant 0 : index
    %c0_151 = arith.constant 0 : index
    %202 = vector.load %arg7[%c15_149, %c0_150, %c0_151] : memref<16x32x128xf32, #tpu.memory_space<vmem>>, vector<1x32x128xf32>
    %203 = vector.shape_cast %202 : vector<1x32x128xf32> to vector<32x128xf32>
    %cst_152 = arith.constant dense<0.000000e+00> : vector<16x128xf32>
    %204 = tpu.matmul %125, %203, %cst_152 {dimension_numbers = #tpu.dot_dimension_numbers<[1], [0], [0], [1], [0, 0, 1, 1], [], []>} : vector<16x32xf32>, vector<32x128xf32>, vector<16x128xf32> -> vector<16x128xf32>
    %205 = vector.extract_strided_slice %204 {offsets = [15, 0], sizes = [1, 128], strides = [1, 1]} : vector<16x128xf32> to vector<1x128xf32>
    %206 = arith.addf %201, %205 : vector<1x128xf32>
    %207 = math.tanh %206 : vector<1x128xf32>
    %208 = vector.shape_cast %207 : vector<1x128xf32> to vector<1x128xf32>
    %209 = vector.broadcast %208 : vector<1x128xf32> to vector<8x128xf32>
    %c0_153 = arith.constant 0 : index
    %c0_154 = arith.constant 0 : index
    %210 = vector.load %arg9[%c0_153, %c0_154] : memref<128x128xf32, #tpu.memory_space<vmem>>, vector<128x128xf32>
    %cst_155 = arith.constant dense<0.000000e+00> : vector<8x128xf32>
    %211 = tpu.matmul %209, %210, %cst_155 {dimension_numbers = #tpu.dot_dimension_numbers<[1], [0], [0], [1], [0, 0, 1, 1], [], []>} : vector<8x128xf32>, vector<128x128xf32>, vector<8x128xf32> -> vector<8x128xf32>
    %c0_156 = arith.constant 0 : index
    %c0_157 = arith.constant 0 : index
    %212 = vector.load %arg10[%c0_156, %c0_157] : memref<1x128xf32, #tpu.memory_space<vmem>>, vector<1x128xf32>
    %213 = vector.broadcast %212 : vector<1x128xf32> to vector<8x128xf32>
    %214 = arith.addf %211, %213 : vector<8x128xf32>
    %215 = math.tanh %214 : vector<8x128xf32>
    %c0_158 = arith.constant 0 : index
    %c0_159 = arith.constant 0 : index
    %216 = vector.load %arg11[%c0_158, %c0_159] : memref<128x128xf32, #tpu.memory_space<vmem>>, vector<128x128xf32>
    %cst_160 = arith.constant dense<0.000000e+00> : vector<8x128xf32>
    %217 = tpu.matmul %215, %216, %cst_160 {dimension_numbers = #tpu.dot_dimension_numbers<[1], [0], [0], [1], [0, 0, 1, 1], [], []>} : vector<8x128xf32>, vector<128x128xf32>, vector<8x128xf32> -> vector<8x128xf32>
    %c0_161 = arith.constant 0 : index
    %c0_162 = arith.constant 0 : index
    %218 = vector.load %arg12[%c0_161, %c0_162] : memref<1x128xf32, #tpu.memory_space<vmem>>, vector<1x128xf32>
    %219 = vector.broadcast %218 : vector<1x128xf32> to vector<8x128xf32>
    %220 = arith.addf %217, %219 : vector<8x128xf32>
    %221 = tpu.iota {dimensions = array<i32: 1>} : vector<8x128xi32>
    %c10_i32 = arith.constant 10 : i32
    %222 = vector.broadcast %c10_i32 : i32 to vector<8x128xi32>
    %223 = arith.cmpi slt, %221, %222 : vector<8x128xi32>
    %cst_163 = arith.constant -1.000000e+30 : f32
    %224 = vector.broadcast %cst_163 : f32 to vector<8x128xf32>
    %225 = arith.select %223, %220, %224 : vector<8x128xi1>, vector<8x128xf32>
    %cst_164 = arith.constant dense<0xFF800000> : vector<8xf32>
    %226 = vector.multi_reduction <maximumf>, %225, %cst_164 [1] : vector<8x128xf32> to vector<8xf32>
    %227 = vector.shape_cast %226 : vector<8xf32> to vector<8x1xf32>
    %228 = vector.broadcast %227 : vector<8x1xf32> to vector<8x128xf32>
    %229 = arith.subf %225, %228 : vector<8x128xf32>
    %230 = math.exp %229 : vector<8x128xf32>
    %cst_165 = arith.constant dense<0.000000e+00> : vector<8xf32>
    %231 = vector.multi_reduction <add>, %230, %cst_165 [1] : vector<8x128xf32> to vector<8xf32>
    %232 = vector.shape_cast %231 : vector<8xf32> to vector<8x1xf32>
    %233 = vector.broadcast %232 : vector<8x1xf32> to vector<8x128xf32>
    %234 = arith.divf %230, %233 : vector<8x128xf32>
    %235 = vector.extract_strided_slice %234 {offsets = [0, 0], sizes = [1, 128], strides = [1, 1]} : vector<8x128xf32> to vector<1x128xf32>
    %c0_166 = arith.constant 0 : index
    %c0_167 = arith.constant 0 : index
    %c0_168 = arith.constant 0 : index
    %236 = vector.load %arg13[%c0_166, %c0_167, %c0_168] : memref<1x1x128xf32, #tpu.memory_space<vmem>>, vector<1x1x128xf32>
    %237 = vector.shape_cast %236 : vector<1x1x128xf32> to vector<1x128xf32>
    %238 = vector.shape_cast %235 : vector<1x128xf32> to vector<1x1x128xf32>
    tpu.vector_store %arg13[%c0_166, %c0_167, %c0_168], %238 {strides = array<i32>} : memref<1x1x128xf32, #tpu.memory_space<vmem>>, vector<1x1x128xf32>,
    return
  }
  func.func @transform_0(%arg0: i32) -> (i32, i32, i32) {
    %c0_i32 = arith.constant 0 : i32
    %c0_i32_0 = arith.constant 0 : i32
    %c0_i32_1 = arith.constant 0 : i32
    return %arg0, %c0_i32, %c0_i32_0 : i32, i32, i32
  }
  func.func @transform_1(%arg0: i32) -> (i32, i32) {
    %c0_i32 = arith.constant 0 : i32
    %c0_i32_0 = arith.constant 0 : i32
    %c0_i32_1 = arith.constant 0 : i32
    return %c0_i32, %c0_i32_0 : i32, i32
  }
  func.func @transform_2(%arg0: i32) -> (i32, i32) {
    %c0_i32 = arith.constant 0 : i32
    %c0_i32_0 = arith.constant 0 : i32
    %c0_i32_1 = arith.constant 0 : i32
    return %c0_i32, %c0_i32_0 : i32, i32
  }
  func.func @transform_3(%arg0: i32) -> (i32, i32) {
    %c0_i32 = arith.constant 0 : i32
    %c0_i32_0 = arith.constant 0 : i32
    %c0_i32_1 = arith.constant 0 : i32
    return %c0_i32, %c0_i32_0 : i32, i32
  }
  func.func @transform_4(%arg0: i32) -> (i32, i32) {
    %c0_i32 = arith.constant 0 : i32
    %c0_i32_0 = arith.constant 0 : i32
    %c0_i32_1 = arith.constant 0 : i32
    return %c0_i32, %c0_i32_0 : i32, i32
  }
  func.func @transform_5(%arg0: i32) -> (i32, i32) {
    %c0_i32 = arith.constant 0 : i32
    %c0_i32_0 = arith.constant 0 : i32
    %c0_i32_1 = arith.constant 0 : i32
    return %c0_i32, %c0_i32_0 : i32, i32
  }
  func.func @transform_6(%arg0: i32) -> (i32, i32, i32) {
    %c0_i32 = arith.constant 0 : i32
    %c0_i32_0 = arith.constant 0 : i32
    %c0_i32_1 = arith.constant 0 : i32
    %c0_i32_2 = arith.constant 0 : i32
    return %c0_i32, %c0_i32_0, %c0_i32_1 : i32, i32, i32
  }
  func.func @transform_7(%arg0: i32) -> (i32, i32) {
    %c0_i32 = arith.constant 0 : i32
    %c0_i32_0 = arith.constant 0 : i32
    %c0_i32_1 = arith.constant 0 : i32
    return %c0_i32, %c0_i32_0 : i32, i32
  }
  func.func @transform_8(%arg0: i32) -> (i32, i32) {
    %c0_i32 = arith.constant 0 : i32
    %c0_i32_0 = arith.constant 0 : i32
    %c0_i32_1 = arith.constant 0 : i32
    return %c0_i32, %c0_i32_0 : i32, i32
  }
  func.func @transform_9(%arg0: i32) -> (i32, i32) {
    %c0_i32 = arith.constant 0 : i32
    %c0_i32_0 = arith.constant 0 : i32
    %c0_i32_1 = arith.constant 0 : i32
    return %c0_i32, %c0_i32_0 : i32, i32
  }
  func.func @transform_10(%arg0: i32) -> (i32, i32) {
    %c0_i32 = arith.constant 0 : i32
    %c0_i32_0 = arith.constant 0 : i32
    %c0_i32_1 = arith.constant 0 : i32
    return %c0_i32, %c0_i32_0 : i32, i32
  }
  func.func @transform_11(%arg0: i32) -> (i32, i32) {
    %c0_i32 = arith.constant 0 : i32
    %c0_i32_0 = arith.constant 0 : i32
    %c0_i32_1 = arith.constant 0 : i32
    return %c0_i32, %c0_i32_0 : i32, i32
  }
  func.func @transform_12(%arg0: i32) -> (i32, i32, i32) {
    %c0_i32 = arith.constant 0 : i32
    %c0_i32_0 = arith.constant 0 : i32
    %c0_i32_1 = arith.constant 0 : i32
    return %arg0, %c0_i32, %c0_i32_0 : i32, i32, i32
  }
}

</mosaic_0001>

<llo_original>
// kernel: lenet5_forward.1
$region0: #{lenet5_forward.1}
  #allocation0 [shape = 'u32[]', space=smem, size = 0x4, offset = 0x4, fixed_abs, tag = 'smem constant byte address 0x4 - core index']
  #allocation1 [shape = 'u32[72,128]{1,0:T(1,128)}', space=vmem, size = 0x9000, scoped, tag = 'internal scratch']
  #allocation2 [shape = 'f32[32,1024]{1,0:T(8,128)}', space=vmem, size = 0x20000, scoped, tag = 'scratch operand']
  #allocation3 [shape = 'f32[200,1024]{1,0:T(8,128)}', space=vmem, size = 0xc8000, scoped, tag = 'scratch operand']
  %s0 = inlined_call_operand.vmem [shape: f32[4,1,1024], index: 0, kind: input, shape index: {}]
  %s1 = inlined_call_operand.vmem [shape: f32[8,32], index: 1, kind: input, shape index: {}]
  %s2 = inlined_call_operand.vmem [shape: f32[8,1], index: 2, kind: input, shape index: {}]
  %s3 = inlined_call_operand.vmem [shape: f32[16,200], index: 3, kind: input, shape index: {}]
  %s4 = inlined_call_operand.vmem [shape: f32[16,1], index: 4, kind: input, shape index: {}]
  %s5 = inlined_call_operand.vmem [shape: f32[1024,32], index: 5, kind: input, shape index: {}]
  %s6 = inlined_call_operand.vmem [shape: f32[16,32,128], index: 6, kind: input, shape index: {}]
  %s7 = inlined_call_operand.vmem [shape: f32[1,128], index: 7, kind: input, shape index: {}]
  %s8 = inlined_call_operand.vmem [shape: f32[128,128], index: 8, kind: input, shape index: {}]
  %s9 = inlined_call_operand.vmem [shape: f32[1,128], index: 9, kind: input, shape index: {}]
  %s10 = inlined_call_operand.vmem [shape: f32[128,128], index: 10, kind: input, shape index: {}]
  %s11 = inlined_call_operand.vmem [shape: f32[1,128], index: 11, kind: input, shape index: {}]
  %s12 = inlined_call_operand.hbm [shape: f32[4,1,128], index: 12, kind: output, shape index: {}]
  %s13 = sld [smem:[#allocation0]]
  $region81: #{lenet5_forward.1} parent=0
    _
  %s15 = ssub.s32 1, %s13
  %s16 = scalar_select 0, %s15, %s13
  $region1: #{lenet5_forward.1} parent=0
    #allocation4 [shape = 'u8[1024]{0}', space=vmem, size = 0x400, scoped, tag = 'output window, operand 0']
    #allocation5 [shape = 's32[2]{0}', space=sflag, size = 0x8, scoped, tag = 'scoped memory for lenet5_forward.1']
    %17 = vsyncpa [#allocation5], 0
    %s18 = scalar_lea.sflag [#allocation5], 1
    %19 = vsyncpa %s18, 0
    loop: start=0, step=1, limit=6
    $region2: #{lenet5_forward.1} parent=1 // loop_pre_header
      _
    $region3: #{lenet5_forward.1} parent=1 // loop_header
      %s21 = sphi 0, %s25
      %p22 = scmp.ge.s32.totalorder %s21, 6
      %s31 = sphi 0, %s33
      %s34 = sphi 0, %s31
      %s35 = sphi 0, %s34
      %s51 = sphi 0, %s35
      %s55 = sphi 0, %s55
      %s57 = sphi 0, %s55
      %s58 = sphi 0, %s57
      %s72 = sphi 0, %s58
      %s76 = sphi 0, %s76
      %s78 = sphi 0, %s76
      %s79 = sphi 0, %s78
      %s93 = sphi 0, %s79
      %s97 = sphi 0, %s97
      %s99 = sphi 0, %s97
      %s100 = sphi 0, %s99
      %s114 = sphi 0, %s100
      %s118 = sphi 0, %s118
      %s120 = sphi 0, %s118
      %s121 = sphi 0, %s120
      %s135 = sphi 0, %s121
      %s139 = sphi 0, %s139
      %s141 = sphi 0, %s139
      %s142 = sphi 0, %s141
      %s156 = sphi 0, %s142
      %s160 = sphi 0, %s160
      %s162 = sphi 0, %s160
      %s163 = sphi 0, %s162
      %s177 = sphi 0, %s163
      %s181 = sphi 0, %s181
      %s183 = sphi 0, %s181
      %s184 = sphi 0, %s183
      %s198 = sphi 0, %s184
      %s202 = sphi 0, %s202
      %s204 = sphi 0, %s202
      %s205 = sphi 0, %s204
      %s219 = sphi 0, %s205
      %s223 = sphi 0, %s223
      %s225 = sphi 0, %s223
      %s226 = sphi 0, %s225
      %s240 = sphi 0, %s226
      %s244 = sphi 0, %s244
      %s246 = sphi 0, %s244
      %s247 = sphi 0, %s246
      %s261 = sphi 0, %s247
      %s265 = sphi 0, %s265
      %s267 = sphi 0, %s265
      %s268 = sphi 0, %s267
      %s282 = sphi 0, %s268
      %s288 = sphi 0, %s290
      %s291 = sphi 0, %s288
      %s292 = sphi 0, %s291
      %s308 = sphi 0, %s292
    $region4: #{lenet5_forward.1} parent=1 // loop_header_branch
      %24 = sbr.rel (%p22) target = $region8
    $region5: #{lenet5_forward.1} parent=1 // loop_body
      %s26 = ssub.s32 %s21, 1
      %s27 = ssub.s32 %s21, 2
      %s28 = sadd.s32 %s21, 1
      %s29 = ssub.s32 %s21, %s28
      %p30 = scmp.eq.s32.totalorder %s29, 0
      %s32 = sadd.s32 %s31, 1
      %s33 = scalar_select %p30, %s31, %s32
      %p36 = pneg %p30
      %p37 = scmp.eq.s32.totalorder %s21, 3
      %p38 = por %p36, %p37
      %p39 = scmp.ne.s32.totalorder %s31, %s34
      %p40 = scmp.eq.s32.totalorder %s21, 0
      %p41 = por %p39, %p40
      %p42 = scmp.ne.s32.totalorder %s31, %s34
      %p43 = scmp.eq.s32.totalorder %s26, 3
      %p44 = por %p42, %p43
      %p45 = scmp.ne.s32.totalorder %s34, %s35
      %p46 = scmp.eq.s32.totalorder %s26, 0
      %p47 = por %p45, %p46
      %p48 = scmp.ne.s32.totalorder %s34, %s35
      %p49 = scmp.eq.s32.totalorder %s27, 3
      %p50 = por %p48, %p49
      %p52 = scmp.ne.s32.totalorder %s35, %s51
      %p53 = scmp.eq.s32.totalorder %s27, 0
      %p54 = por %p52, %p53
      %s56 = sadd.s32 %s55, 1
      %p59 = scmp.eq.s32.totalorder %s21, 3
      %p60 = scmp.ne.s32.totalorder %s55, %s57
      %p61 = scmp.eq.s32.totalorder %s21, 0
      %p62 = por %p60, %p61
      %p63 = scmp.ne.s32.totalorder %s55, %s57
      %p64 = scmp.eq.s32.totalorder %s26, 3
      %p65 = por %p63, %p64
      %p66 = scmp.ne.s32.totalorder %s57, %s58
      %p67 = scmp.eq.s32.totalorder %s26, 0
      %p68 = por %p66, %p67
      %p69 = scmp.ne.s32.totalorder %s57, %s58
      %p70 = scmp.eq.s32.totalorder %s27, 3
      %p71 = por %p69, %p70
      %p73 = scmp.ne.s32.totalorder %s58, %s72
      %p74 = scmp.eq.s32.totalorder %s27, 0
      %p75 = por %p73, %p74
      %s77 = sadd.s32 %s76, 1
      %p80 = scmp.eq.s32.totalorder %s21, 3
      %p81 = scmp.ne.s32.totalorder %s76, %s78
      %p82 = scmp.eq.s32.totalorder %s21, 0
      %p83 = por %p81, %p82
      %p84 = scmp.ne.s32.totalorder %s76, %s78
      %p85 = scmp.eq.s32.totalorder %s26, 3
      %p86 = por %p84, %p85
      %p87 = scmp.ne.s32.totalorder %s78, %s79
      %p88 = scmp.eq.s32.totalorder %s26, 0
      %p89 = por %p87, %p88
      %p90 = scmp.ne.s32.totalorder %s78, %s79
      %p91 = scmp.eq.s32.totalorder %s27, 3
      %p92 = por %p90, %p91
      %p94 = scmp.ne.s32.totalorder %s79, %s93
      %p95 = scmp.eq.s32.totalorder %s27, 0
      %p96 = por %p94, %p95
      %s98 = sadd.s32 %s97, 1
      %p101 = scmp.eq.s32.totalorder %s21, 3
      %p102 = scmp.ne.s32.totalorder %s97, %s99
      %p103 = scmp.eq.s32.totalorder %s21, 0
      %p104 = por %p102, %p103
      %p105 = scmp.ne.s32.totalorder %s97, %s99
      %p106 = scmp.eq.s32.totalorder %s26, 3
      %p107 = por %p105, %p106
      %p108 = scmp.ne.s32.totalorder %s99, %s100
      %p109 = scmp.eq.s32.totalorder %s26, 0
      %p110 = por %p108, %p109
      %p111 = scmp.ne.s32.totalorder %s99, %s100
      %p112 = scmp.eq.s32.totalorder %s27, 3
      %p113 = por %p111, %p112
      %p115 = scmp.ne.s32.totalorder %s100, %s114
      %p116 = scmp.eq.s32.totalorder %s27, 0
      %p117 = por %p115, %p116
      %s119 = sadd.s32 %s118, 1
      %p122 = scmp.eq.s32.totalorder %s21, 3
      %p123 = scmp.ne.s32.totalorder %s118, %s120
      %p124 = scmp.eq.s32.totalorder %s21, 0
      %p125 = por %p123, %p124
      %p126 = scmp.ne.s32.totalorder %s118, %s120
      %p127 = scmp.eq.s32.totalorder %s26, 3
      %p128 = por %p126, %p127
      %p129 = scmp.ne.s32.totalorder %s120, %s121
      %p130 = scmp.eq.s32.totalorder %s26, 0
      %p131 = por %p129, %p130
      %p132 = scmp.ne.s32.totalorder %s120, %s121
      %p133 = scmp.eq.s32.totalorder %s27, 3
      %p134 = por %p132, %p133
      %p136 = scmp.ne.s32.totalorder %s121, %s135
      %p137 = scmp.eq.s32.totalorder %s27, 0
      %p138 = por %p136, %p137
      %s140 = sadd.s32 %s139, 1
      %p143 = scmp.eq.s32.totalorder %s21, 3
      %p144 = scmp.ne.s32.totalorder %s139, %s141
      %p145 = scmp.eq.s32.totalorder %s21, 0
      %p146 = por %p144, %p145
      %p147 = scmp.ne.s32.totalorder %s139, %s141
      %p148 = scmp.eq.s32.totalorder %s26, 3
      %p149 = por %p147, %p148
      %p150 = scmp.ne.s32.totalorder %s141, %s142
      %p151 = scmp.eq.s32.totalorder %s26, 0
      %p152 = por %p150, %p151
      %p153 = scmp.ne.s32.totalorder %s141, %s142
      %p154 = scmp.eq.s32.totalorder %s27, 3
      %p155 = por %p153, %p154
      %p157 = scmp.ne.s32.totalorder %s142, %s156
      %p158 = scmp.eq.s32.totalorder %s27, 0
      %p159 = por %p157, %p158
      %s161 = sadd.s32 %s160, 1
      %p164 = scmp.eq.s32.totalorder %s21, 3
      %p165 = scmp.ne.s32.totalorder %s160, %s162
      %p166 = scmp.eq.s32.totalorder %s21, 0
      %p167 = por %p165, %p166
      %p168 = scmp.ne.s32.totalorder %s160, %s162
      %p169 = scmp.eq.s32.totalorder %s26, 3
      %p170 = por %p168, %p169
      %p171 = scmp.ne.s32.totalorder %s162, %s163
      %p172 = scmp.eq.s32.totalorder %s26, 0
      %p173 = por %p171, %p172
      %p174 = scmp.ne.s32.totalorder %s162, %s163
      %p175 = scmp.eq.s32.totalorder %s27, 3
      %p176 = por %p174, %p175
      %p178 = scmp.ne.s32.totalorder %s163, %s177
      %p179 = scmp.eq.s32.totalorder %s27, 0
      %p180 = por %p178, %p179
      %s182 = sadd.s32 %s181, 1
      %p185 = scmp.eq.s32.totalorder %s21, 3
      %p186 = scmp.ne.s32.totalorder %s181, %s183
      %p187 = scmp.eq.s32.totalorder %s21, 0
      %p188 = por %p186, %p187
      %p189 = scmp.ne.s32.totalorder %s181, %s183
      %p190 = scmp.eq.s32.totalorder %s26, 3
      %p191 = por %p189, %p190
      %p192 = scmp.ne.s32.totalorder %s183, %s184
      %p193 = scmp.eq.s32.totalorder %s26, 0
      %p194 = por %p192, %p193
      %p195 = scmp.ne.s32.totalorder %s183, %s184
      %p196 = scmp.eq.s32.totalorder %s27, 3
      %p197 = por %p195, %p196
      %p199 = scmp.ne.s32.totalorder %s184, %s198
      %p200 = scmp.eq.s32.totalorder %s27, 0
      %p201 = por %p199, %p200
      %s203 = sadd.s32 %s202, 1
      %p206 = scmp.eq.s32.totalorder %s21, 3
      %p207 = scmp.ne.s32.totalorder %s202, %s204
      %p208 = scmp.eq.s32.totalorder %s21, 0
      %p209 = por %p207, %p208
      %p210 = scmp.ne.s32.totalorder %s202, %s204
      %p211 = scmp.eq.s32.totalorder %s26, 3
      %p212 = por %p210, %p211
      %p213 = scmp.ne.s32.totalorder %s204, %s205
      %p214 = scmp.eq.s32.totalorder %s26, 0
      %p215 = por %p213, %p214
      %p216 = scmp.ne.s32.totalorder %s204, %s205
      %p217 = scmp.eq.s32.totalorder %s27, 3
      %p218 = por %p216, %p217
      %p220 = scmp.ne.s32.totalorder %s205, %s219
      %p221 = scmp.eq.s32.totalorder %s27, 0
      %p222 = por %p220, %p221
      %s224 = sadd.s32 %s223, 1
      %p227 = scmp.eq.s32.totalorder %s21, 3
      %p228 = scmp.ne.s32.totalorder %s223, %s225
      %p229 = scmp.eq.s32.totalorder %s21, 0
      %p230 = por %p228, %p229
      %p231 = scmp.ne.s32.totalorder %s223, %s225
      %p232 = scmp.eq.s32.totalorder %s26, 3
      %p233 = por %p231, %p232
      %p234 = scmp.ne.s32.totalorder %s225, %s226
      %p235 = scmp.eq.s32.totalorder %s26, 0
      %p236 = por %p234, %p235
      %p237 = scmp.ne.s32.totalorder %s225, %s226
      %p238 = scmp.eq.s32.totalorder %s27, 3
      %p239 = por %p237, %p238
      %p241 = scmp.ne.s32.totalorder %s226, %s240
      %p242 = scmp.eq.s32.totalorder %s27, 0
      %p243 = por %p241, %p242
      %s245 = sadd.s32 %s244, 1
      %p248 = scmp.eq.s32.totalorder %s21, 3
      %p249 = scmp.ne.s32.totalorder %s244, %s246
      %p250 = scmp.eq.s32.totalorder %s21, 0
      %p251 = por %p249, %p250
      %p252 = scmp.ne.s32.totalorder %s244, %s246
      %p253 = scmp.eq.s32.totalorder %s26, 3
      %p254 = por %p252, %p253
      %p255 = scmp.ne.s32.totalorder %s246, %s247
      %p256 = scmp.eq.s32.totalorder %s26, 0
      %p257 = por %p255, %p256
      %p258 = scmp.ne.s32.totalorder %s246, %s247
      %p259 = scmp.eq.s32.totalorder %s27, 3
      %p260 = por %p258, %p259
      %p262 = scmp.ne.s32.totalorder %s247, %s261
      %p263 = scmp.eq.s32.totalorder %s27, 0
      %p264 = por %p262, %p263
      %s266 = sadd.s32 %s265, 1
      %p269 = scmp.eq.s32.totalorder %s21, 3
      %p270 = scmp.ne.s32.totalorder %s265, %s267
      %p271 = scmp.eq.s32.totalorder %s21, 0
      %p272 = por %p270, %p271
      %p273 = scmp.ne.s32.totalorder %s265, %s267
      %p274 = scmp.eq.s32.totalorder %s26, 3
      %p275 = por %p273, %p274
      %p276 = scmp.ne.s32.totalorder %s267, %s268
      %p277 = scmp.eq.s32.totalorder %s26, 0
      %p278 = por %p276, %p277
      %p279 = scmp.ne.s32.totalorder %s267, %s268
      %p280 = scmp.eq.s32.totalorder %s27, 3
      %p281 = por %p279, %p280
      %p283 = scmp.ne.s32.totalorder %s268, %s282
      %p284 = scmp.eq.s32.totalorder %s27, 0
      %p285 = por %p283, %p284
      %s286 = ssub.s32 %s21, %s28
      %p287 = scmp.eq.s32.totalorder %s286, 0
      %s289 = sadd.s32 %s288, 1
      %s290 = scalar_select %p287, %s288, %s289
      %p293 = pneg %p287
      %p294 = scmp.eq.s32.totalorder %s21, 3
      %p295 = por %p293, %p294
      %p296 = scmp.ne.s32.totalorder %s288, %s291
      %p297 = scmp.eq.s32.totalorder %s21, 0
      %p298 = por %p296, %p297
      %p299 = scmp.ne.s32.totalorder %s288, %s291
      %p300 = scmp.eq.s32.totalorder %s26, 3
      %p301 = por %p299, %p300
      %p302 = scmp.ne.s32.totalorder %s291, %s292
      %p303 = scmp.eq.s32.totalorder %s26, 0
      %p304 = por %p302, %p303
      %p305 = scmp.ne.s32.totalorder %s291, %s292
      %p306 = scmp.eq.s32.totalorder %s27, 3
      %p307 = por %p305, %p306
      %p309 = scmp.ne.s32.totalorder %s292, %s308
      %p310 = scmp.eq.s32.totalorder %s27, 0
      %p311 = por %p309, %p310
      %p312 = scmp.le.s32.totalorder 1, %s21
      %p313 = scmp.lt.s32.totalorder %s21, 5
      %p314 = pnand %p312, %p313
      %p315 = pneg %p314
      // Predicated region
      $region9: #{lenet5_forward.1} parent=5 // pred_check
        _
      $region10: #{lenet5_forward.1} parent=5 // pred_check_branch
        %317 = sbr.rel (%p314) target = $region12
      $region11: #{lenet5_forward.1} parent=5 // pred_region
        %s318 = ssub.s32 %s21, 1
        // Predicated region
        $region13: #{lenet5_forward.1} parent=11 // pred_check
          %p319 = pneg %p68
        $region14: #{lenet5_forward.1} parent=11 // pred_check_branch
          %321 = sbr.rel (%p319) target = $region16
        $region15: #{lenet5_forward.1} parent=11 // pred_region
          _
        $region16: #{lenet5_forward.1} parent=11 // pred_fallthru
          _
        // Predicated region
        $region17: #{lenet5_forward.1} parent=11 // pred_check
          %p322 = pneg %p89
        $region18: #{lenet5_forward.1} parent=11 // pred_check_branch
          %324 = sbr.rel (%p322) target = $region20
        $region19: #{lenet5_forward.1} parent=11 // pred_region
          _
        $region20: #{lenet5_forward.1} parent=11 // pred_fallthru
          _
        // Predicated region
        $region21: #{lenet5_forward.1} parent=11 // pred_check
          %p325 = pneg %p110
        $region22: #{lenet5_forward.1} parent=11 // pred_check_branch
          %327 = sbr.rel (%p325) target = $region24
        $region23: #{lenet5_forward.1} parent=11 // pred_region
          _
        $region24: #{lenet5_forward.1} parent=11 // pred_fallthru
          _
        // Predicated region
        $region25: #{lenet5_forward.1} parent=11 // pred_check
          %p328 = pneg %p131
        $region26: #{lenet5_forward.1} parent=11 // pred_check_branch
          %330 = sbr.rel (%p328) target = $region28
        $region27: #{lenet5_forward.1} parent=11 // pred_region
          _
        $region28: #{lenet5_forward.1} parent=11 // pred_fallthru
          _
        // Predicated region
        $region29: #{lenet5_forward.1} parent=11 // pred_check
          %p331 = pneg %p152
        $region30: #{lenet5_forward.1} parent=11 // pred_check_branch
          %333 = sbr.rel (%p331) target = $region32
        $region31: #{lenet5_forward.1} parent=11 // pred_region
          _
        $region32: #{lenet5_forward.1} parent=11 // pred_fallthru
          _
        // Predicated region
        $region33: #{lenet5_forward.1} parent=11 // pred_check
          %p334 = pneg %p173
        $region34: #{lenet5_forward.1} parent=11 // pred_check_branch
          %336 = sbr.rel (%p334) target = $region36
        $region35: #{lenet5_forward.1} parent=11 // pred_region
          _
        $region36: #{lenet5_forward.1} parent=11 // pred_fallthru
          _
        // Predicated region
        $region37: #{lenet5_forward.1} parent=11 // pred_check
          %p337 = pneg %p194
        $region38: #{lenet5_forward.1} parent=11 // pred_check_branch
          %339 = sbr.rel (%p337) target = $region40
        $region39: #{lenet5_forward.1} parent=11 // pred_region
          _
        $region40: #{lenet5_forward.1} parent=11 // pred_fallthru
          _
        // Predicated region
        $region41: #{lenet5_forward.1} parent=11 // pred_check
          %p340 = pneg %p215
        $region42: #{lenet5_forward.1} parent=11 // pred_check_branch
          %342 = sbr.rel (%p340) target = $region44
        $region43: #{lenet5_forward.1} parent=11 // pred_region
          _
        $region44: #{lenet5_forward.1} parent=11 // pred_fallthru
          _
        // Predicated region
        $region45: #{lenet5_forward.1} parent=11 // pred_check
          %p343 = pneg %p236
        $region46: #{lenet5_forward.1} parent=11 // pred_check_branch
          %345 = sbr.rel (%p343) target = $region48
        $region47: #{lenet5_forward.1} parent=11 // pred_region
          _
        $region48: #{lenet5_forward.1} parent=11 // pred_fallthru
          _
        // Predicated region
        $region49: #{lenet5_forward.1} parent=11 // pred_check
          %p346 = pneg %p257
        $region50: #{lenet5_forward.1} parent=11 // pred_check_branch
          %348 = sbr.rel (%p346) target = $region52
        $region51: #{lenet5_forward.1} parent=11 // pred_region
          _
        $region52: #{lenet5_forward.1} parent=11 // pred_fallthru
          _
        // Predicated region
        $region53: #{lenet5_forward.1} parent=11 // pred_check
          %p349 = pneg %p278
        $region54: #{lenet5_forward.1} parent=11 // pred_check_branch
          %351 = sbr.rel (%p349) target = $region56
        $region55: #{lenet5_forward.1} parent=11 // pred_region
          _
        $region56: #{lenet5_forward.1} parent=11 // pred_fallthru
          _
      $region12: #{lenet5_forward.1} parent=5 // pred_fallthru
        _
      %p352 = scmp.lt.s32.totalorder %s21, 4
      // Predicated region
      $region57: #{lenet5_forward.1} parent=5 // pred_check
        %p353 = pneg %p352
      $region58: #{lenet5_forward.1} parent=5 // pred_check_branch
        %355 = sbr.rel (%p353) target = $region60
      $region59: #{lenet5_forward.1} parent=5 // pred_region
        // Predicated region
        $region61: #{lenet5_forward.1} parent=59 // pred_check
          %p356 = pneg %p41
        $region62: #{lenet5_forward.1} parent=59 // pred_check_branch
          %358 = sbr.rel (%p356) target = $region64
        $region63: #{lenet5_forward.1} parent=59 // pred_region
          %p359 = scmp.lt.s32.totalorder %s21, 3
          %s360 = scalar_select %p359, %s21, 3
          %s361 = smul.addr %s360, 8
          %s362 = scalar_lea.vmem %s0, %s361
        $region64: #{lenet5_forward.1} parent=59 // pred_fallthru
          _
      $region60: #{lenet5_forward.1} parent=5 // pred_fallthru
        _
      %p363 = scmp.le.s32.totalorder 1, %s21
      %p364 = scmp.lt.s32.totalorder %s21, 5
      %p365 = pnand %p363, %p364
      %p366 = pneg %p365
      // Predicated region
      $region65: #{lenet5_forward.1} parent=5 // pred_check
        _
      $region66: #{lenet5_forward.1} parent=5 // pred_check_branch
        %368 = sbr.rel (%p365) target = $region68
      $region67: #{lenet5_forward.1} parent=5 // pred_region
        %s369 = ssub.s32 %s21, 1
        %p370 = scmp.lt.s32.totalorder %s26, 3
        %s371 = scalar_select %p370, %s26, 3
        %s372 = smul.addr %s371, 8
        %s373 = scalar_lea.vmem %s0, %s372
        %p374 = pneg %p47
        %p375 = pneg %p44
        %p376 = pneg %p68
        %p377 = pneg %p65
        %p378 = pneg %p89
        %p379 = pneg %p86
        %p380 = pneg %p110
        %p381 = pneg %p107
        %p382 = pneg %p131
        %p383 = pneg %p128
        %p384 = pneg %p152
        %p385 = pneg %p149
        %p386 = pneg %p173
        %p387 = pneg %p170
        %p388 = pneg %p194
        %p389 = pneg %p191
        %p390 = pneg %p215
        %p391 = pneg %p212
        %p392 = pneg %p236
        %p393 = pneg %p233
        %p394 = pneg %p257
        %p395 = pneg %p254
        %p396 = pneg %p278
        %p397 = pneg %p275
        %p398 = pneg %p304
        %p399 = pneg %p301
        %s400 = sand.u32 %s291, 1
        %s401 = scalar_lea.sflag [#allocation5], %s400
        %s402 = sand.u32 %s291, 1
        %s403 = scalar_lea.vmem [#allocation4], %s402
        %p404 = scmp.lt.s32.totalorder %s26, 3
        %s405 = scalar_select %p404, %s26, 3
        %s406 = smul.addr %s405, 8
        %s407 = scalar_lea.vmem %s0, %s406
        %v408 = vld [vmem:[%s407] sm:$0xff]
        %409 = vst [vmem:[#allocation2 + $0xc0] sm:$0xfe] 0.0
        %410 = vst [vmem:[#allocation2 + $0xc8] sm:$0xfe] 0.0
        %411 = vst [vmem:[#allocation2 + $0xd0] sm:$0xfe] 0.0
        %412 = vst [vmem:[#allocation2 + $0xd8] sm:$0xfe] 0.0
        %413 = vst [vmem:[#allocation2 + $0xe0] sm:$0xfe] 0.0
        %414 = vst [vmem:[#allocation2 + $0xe8] sm:$0xfe] 0.0
        %415 = vst [vmem:[#allocation2 + $0xf0] sm:$0xfe] 0.0
        %416 = vst [vmem:[#allocation2 + $0xf8] sm:$0xfe] 0.0
        %417 = vst [vmem:[#allocation2] ss:$8 sm:$0xf] %v408
        %418 = vst [vmem:[#allocation2] ss:$8 sm:$0xf0] %v408
        %v420 = vperm.slane %v408, 0
        %v421 = vperm.slane %v408, 1
        %v422 = vperm.slane %v408, 2
        %v423 = vperm.slane %v408, 3
        %v424 = vperm.slane %v408, 4
        %v425 = vperm.slane %v408, 5
        %v426 = vperm.slane %v408, 6
        %v427 = vperm.slane %v408, 7
        %436 = vrot.lane.b32.xlu0 %v420, 127
        %v437 = vpop.permute.xlu0 %436
        %438 = vrot.lane.b32.xlu0 %v421, 127
        %v439 = vpop.permute.xlu0 %438
        %440 = vrot.lane.b32.xlu0 %v422, 127
        %v441 = vpop.permute.xlu0 %440
        %442 = vrot.lane.b32.xlu0 %v423, 127
        %v443 = vpop.permute.xlu0 %442
        %444 = vrot.lane.b32.xlu0 %v424, 127
        %v445 = vpop.permute.xlu0 %444
        %446 = vrot.lane.b32.xlu0 %v425, 127
        %v447 = vpop.permute.xlu0 %446
        %448 = vrot.lane.b32.xlu0 %v426, 127
        %v449 = vpop.permute.xlu0 %448
        %450 = vrot.lane.b32.xlu0 %v427, 127
        %v451 = vpop.permute.xlu0 %450
        %v452 = vlaneseq
        %v453 = vand.u32 %v452, 127
        %vm454 = vcmp.lt.s32.totalorder %v453, 127
        %v455 = vsel %vm454, %v449, %v451
        %v456 = vsel %vm454, %v447, %v449
        %v457 = vsel %vm454, %v445, %v447
        %v458 = vsel %vm454, %v443, %v445
        %v459 = vsel %vm454, %v441, %v443
        %v460 = vsel %vm454, %v439, %v441
        %v461 = vsel %vm454, %v437, %v439
        %v462 = vsel %vm454, %v451, %v437
        %v471 = vrot.slane %v460, 7
        %v472 = vrot.slane %v459, 6
        %v473 = vrot.slane %v458, 5
        %v474 = vrot.slane %v457, 4
        %v475 = vrot.slane %v456, 3
        %v476 = vrot.slane %v455, 2
        %v477 = vrot.slane %v462, 1
        %vm478 = vcmask 1040384
        %v479 = vsel %vm478, %v461, %v471
        %vm480 = vcmask 1042434
        %v481 = vsel %vm480, %v472, %v473
        %vm482 = vcmask 1041408
        %v483 = vsel %vm482, %v479, %v481
        %vm484 = vcmask 1044484
        %v485 = vsel %vm484, %v474, %v475
        %vm486 = vcmask 1046534
        %v487 = vsel %vm486, %v476, %v477
        %vm488 = vcmask 1045508
        %v489 = vsel %vm488, %v485, %v487
        %vm490 = vcmask 1043456
        %v491 = vsel %vm490, %v483, %v489
        %s493 = scalar_lea.vmem [#allocation2], 1
        %494 = vst [vmem:[%s493] ss:$8 sm:$0xf] %v491
        %495 = vst [vmem:[%s493] ss:$8 sm:$0xf0] %v491
        %496 = vrot.lane.b32.xlu0 %v420, 126
        %v497 = vpop.permute.xlu0 %496
        %498 = vrot.lane.b32.xlu0 %v421, 126
        %v499 = vpop.permute.xlu0 %498
        %500 = vrot.lane.b32.xlu0 %v422, 126
        %v501 = vpop.permute.xlu0 %500
        %502 = vrot.lane.b32.xlu0 %v423, 126
        %v503 = vpop.permute.xlu0 %502
        %504 = vrot.lane.b32.xlu0 %v424, 126
        %v505 = vpop.permute.xlu0 %504
        %506 = vrot.lane.b32.xlu0 %v425, 126
        %v507 = vpop.permute.xlu0 %506
        %508 = vrot.lane.b32.xlu0 %v426, 126
        %v509 = vpop.permute.xlu0 %508
        %510 = vrot.lane.b32.xlu0 %v427, 126
        %v511 = vpop.permute.xlu0 %510
        %vm512 = vcmp.lt.s32.totalorder %v453, 126
        %v513 = vsel %vm512, %v509, %v511
        %v514 = vsel %vm512, %v507, %v509
        %v515 = vsel %vm512, %v505, %v507
        %v516 = vsel %vm512, %v503, %v505
        %v517 = vsel %vm512, %v501, %v503
        %v518 = vsel %vm512, %v499, %v501
        %v519 = vsel %vm512, %v497, %v499
        %v520 = vsel %vm512, %v511, %v497
        %v529 = vrot.slane %v518, 7
        %v530 = vrot.slane %v517, 6
        %v531 = vrot.slane %v516, 5
        %v532 = vrot.slane %v515, 4
        %v533 = vrot.slane %v514, 3
        %v534 = vrot.slane %v513, 2
        %v535 = vrot.slane %v520, 1
        %v536 = vsel %vm478, %v519, %v529
        %v537 = vsel %vm480, %v530, %v531
        %v538 = vsel %vm482, %v536, %v537
        %v539 = vsel %vm484, %v532, %v533
        %v540 = vsel %vm486, %v534, %v535
        %v541 = vsel %vm488, %v539, %v540
        %v542 = vsel %vm490, %v538, %v541
        %s544 = scalar_lea.vmem [#allocation2], 2
        %545 = vst [vmem:[%s544] ss:$8 sm:$0xf] %v542
        %546 = vst [vmem:[%s544] ss:$8 sm:$0xf0] %v542
        %547 = vrot.lane.b32.xlu0 %v420, 125
        %v548 = vpop.permute.xlu0 %547
        %549 = vrot.lane.b32.xlu0 %v421, 125
        %v550 = vpop.permute.xlu0 %549
        %551 = vrot.lane.b32.xlu0 %v422, 125
        %v552 = vpop.permute.xlu0 %551
        %553 = vrot.lane.b32.xlu0 %v423, 125
        %v554 = vpop.permute.xlu0 %553
        %555 = vrot.lane.b32.xlu0 %v424, 125
        %v556 = vpop.permute.xlu0 %555
        %557 = vrot.lane.b32.xlu0 %v425, 125
        %v558 = vpop.permute.xlu0 %557
        %559 = vrot.lane.b32.xlu0 %v426, 125
        %v560 = vpop.permute.xlu0 %559
        %561 = vrot.lane.b32.xlu0 %v427, 125
        %v562 = vpop.permute.xlu0 %561
        %vm563 = vcmp.lt.s32.totalorder %v453, 125
        %v564 = vsel %vm563, %v560, %v562
        %v565 = vsel %vm563, %v558, %v560
        %v566 = vsel %vm563, %v556, %v558
        %v567 = vsel %vm563, %v554, %v556
        %v568 = vsel %vm563, %v552, %v554
        %v569 = vsel %vm563, %v550, %v552
        %v570 = vsel %vm563, %v548, %v550
        %v571 = vsel %vm563, %v562, %v548
        %v580 = vrot.slane %v569, 7
        %v581 = vrot.slane %v568, 6
        %v582 = vrot.slane %v567, 5
        %v583 = vrot.slane %v566, 4
        %v584 = vrot.slane %v565, 3
        %v585 = vrot.slane %v564, 2
        %v586 = vrot.slane %v571, 1
        %v587 = vsel %vm478, %v570, %v580
        %v588 = vsel %vm480, %v581, %v582
        %v589 = vsel %vm482, %v587, %v588
        %v590 = vsel %vm484, %v583, %v584
        %v591 = vsel %vm486, %v585, %v586
        %v592 = vsel %vm488, %v590, %v591
        %v593 = vsel %vm490, %v589, %v592
        %s595 = scalar_lea.vmem [#allocation2], 3
        %596 = vst [vmem:[%s595] ss:$8 sm:$0xf] %v593
        %597 = vst [vmem:[%s595] ss:$8 sm:$0xf0] %v593
        %598 = vrot.lane.b32.xlu0 %v420, 124
        %v599 = vpop.permute.xlu0 %598
        %600 = vrot.lane.b32.xlu0 %v421, 124
        %v601 = vpop.permute.xlu0 %600
        %602 = vrot.lane.b32.xlu0 %v422, 124
        %v603 = vpop.permute.xlu0 %602
        %604 = vrot.lane.b32.xlu0 %v423, 124
        %v605 = vpop.permute.xlu0 %604
        %606 = vrot.lane.b32.xlu0 %v424, 124
        %v607 = vpop.permute.xlu0 %606
        %608 = vrot.lane.b32.xlu0 %v425, 124
        %v609 = vpop.permute.xlu0 %608
        %610 = vrot.lane.b32.xlu0 %v426, 124
        %v611 = vpop.permute.xlu0 %610
        %612 = vrot.lane.b32.xlu0 %v427, 124
        %v613 = vpop.permute.xlu0 %612
        %vm614 = vcmp.lt.s32.totalorder %v453, 124
        %v615 = vsel %vm614, %v611, %v613
        %v616 = vsel %vm614, %v609, %v611
        %v617 = vsel %vm614, %v607, %v609
        %v618 = vsel %vm614, %v605, %v607
        %v619 = vsel %vm614, %v603, %v605
        %v620 = vsel %vm614, %v601, %v603
        %v621 = vsel %vm614, %v599, %v601
        %v622 = vsel %vm614, %v613, %v599
        %v631 = vrot.slane %v620, 7
        %v632 = vrot.slane %v619, 6
        %v633 = vrot.slane %v618, 5
        %v634 = vrot.slane %v617, 4
        %v635 = vrot.slane %v616, 3
        %v636 = vrot.slane %v615, 2
        %v637 = vrot.slane %v622, 1
        %v638 = vsel %vm478, %v621, %v631
        %v639 = vsel %vm480, %v632, %v633
        %v640 = vsel %vm482, %v638, %v639
        %v641 = vsel %vm484, %v634, %v635
        %v642 = vsel %vm486, %v636, %v637
        %v643 = vsel %vm488, %v641, %v642
        %v644 = vsel %vm490, %v640, %v643
        %s646 = scalar_lea.vmem [#allocation2], 4
        %647 = vst [vmem:[%s646] ss:$8 sm:$0xf] %v644
        %648 = vst [vmem:[%s646] ss:$8 sm:$0xf0] %v644
        %649 = vrot.lane.b32.xlu0 %v420, 96
        %v650 = vpop.permute.xlu0 %649
        %651 = vrot.lane.b32.xlu0 %v421, 96
        %v652 = vpop.permute.xlu0 %651
        %653 = vrot.lane.b32.xlu0 %v422, 96
        %v654 = vpop.permute.xlu0 %653
        %655 = vrot.lane.b32.xlu0 %v423, 96
        %v656 = vpop.permute.xlu0 %655
        %657 = vrot.lane.b32.xlu0 %v424, 96
        %v658 = vpop.permute.xlu0 %657
        %659 = vrot.lane.b32.xlu0 %v425, 96
        %v660 = vpop.permute.xlu0 %659
        %661 = vrot.lane.b32.xlu0 %v426, 96
        %v662 = vpop.permute.xlu0 %661
        %663 = vrot.lane.b32.xlu0 %v427, 96
        %v664 = vpop.permute.xlu0 %663
        %vm665 = vcmp.lt.s32.totalorder %v453, 96
        %v666 = vsel %vm665, %v662, %v664
        %v667 = vsel %vm665, %v660, %v662
        %v668 = vsel %vm665, %v658, %v660
        %v669 = vsel %vm665, %v656, %v658
        %v670 = vsel %vm665, %v654, %v656
        %v671 = vsel %vm665, %v652, %v654
        %v672 = vsel %vm665, %v650, %v652
        %v673 = vsel %vm665, %v664, %v650
        %v682 = vrot.slane %v671, 7
        %v683 = vrot.slane %v670, 6
        %v684 = vrot.slane %v669, 5
        %v685 = vrot.slane %v668, 4
        %v686 = vrot.slane %v667, 3
        %v687 = vrot.slane %v666, 2
        %v688 = vrot.slane %v673, 1
        %v689 = vsel %vm478, %v672, %v682
        %v690 = vsel %vm480, %v683, %v684
        %v691 = vsel %vm482, %v689, %v690
        %v692 = vsel %vm484, %v685, %v686
        %v693 = vsel %vm486, %v687, %v688
        %v694 = vsel %vm488, %v692, %v693
        %v695 = vsel %vm490, %v691, %v694
        %s697 = scalar_lea.vmem [#allocation2], 5
        %698 = vst [vmem:[%s697] ss:$8 sm:$0xf] %v695
        %699 = vst [vmem:[%s697] ss:$8 sm:$0xf0] %v695
        %700 = vrot.lane.b32.xlu0 %v420, 95
        %v701 = vpop.permute.xlu0 %700
        %702 = vrot.lane.b32.xlu0 %v421, 95
        %v703 = vpop.permute.xlu0 %702
        %704 = vrot.lane.b32.xlu0 %v422, 95
        %v705 = vpop.permute.xlu0 %704
        %706 = vrot.lane.b32.xlu0 %v423, 95
        %v707 = vpop.permute.xlu0 %706
        %708 = vrot.lane.b32.xlu0 %v424, 95
        %v709 = vpop.permute.xlu0 %708
        %710 = vrot.lane.b32.xlu0 %v425, 95
        %v711 = vpop.permute.xlu0 %710
        %712 = vrot.lane.b32.xlu0 %v426, 95
        %v713 = vpop.permute.xlu0 %712
        %714 = vrot.lane.b32.xlu0 %v427, 95
        %v715 = vpop.permute.xlu0 %714
        %vm716 = vcmp.lt.s32.totalorder %v453, 95
        %v717 = vsel %vm716, %v713, %v715
        %v718 = vsel %vm716, %v711, %v713
        %v719 = vsel %vm716, %v709, %v711
        %v720 = vsel %vm716, %v707, %v709
        %v721 = vsel %vm716, %v705, %v707
        %v722 = vsel %vm716, %v703, %v705
        %v723 = vsel %vm716, %v701, %v703
        %v724 = vsel %vm716, %v715, %v701
        %v733 = vrot.slane %v722, 7
        %v734 = vrot.slane %v721, 6
        %v735 = vrot.slane %v720, 5
        %v736 = vrot.slane %v719, 4
        %v737 = vrot.slane %v718, 3
        %v738 = vrot.slane %v717, 2
        %v739 = vrot.slane %v724, 1
        %v740 = vsel %vm478, %v723, %v733
        %v741 = vsel %vm480, %v734, %v735
        %v742 = vsel %vm482, %v740, %v741
        %v743 = vsel %vm484, %v736, %v737
        %v744 = vsel %vm486, %v738, %v739
        %v745 = vsel %vm488, %v743, %v744
        %v746 = vsel %vm490, %v742, %v745
        %s748 = scalar_lea.vmem [#allocation2], 6
        %749 = vst [vmem:[%s748] ss:$8 sm:$0xf] %v746
        %750 = vst [vmem:[%s748] ss:$8 sm:$0xf0] %v746
        %751 = vrot.lane.b32.xlu0 %v420, 94
        %v752 = vpop.permute.xlu0 %751
        %753 = vrot.lane.b32.xlu0 %v421, 94
        %v754 = vpop.permute.xlu0 %753
        %755 = vrot.lane.b32.xlu0 %v422, 94
        %v756 = vpop.permute.xlu0 %755
        %757 = vrot.lane.b32.xlu0 %v423, 94
        %v758 = vpop.permute.xlu0 %757
        %759 = vrot.lane.b32.xlu0 %v424, 94
        %v760 = vpop.permute.xlu0 %759
        %761 = vrot.lane.b32.xlu0 %v425, 94
        %v762 = vpop.permute.xlu0 %761
        %763 = vrot.lane.b32.xlu0 %v426, 94
        %v764 = vpop.permute.xlu0 %763
        %765 = vrot.lane.b32.xlu0 %v427, 94
        %v766 = vpop.permute.xlu0 %765
        %vm767 = vcmp.lt.s32.totalorder %v453, 94
        %v768 = vsel %vm767, %v764, %v766
        %v769 = vsel %vm767, %v762, %v764
        %v770 = vsel %vm767, %v760, %v762
        %v771 = vsel %vm767, %v758, %v760
        %v772 = vsel %vm767, %v756, %v758
        %v773 = vsel %vm767, %v754, %v756
        %v774 = vsel %vm767, %v752, %v754
        %v775 = vsel %vm767, %v766, %v752
        %v784 = vrot.slane %v773, 7
        %v785 = vrot.slane %v772, 6
        %v786 = vrot.slane %v771, 5
        %v787 = vrot.slane %v770, 4
        %v788 = vrot.slane %v769, 3
        %v789 = vrot.slane %v768, 2
        %v790 = vrot.slane %v775, 1
        %v791 = vsel %vm478, %v774, %v784
        %v792 = vsel %vm480, %v785, %v786
        %v793 = vsel %vm482, %v791, %v792
        %v794 = vsel %vm484, %v787, %v788
        %v795 = vsel %vm486, %v789, %v790
        %v796 = vsel %vm488, %v794, %v795
        %v797 = vsel %vm490, %v793, %v796
        %s799 = scalar_lea.vmem [#allocation2], 7
        %800 = vst [vmem:[%s799] ss:$8 sm:$0xf] %v797
        %801 = vst [vmem:[%s799] ss:$8 sm:$0xf0] %v797
        %802 = vrot.lane.b32.xlu0 %v420, 93
        %v803 = vpop.permute.xlu0 %802
        %804 = vrot.lane.b32.xlu0 %v421, 93
        %v805 = vpop.permute.xlu0 %804
        %806 = vrot.lane.b32.xlu0 %v422, 93
        %v807 = vpop.permute.xlu0 %806
        %808 = vrot.lane.b32.xlu0 %v423, 93
        %v809 = vpop.permute.xlu0 %808
        %810 = vrot.lane.b32.xlu0 %v424, 93
        %v811 = vpop.permute.xlu0 %810
        %812 = vrot.lane.b32.xlu0 %v425, 93
        %v813 = vpop.permute.xlu0 %812
        %814 = vrot.lane.b32.xlu0 %v426, 93
        %v815 = vpop.permute.xlu0 %814
        %816 = vrot.lane.b32.xlu0 %v427, 93
        %v817 = vpop.permute.xlu0 %816
        %vm818 = vcmp.lt.s32.totalorder %v453, 93
        %v819 = vsel %vm818, %v815, %v817
        %v820 = vsel %vm818, %v813, %v815
        %v821 = vsel %vm818, %v811, %v813
        %v822 = vsel %vm818, %v809, %v811
        %v823 = vsel %vm818, %v807, %v809
        %v824 = vsel %vm818, %v805, %v807
        %v825 = vsel %vm818, %v803, %v805
        %v826 = vsel %vm818, %v817, %v803
        %v835 = vrot.slane %v824, 7
        %v836 = vrot.slane %v823, 6
        %v837 = vrot.slane %v822, 5
        %v838 = vrot.slane %v821, 4
        %v839 = vrot.slane %v820, 3
        %v840 = vrot.slane %v819, 2
        %v841 = vrot.slane %v826, 1
        %v842 = vsel %vm478, %v825, %v835
        %v843 = vsel %vm480, %v836, %v837
        %v844 = vsel %vm482, %v842, %v843
        %v845 = vsel %vm484, %v838, %v839
        %v846 = vsel %vm486, %v840, %v841
        %v847 = vsel %vm488, %v845, %v846
        %v848 = vsel %vm490, %v844, %v847
        %s850 = scalar_lea.vmem [#allocation2], 64
        %851 = vst [vmem:[%s850] ss:$8 sm:$0xf] %v848
        %852 = vst [vmem:[%s850] ss:$8 sm:$0xf0] %v848
        %853 = vrot.lane.b32.xlu0 %v420, 92
        %v854 = vpop.permute.xlu0 %853
        %855 = vrot.lane.b32.xlu0 %v421, 92
        %v856 = vpop.permute.xlu0 %855
        %857 = vrot.lane.b32.xlu0 %v422, 92
        %v858 = vpop.permute.xlu0 %857
        %859 = vrot.lane.b32.xlu0 %v423, 92
        %v860 = vpop.permute.xlu0 %859
        %861 = vrot.lane.b32.xlu0 %v424, 92
        %v862 = vpop.permute.xlu0 %861
        %863 = vrot.lane.b32.xlu0 %v425, 92
        %v864 = vpop.permute.xlu0 %863
        %865 = vrot.lane.b32.xlu0 %v426, 92
        %v866 = vpop.permute.xlu0 %865
        %867 = vrot.lane.b32.xlu0 %v427, 92
        %v868 = vpop.permute.xlu0 %867
        %vm869 = vcmp.lt.s32.totalorder %v453, 92
        %v870 = vsel %vm869, %v866, %v868
        %v871 = vsel %vm869, %v864, %v866
        %v872 = vsel %vm869, %v862, %v864
        %v873 = vsel %vm869, %v860, %v862
        %v874 = vsel %vm869, %v858, %v860
        %v875 = vsel %vm869, %v856, %v858
        %v876 = vsel %vm869, %v854, %v856
        %v877 = vsel %vm869, %v868, %v854
        %v886 = vrot.slane %v875, 7
        %v887 = vrot.slane %v874, 6
        %v888 = vrot.slane %v873, 5
        %v889 = vrot.slane %v872, 4
        %v890 = vrot.slane %v871, 3
        %v891 = vrot.slane %v870, 2
        %v892 = vrot.slane %v877, 1
        %v893 = vsel %vm478, %v876, %v886
        %v894 = vsel %vm480, %v887, %v888
        %v895 = vsel %vm482, %v893, %v894
        %v896 = vsel %vm484, %v889, %v890
        %v897 = vsel %vm486, %v891, %v892
        %v898 = vsel %vm488, %v896, %v897
        %v899 = vsel %vm490, %v895, %v898
        %s901 = scalar_lea.vmem [#allocation2], 65
        %902 = vst [vmem:[%s901] ss:$8 sm:$0xf] %v899
        %903 = vst [vmem:[%s901] ss:$8 sm:$0xf0] %v899
        %904 = vrot.lane.b32.xlu0 %v420, 64
        %v905 = vpop.permute.xlu0 %904
        %906 = vrot.lane.b32.xlu0 %v421, 64
        %v907 = vpop.permute.xlu0 %906
        %908 = vrot.lane.b32.xlu0 %v422, 64
        %v909 = vpop.permute.xlu0 %908
        %910 = vrot.lane.b32.xlu0 %v423, 64
        %v911 = vpop.permute.xlu0 %910
        %912 = vrot.lane.b32.xlu0 %v424, 64
        %v913 = vpop.permute.xlu0 %912
        %914 = vrot.lane.b32.xlu0 %v425, 64
        %v915 = vpop.permute.xlu0 %914
        %916 = vrot.lane.b32.xlu0 %v426, 64
        %v917 = vpop.permute.xlu0 %916
        %918 = vrot.lane.b32.xlu0 %v427, 64
        %v919 = vpop.permute.xlu0 %918
        %vm920 = vcmp.lt.s32.totalorder %v453, 64
        %v921 = vsel %vm920, %v917, %v919
        %v922 = vsel %vm920, %v915, %v917
        %v923 = vsel %vm920, %v913, %v915
        %v924 = vsel %vm920, %v911, %v913
        %v925 = vsel %vm920, %v909, %v911
        %v926 = vsel %vm920, %v907, %v909
        %v927 = vsel %vm920, %v905, %v907
        %v928 = vsel %vm920, %v919, %v905
        %v937 = vrot.slane %v926, 7
        %v938 = vrot.slane %v925, 6
        %v939 = vrot.slane %v924, 5
        %v940 = vrot.slane %v923, 4
        %v941 = vrot.slane %v922, 3
        %v942 = vrot.slane %v921, 2
        %v943 = vrot.slane %v928, 1
        %v944 = vsel %vm478, %v927, %v937
        %v945 = vsel %vm480, %v938, %v939
        %v946 = vsel %vm482, %v944, %v945
        %v947 = vsel %vm484, %v940, %v941
        %v948 = vsel %vm486, %v942, %v943
        %v949 = vsel %vm488, %v947, %v948
        %v950 = vsel %vm490, %v946, %v949
        %s952 = scalar_lea.vmem [#allocation2], 66
        %953 = vst [vmem:[%s952] ss:$8 sm:$0xf] %v950
        %954 = vst [vmem:[%s952] ss:$8 sm:$0xf0] %v950
        %955 = vrot.lane.b32.xlu0 %v420, 63
        %v956 = vpop.permute.xlu0 %955
        %957 = vrot.lane.b32.xlu0 %v421, 63
        %v958 = vpop.permute.xlu0 %957
        %959 = vrot.lane.b32.xlu0 %v422, 63
        %v960 = vpop.permute.xlu0 %959
        %961 = vrot.lane.b32.xlu0 %v423, 63
        %v962 = vpop.permute.xlu0 %961
        %963 = vrot.lane.b32.xlu0 %v424, 63
        %v964 = vpop.permute.xlu0 %963
        %965 = vrot.lane.b32.xlu0 %v425, 63
        %v966 = vpop.permute.xlu0 %965
        %967 = vrot.lane.b32.xlu0 %v426, 63
        %v968 = vpop.permute.xlu0 %967
        %969 = vrot.lane.b32.xlu0 %v427, 63
        %v970 = vpop.permute.xlu0 %969
        %vm971 = vcmp.lt.s32.totalorder %v453, 63
        %v972 = vsel %vm971, %v968, %v970
        %v973 = vsel %vm971, %v966, %v968
        %v974 = vsel %vm971, %v964, %v966
        %v975 = vsel %vm971, %v962, %v964
        %v976 = vsel %vm971, %v960, %v962
        %v977 = vsel %vm971, %v958, %v960
        %v978 = vsel %vm971, %v956, %v958
        %v979 = vsel %vm971, %v970, %v956
        %v988 = vrot.slane %v977, 7
        %v989 = vrot.slane %v976, 6
        %v990 = vrot.slane %v975, 5
        %v991 = vrot.slane %v974, 4
        %v992 = vrot.slane %v973, 3
        %v993 = vrot.slane %v972, 2
        %v994 = vrot.slane %v979, 1
        %v995 = vsel %vm478, %v978, %v988
        %v996 = vsel %vm480, %v989, %v990
        %v997 = vsel %vm482, %v995, %v996
        %v998 = vsel %vm484, %v991, %v992
        %v999 = vsel %vm486, %v993, %v994
        %v1000 = vsel %vm488, %v998, %v999
        %v1001 = vsel %vm490, %v997, %v1000
        %s1003 = scalar_lea.vmem [#allocation2], 67
        %1004 = vst [vmem:[%s1003] ss:$8 sm:$0xf] %v1001
        %1005 = vst [vmem:[%s1003] ss:$8 sm:$0xf0] %v1001
        %1006 = vrot.lane.b32.xlu0 %v420, 62
        %v1007 = vpop.permute.xlu0 %1006
        %1008 = vrot.lane.b32.xlu0 %v421, 62
        %v1009 = vpop.permute.xlu0 %1008
        %1010 = vrot.lane.b32.xlu0 %v422, 62
        %v1011 = vpop.permute.xlu0 %1010
        %1012 = vrot.lane.b32.xlu0 %v423, 62
        %v1013 = vpop.permute.xlu0 %1012
        %1014 = vrot.lane.b32.xlu0 %v424, 62
        %v1015 = vpop.permute.xlu0 %1014
        %1016 = vrot.lane.b32.xlu0 %v425, 62
        %v1017 = vpop.permute.xlu0 %1016
        %1018 = vrot.lane.b32.xlu0 %v426, 62
        %v1019 = vpop.permute.xlu0 %1018
        %1020 = vrot.lane.b32.xlu0 %v427, 62
        %v1021 = vpop.permute.xlu0 %1020
        %vm1022 = vcmp.lt.s32.totalorder %v453, 62
        %v1023 = vsel %vm1022, %v1019, %v1021
        %v1024 = vsel %vm1022, %v1017, %v1019
        %v1025 = vsel %vm1022, %v1015, %v1017
        %v1026 = vsel %vm1022, %v1013, %v1015
        %v1027 = vsel %vm1022, %v1011, %v1013
        %v1028 = vsel %vm1022, %v1009, %v1011
        %v1029 = vsel %vm1022, %v1007, %v1009
        %v1030 = vsel %vm1022, %v1021, %v1007
        %v1039 = vrot.slane %v1028, 7
        %v1040 = vrot.slane %v1027, 6
        %v1041 = vrot.slane %v1026, 5
        %v1042 = vrot.slane %v1025, 4
        %v1043 = vrot.slane %v1024, 3
        %v1044 = vrot.slane %v1023, 2
        %v1045 = vrot.slane %v1030, 1
        %v1046 = vsel %vm478, %v1029, %v1039
        %v1047 = vsel %vm480, %v1040, %v1041
        %v1048 = vsel %vm482, %v1046, %v1047
        %v1049 = vsel %vm484, %v1042, %v1043
        %v1050 = vsel %vm486, %v1044, %v1045
        %v1051 = vsel %vm488, %v1049, %v1050
        %v1052 = vsel %vm490, %v1048, %v1051
        %s1054 = scalar_lea.vmem [#allocation2], 68
        %1055 = vst [vmem:[%s1054] ss:$8 sm:$0xf] %v1052
        %1056 = vst [vmem:[%s1054] ss:$8 sm:$0xf0] %v1052
        %1057 = vrot.lane.b32.xlu0 %v420, 61
        %v1058 = vpop.permute.xlu0 %1057
        %1059 = vrot.lane.b32.xlu0 %v421, 61
        %v1060 = vpop.permute.xlu0 %1059
        %1061 = vrot.lane.b32.xlu0 %v422, 61
        %v1062 = vpop.permute.xlu0 %1061
        %1063 = vrot.lane.b32.xlu0 %v423, 61
        %v1064 = vpop.permute.xlu0 %1063
        %1065 = vrot.lane.b32.xlu0 %v424, 61
        %v1066 = vpop.permute.xlu0 %1065
        %1067 = vrot.lane.b32.xlu0 %v425, 61
        %v1068 = vpop.permute.xlu0 %1067
        %1069 = vrot.lane.b32.xlu0 %v426, 61
        %v1070 = vpop.permute.xlu0 %1069
        %1071 = vrot.lane.b32.xlu0 %v427, 61
        %v1072 = vpop.permute.xlu0 %1071
        %vm1073 = vcmp.lt.s32.totalorder %v453, 61
        %v1074 = vsel %vm1073, %v1070, %v1072
        %v1075 = vsel %vm1073, %v1068, %v1070
        %v1076 = vsel %vm1073, %v1066, %v1068
        %v1077 = vsel %vm1073, %v1064, %v1066
        %v1078 = vsel %vm1073, %v1062, %v1064
        %v1079 = vsel %vm1073, %v1060, %v1062
        %v1080 = vsel %vm1073, %v1058, %v1060
        %v1081 = vsel %vm1073, %v1072, %v1058
        %v1090 = vrot.slane %v1079, 7
        %v1091 = vrot.slane %v1078, 6
        %v1092 = vrot.slane %v1077, 5
        %v1093 = vrot.slane %v1076, 4
        %v1094 = vrot.slane %v1075, 3
        %v1095 = vrot.slane %v1074, 2
        %v1096 = vrot.slane %v1081, 1
        %v1097 = vsel %vm478, %v1080, %v1090
        %v1098 = vsel %vm480, %v1091, %v1092
        %v1099 = vsel %vm482, %v1097, %v1098
        %v1100 = vsel %vm484, %v1093, %v1094
        %v1101 = vsel %vm486, %v1095, %v1096
        %v1102 = vsel %vm488, %v1100, %v1101
        %v1103 = vsel %vm490, %v1099, %v1102
        %s1105 = scalar_lea.vmem [#allocation2], 69
        %1106 = vst [vmem:[%s1105] ss:$8 sm:$0xf] %v1103
        %1107 = vst [vmem:[%s1105] ss:$8 sm:$0xf0] %v1103
        %1108 = vrot.lane.b32.xlu0 %v420, 60
        %v1109 = vpop.permute.xlu0 %1108
        %1110 = vrot.lane.b32.xlu0 %v421, 60
        %v1111 = vpop.permute.xlu0 %1110
        %1112 = vrot.lane.b32.xlu0 %v422, 60
        %v1113 = vpop.permute.xlu0 %1112
        %1114 = vrot.lane.b32.xlu0 %v423, 60
        %v1115 = vpop.permute.xlu0 %1114
        %1116 = vrot.lane.b32.xlu0 %v424, 60
        %v1117 = vpop.permute.xlu0 %1116
        %1118 = vrot.lane.b32.xlu0 %v425, 60
        %v1119 = vpop.permute.xlu0 %1118
        %1120 = vrot.lane.b32.xlu0 %v426, 60
        %v1121 = vpop.permute.xlu0 %1120
        %1122 = vrot.lane.b32.xlu0 %v427, 60
        %v1123 = vpop.permute.xlu0 %1122
        %vm1124 = vcmp.lt.s32.totalorder %v453, 60
        %v1125 = vsel %vm1124, %v1121, %v1123
        %v1126 = vsel %vm1124, %v1119, %v1121
        %v1127 = vsel %vm1124, %v1117, %v1119
        %v1128 = vsel %vm1124, %v1115, %v1117
        %v1129 = vsel %vm1124, %v1113, %v1115
        %v1130 = vsel %vm1124, %v1111, %v1113
        %v1131 = vsel %vm1124, %v1109, %v1111
        %v1132 = vsel %vm1124, %v1123, %v1109
        %v1141 = vrot.slane %v1130, 7
        %v1142 = vrot.slane %v1129, 6
        %v1143 = vrot.slane %v1128, 5
        %v1144 = vrot.slane %v1127, 4
        %v1145 = vrot.slane %v1126, 3
        %v1146 = vrot.slane %v1125, 2
        %v1147 = vrot.slane %v1132, 1
        %v1148 = vsel %vm478, %v1131, %v1141
        %v1149 = vsel %vm480, %v1142, %v1143
        %v1150 = vsel %vm482, %v1148, %v1149
        %v1151 = vsel %vm484, %v1144, %v1145
        %v1152 = vsel %vm486, %v1146, %v1147
        %v1153 = vsel %vm488, %v1151, %v1152
        %v1154 = vsel %vm490, %v1150, %v1153
        %s1156 = scalar_lea.vmem [#allocation2], 70
        %1157 = vst [vmem:[%s1156] ss:$8 sm:$0xf] %v1154
        %1158 = vst [vmem:[%s1156] ss:$8 sm:$0xf0] %v1154
        %1159 = vrot.lane.b32.xlu0 %v420, 32
        %v1160 = vpop.permute.xlu0 %1159
        %1161 = vrot.lane.b32.xlu0 %v421, 32
        %v1162 = vpop.permute.xlu0 %1161
        %1163 = vrot.lane.b32.xlu0 %v422, 32
        %v1164 = vpop.permute.xlu0 %1163
        %1165 = vrot.lane.b32.xlu0 %v423, 32
        %v1166 = vpop.permute.xlu0 %1165
        %1167 = vrot.lane.b32.xlu0 %v424, 32
        %v1168 = vpop.permute.xlu0 %1167
        %1169 = vrot.lane.b32.xlu0 %v425, 32
        %v1170 = vpop.permute.xlu0 %1169
        %1171 = vrot.lane.b32.xlu0 %v426, 32
        %v1172 = vpop.permute.xlu0 %1171
        %1173 = vrot.lane.b32.xlu0 %v427, 32
        %v1174 = vpop.permute.xlu0 %1173
        %vm1175 = vcmp.lt.s32.totalorder %v453, 32
        %v1176 = vsel %vm1175, %v1172, %v1174
        %v1177 = vsel %vm1175, %v1170, %v1172
        %v1178 = vsel %vm1175, %v1168, %v1170
        %v1179 = vsel %vm1175, %v1166, %v1168
        %v1180 = vsel %vm1175, %v1164, %v1166
        %v1181 = vsel %vm1175, %v1162, %v1164
        %v1182 = vsel %vm1175, %v1160, %v1162
        %v1183 = vsel %vm1175, %v1174, %v1160
        %v1192 = vrot.slane %v1181, 7
        %v1193 = vrot.slane %v1180, 6
        %v1194 = vrot.slane %v1179, 5
        %v1195 = vrot.slane %v1178, 4
        %v1196 = vrot.slane %v1177, 3
        %v1197 = vrot.slane %v1176, 2
        %v1198 = vrot.slane %v1183, 1
        %v1199 = vsel %vm478, %v1182, %v1192
        %v1200 = vsel %vm480, %v1193, %v1194
        %v1201 = vsel %vm482, %v1199, %v1200
        %v1202 = vsel %vm484, %v1195, %v1196
        %v1203 = vsel %vm486, %v1197, %v1198
        %v1204 = vsel %vm488, %v1202, %v1203
        %v1205 = vsel %vm490, %v1201, %v1204
        %s1207 = scalar_lea.vmem [#allocation2], 71
        %1208 = vst [vmem:[%s1207] ss:$8 sm:$0xf] %v1205
        %1209 = vst [vmem:[%s1207] ss:$8 sm:$0xf0] %v1205
        %1210 = vrot.lane.b32.xlu0 %v420, 31
        %v1211 = vpop.permute.xlu0 %1210
        %1212 = vrot.lane.b32.xlu0 %v421, 31
        %v1213 = vpop.permute.xlu0 %1212
        %1214 = vrot.lane.b32.xlu0 %v422, 31
        %v1215 = vpop.permute.xlu0 %1214
        %1216 = vrot.lane.b32.xlu0 %v423, 31
        %v1217 = vpop.permute.xlu0 %1216
        %1218 = vrot.lane.b32.xlu0 %v424, 31
        %v1219 = vpop.permute.xlu0 %1218
        %1220 = vrot.lane.b32.xlu0 %v425, 31
        %v1221 = vpop.permute.xlu0 %1220
        %1222 = vrot.lane.b32.xlu0 %v426, 31
        %v1223 = vpop.permute.xlu0 %1222
        %1224 = vrot.lane.b32.xlu0 %v427, 31
        %v1225 = vpop.permute.xlu0 %1224
        %vm1226 = vcmp.lt.s32.totalorder %v453, 31
        %v1227 = vsel %vm1226, %v1223, %v1225
        %v1228 = vsel %vm1226, %v1221, %v1223
        %v1229 = vsel %vm1226, %v1219, %v1221
        %v1230 = vsel %vm1226, %v1217, %v1219
        %v1231 = vsel %vm1226, %v1215, %v1217
        %v1232 = vsel %vm1226, %v1213, %v1215
        %v1233 = vsel %vm1226, %v1211, %v1213
        %v1234 = vsel %vm1226, %v1225, %v1211
        %v1243 = vrot.slane %v1232, 7
        %v1244 = vrot.slane %v1231, 6
        %v1245 = vrot.slane %v1230, 5
        %v1246 = vrot.slane %v1229, 4
        %v1247 = vrot.slane %v1228, 3
        %v1248 = vrot.slane %v1227, 2
        %v1249 = vrot.slane %v1234, 1
        %v1250 = vsel %vm478, %v1233, %v1243
        %v1251 = vsel %vm480, %v1244, %v1245
        %v1252 = vsel %vm482, %v1250, %v1251
        %v1253 = vsel %vm484, %v1246, %v1247
        %v1254 = vsel %vm486, %v1248, %v1249
        %v1255 = vsel %vm488, %v1253, %v1254
        %v1256 = vsel %vm490, %v1252, %v1255
        %s1258 = scalar_lea.vmem [#allocation2], 128
        %1259 = vst [vmem:[%s1258] ss:$8 sm:$0xf] %v1256
        %1260 = vst [vmem:[%s1258] ss:$8 sm:$0xf0] %v1256
        %1261 = vrot.lane.b32.xlu0 %v420, 30
        %v1262 = vpop.permute.xlu0 %1261
        %1263 = vrot.lane.b32.xlu0 %v421, 30
        %v1264 = vpop.permute.xlu0 %1263
        %1265 = vrot.lane.b32.xlu0 %v422, 30
        %v1266 = vpop.permute.xlu0 %1265
        %1267 = vrot.lane.b32.xlu0 %v423, 30
        %v1268 = vpop.permute.xlu0 %1267
        %1269 = vrot.lane.b32.xlu0 %v424, 30
        %v1270 = vpop.permute.xlu0 %1269
        %1271 = vrot.lane.b32.xlu0 %v425, 30
        %v1272 = vpop.permute.xlu0 %1271
        %1273 = vrot.lane.b32.xlu0 %v426, 30
        %v1274 = vpop.permute.xlu0 %1273
        %1275 = vrot.lane.b32.xlu0 %v427, 30
        %v1276 = vpop.permute.xlu0 %1275
        %vm1277 = vcmp.lt.s32.totalorder %v453, 30
        %v1278 = vsel %vm1277, %v1274, %v1276
        %v1279 = vsel %vm1277, %v1272, %v1274
        %v1280 = vsel %vm1277, %v1270, %v1272
        %v1281 = vsel %vm1277, %v1268, %v1270
        %v1282 = vsel %vm1277, %v1266, %v1268
        %v1283 = vsel %vm1277, %v1264, %v1266
        %v1284 = vsel %vm1277, %v1262, %v1264
        %v1285 = vsel %vm1277, %v1276, %v1262
        %v1294 = vrot.slane %v1283, 7
        %v1295 = vrot.slane %v1282, 6
        %v1296 = vrot.slane %v1281, 5
        %v1297 = vrot.slane %v1280, 4
        %v1298 = vrot.slane %v1279, 3
        %v1299 = vrot.slane %v1278, 2
        %v1300 = vrot.slane %v1285, 1
        %v1301 = vsel %vm478, %v1284, %v1294
        %v1302 = vsel %vm480, %v1295, %v1296
        %v1303 = vsel %vm482, %v1301, %v1302
        %v1304 = vsel %vm484, %v1297, %v1298
        %v1305 = vsel %vm486, %v1299, %v1300
        %v1306 = vsel %vm488, %v1304, %v1305
        %v1307 = vsel %vm490, %v1303, %v1306
        %s1309 = scalar_lea.vmem [#allocation2], 129
        %1310 = vst [vmem:[%s1309] ss:$8 sm:$0xf] %v1307
        %1311 = vst [vmem:[%s1309] ss:$8 sm:$0xf0] %v1307
        %1312 = vrot.lane.b32.xlu0 %v420, 29
        %v1313 = vpop.permute.xlu0 %1312
        %1314 = vrot.lane.b32.xlu0 %v421, 29
        %v1315 = vpop.permute.xlu0 %1314
        %1316 = vrot.lane.b32.xlu0 %v422, 29
        %v1317 = vpop.permute.xlu0 %1316
        %1318 = vrot.lane.b32.xlu0 %v423, 29
        %v1319 = vpop.permute.xlu0 %1318
        %1320 = vrot.lane.b32.xlu0 %v424, 29
        %v1321 = vpop.permute.xlu0 %1320
        %1322 = vrot.lane.b32.xlu0 %v425, 29
        %v1323 = vpop.permute.xlu0 %1322
        %1324 = vrot.lane.b32.xlu0 %v426, 29
        %v1325 = vpop.permute.xlu0 %1324
        %1326 = vrot.lane.b32.xlu0 %v427, 29
        %v1327 = vpop.permute.xlu0 %1326
        %vm1328 = vcmp.lt.s32.totalorder %v453, 29
        %v1329 = vsel %vm1328, %v1325, %v1327
        %v1330 = vsel %vm1328, %v1323, %v1325
        %v1331 = vsel %vm1328, %v1321, %v1323
        %v1332 = vsel %vm1328, %v1319, %v1321
        %v1333 = vsel %vm1328, %v1317, %v1319
        %v1334 = vsel %vm1328, %v1315, %v1317
        %v1335 = vsel %vm1328, %v1313, %v1315
        %v1336 = vsel %vm1328, %v1327, %v1313
        %v1345 = vrot.slane %v1334, 7
        %v1346 = vrot.slane %v1333, 6
        %v1347 = vrot.slane %v1332, 5
        %v1348 = vrot.slane %v1331, 4
        %v1349 = vrot.slane %v1330, 3
        %v1350 = vrot.slane %v1329, 2
        %v1351 = vrot.slane %v1336, 1
        %v1352 = vsel %vm478, %v1335, %v1345
        %v1353 = vsel %vm480, %v1346, %v1347
        %v1354 = vsel %vm482, %v1352, %v1353
        %v1355 = vsel %vm484, %v1348, %v1349
        %v1356 = vsel %vm486, %v1350, %v1351
        %v1357 = vsel %vm488, %v1355, %v1356
        %v1358 = vsel %vm490, %v1354, %v1357
        %s1360 = scalar_lea.vmem [#allocation2], 130
        %1361 = vst [vmem:[%s1360] ss:$8 sm:$0xf] %v1358
        %1362 = vst [vmem:[%s1360] ss:$8 sm:$0xf0] %v1358
        %1363 = vrot.lane.b32.xlu0 %v420, 28
        %v1364 = vpop.permute.xlu0 %1363
        %1365 = vrot.lane.b32.xlu0 %v421, 28
        %v1366 = vpop.permute.xlu0 %1365
        %1367 = vrot.lane.b32.xlu0 %v422, 28
        %v1368 = vpop.permute.xlu0 %1367
        %1369 = vrot.lane.b32.xlu0 %v423, 28
        %v1370 = vpop.permute.xlu0 %1369
        %1371 = vrot.lane.b32.xlu0 %v424, 28
        %v1372 = vpop.permute.xlu0 %1371
        %1373 = vrot.lane.b32.xlu0 %v425, 28
        %v1374 = vpop.permute.xlu0 %1373
        %1375 = vrot.lane.b32.xlu0 %v426, 28
        %v1376 = vpop.permute.xlu0 %1375
        %1377 = vrot.lane.b32.xlu0 %v427, 28
        %v1378 = vpop.permute.xlu0 %1377
        %vm1379 = vcmp.lt.s32.totalorder %v453, 28
        %v1380 = vsel %vm1379, %v1376, %v1378
        %v1381 = vsel %vm1379, %v1374, %v1376
        %v1382 = vsel %vm1379, %v1372, %v1374
        %v1383 = vsel %vm1379, %v1370, %v1372
        %v1384 = vsel %vm1379, %v1368, %v1370
        %v1385 = vsel %vm1379, %v1366, %v1368
        %v1386 = vsel %vm1379, %v1364, %v1366
        %v1387 = vsel %vm1379, %v1378, %v1364
        %v1396 = vrot.slane %v1385, 7
        %v1397 = vrot.slane %v1384, 6
        %v1398 = vrot.slane %v1383, 5
        %v1399 = vrot.slane %v1382, 4
        %v1400 = vrot.slane %v1381, 3
        %v1401 = vrot.slane %v1380, 2
        %v1402 = vrot.slane %v1387, 1
        %v1403 = vsel %vm478, %v1386, %v1396
        %v1404 = vsel %vm480, %v1397, %v1398
        %v1405 = vsel %vm482, %v1403, %v1404
        %v1406 = vsel %vm484, %v1399, %v1400
        %v1407 = vsel %vm486, %v1401, %v1402
        %v1408 = vsel %vm488, %v1406, %v1407
        %v1409 = vsel %vm490, %v1405, %v1408
        %s1411 = scalar_lea.vmem [#allocation2], 131
        %1412 = vst [vmem:[%s1411] ss:$8 sm:$0xf] %v1409
        %1413 = vst [vmem:[%s1411] ss:$8 sm:$0xf0] %v1409
        %v1414 = vrot.slane %v422, 7
        %v1415 = vrot.slane %v423, 6
        %v1416 = vrot.slane %v424, 5
        %v1417 = vrot.slane %v425, 4
        %v1418 = vrot.slane %v426, 3
        %v1419 = vrot.slane %v427, 2
        %v1420 = vrot.slane %v420, 1
        %v1421 = vsel %vm478, %v421, %v1414
        %v1422 = vsel %vm480, %v1415, %v1416
        %v1423 = vsel %vm482, %v1421, %v1422
        %v1424 = vsel %vm484, %v1417, %v1418
        %v1425 = vsel %vm486, %v1419, %v1420
        %v1426 = vsel %vm488, %v1424, %v1425
        %v1427 = vsel %vm490, %v1423, %v1426
        %s1429 = scalar_lea.vmem [#allocation2], 132
        %1430 = vst [vmem:[%s1429] ss:$8 sm:$0xf] %v1427
        %1431 = vst [vmem:[%s1429] ss:$8 sm:$0xf0] %v1427
        %v1432 = vrot.slane %v459, 7
        %v1433 = vrot.slane %v458, 6
        %v1434 = vrot.slane %v457, 5
        %v1435 = vrot.slane %v456, 4
        %v1436 = vrot.slane %v455, 3
        %v1437 = vrot.slane %v462, 2
        %v1438 = vrot.slane %v461, 1
        %v1439 = vsel %vm478, %v460, %v1432
        %v1440 = vsel %vm480, %v1433, %v1434
        %v1441 = vsel %vm482, %v1439, %v1440
        %v1442 = vsel %vm484, %v1435, %v1436
        %v1443 = vsel %vm486, %v1437, %v1438
        %v1444 = vsel %vm488, %v1442, %v1443
        %v1445 = vsel %vm490, %v1441, %v1444
        %s1447 = scalar_lea.vmem [#allocation2], 133
        %1448 = vst [vmem:[%s1447] ss:$8 sm:$0xf] %v1445
        %1449 = vst [vmem:[%s1447] ss:$8 sm:$0xf0] %v1445
        %v1450 = vrot.slane %v517, 7
        %v1451 = vrot.slane %v516, 6
        %v1452 = vrot.slane %v515, 5
        %v1453 = vrot.slane %v514, 4
        %v1454 = vrot.slane %v513, 3
        %v1455 = vrot.slane %v520, 2
        %v1456 = vrot.slane %v519, 1
        %v1457 = vsel %vm478, %v518, %v1450
        %v1458 = vsel %vm480, %v1451, %v1452
        %v1459 = vsel %vm482, %v1457, %v1458
        %v1460 = vsel %vm484, %v1453, %v1454
        %v1461 = vsel %vm486, %v1455, %v1456
        %v1462 = vsel %vm488, %v1460, %v1461
        %v1463 = vsel %vm490, %v1459, %v1462
        %s1465 = scalar_lea.vmem [#allocation2], 134
        %1466 = vst [vmem:[%s1465] ss:$8 sm:$0xf] %v1463
        %1467 = vst [vmem:[%s1465] ss:$8 sm:$0xf0] %v1463
        %v1468 = vrot.slane %v568, 7
        %v1469 = vrot.slane %v567, 6
        %v1470 = vrot.slane %v566, 5
        %v1471 = vrot.slane %v565, 4
        %v1472 = vrot.slane %v564, 3
        %v1473 = vrot.slane %v571, 2
        %v1474 = vrot.slane %v570, 1
        %v1475 = vsel %vm478, %v569, %v1468
        %v1476 = vsel %vm480, %v1469, %v1470
        %v1477 = vsel %vm482, %v1475, %v1476
        %v1478 = vsel %vm484, %v1471, %v1472
        %v1479 = vsel %vm486, %v1473, %v1474
        %v1480 = vsel %vm488, %v1478, %v1479
        %v1481 = vsel %vm490, %v1477, %v1480
        %s1483 = scalar_lea.vmem [#allocation2], 135
        %1484 = vst [vmem:[%s1483] ss:$8 sm:$0xf] %v1481
        %1485 = vst [vmem:[%s1483] ss:$8 sm:$0xf0] %v1481
        %v1486 = vrot.slane %v619, 7
        %v1487 = vrot.slane %v618, 6
        %v1488 = vrot.slane %v617, 5
        %v1489 = vrot.slane %v616, 4
        %v1490 = vrot.slane %v615, 3
        %v1491 = vrot.slane %v622, 2
        %v1492 = vrot.slane %v621, 1
        %v1493 = vsel %vm478, %v620, %v1486
        %v1494 = vsel %vm480, %v1487, %v1488
        %v1495 = vsel %vm482, %v1493, %v1494
        %v1496 = vsel %vm484, %v1489, %v1490
        %v1497 = vsel %vm486, %v1491, %v1492
        %v1498 = vsel %vm488, %v1496, %v1497
        %v1499 = vsel %vm490, %v1495, %v1498
        %s1501 = scalar_lea.vmem [#allocation2], 192
        %1502 = vst [vmem:[%s1501] ss:$8 sm:$0xf] %v1499
        %1503 = vst [vmem:[%s1501] ss:$8 sm:$0xf0] %v1499
        %v1504 = vld [vmem:[%s1] sm:$0xff]
        %v1505 = vld [vmem:[#allocation2] sm:$0xff]
        %v1506 = vld [vmem:[#allocation2 + $0x8] sm:$0xff]
        %v1507 = vld [vmem:[#allocation2 + $0x10] sm:$0xff]
        %v1508 = vld [vmem:[#allocation2 + $0x18] sm:$0xff]
        %v1509 = vld [vmem:[#allocation2 + $0x20] sm:$0xff]
        %v1510 = vld [vmem:[#allocation2 + $0x28] sm:$0xff]
        %v1511 = vld [vmem:[#allocation2 + $0x30] sm:$0xff]
        %v1512 = vld [vmem:[#allocation2 + $0x38] sm:$0xff]
        %v1513 = vld [vmem:[#allocation2 + $0x40] sm:$0xff]
        %v1514 = vld [vmem:[#allocation2 + $0x48] sm:$0xff]
        %v1515 = vld [vmem:[#allocation2 + $0x50] sm:$0xff]
        %v1516 = vld [vmem:[#allocation2 + $0x58] sm:$0xff]
        %v1517 = vld [vmem:[#allocation2 + $0x60] sm:$0xff]
        %v1518 = vld [vmem:[#allocation2 + $0x68] sm:$0xff]
        %v1519 = vld [vmem:[#allocation2 + $0x70] sm:$0xff]
        %v1520 = vld [vmem:[#allocation2 + $0x78] sm:$0xff]
        %v1521 = vld [vmem:[#allocation2 + $0x80] sm:$0xff]
        %v1522 = vld [vmem:[#allocation2 + $0x88] sm:$0xff]
        %v1523 = vld [vmem:[#allocation2 + $0x90] sm:$0xff]
        %v1524 = vld [vmem:[#allocation2 + $0x98] sm:$0xff]
        %v1525 = vld [vmem:[#allocation2 + $0xa0] sm:$0xff]
        %v1526 = vld [vmem:[#allocation2 + $0xa8] sm:$0xff]
        %v1527 = vld [vmem:[#allocation2 + $0xb0] sm:$0xff]
        %v1528 = vld [vmem:[#allocation2 + $0xb8] sm:$0xff]
        %v1529 = vld [vmem:[#allocation2 + $0xc0] sm:$0xff]
        %v1530 = vld [vmem:[#allocation2 + $0xc8] sm:$0xff]
        %v1531 = vld [vmem:[#allocation2 + $0xd0] sm:$0xff]
        %v1532 = vld [vmem:[#allocation2 + $0xd8] sm:$0xff]
        %v1533 = vld [vmem:[#allocation2 + $0xe0] sm:$0xff]
        %v1534 = vld [vmem:[#allocation2 + $0xe8] sm:$0xff]
        %v1535 = vld [vmem:[#allocation2 + $0xf0] sm:$0xff]
        %v1536 = vld [vmem:[#allocation2 + $0xf8] sm:$0xff]
        %v1537 = vld [vmem:[%s2] sm:$0xff]
        %1539 = vset.pattern.permute.xlu0 0
        %1540 = vperm.xlu0 %1539, %v1537
        %v1541 = vpop.permute.xlu0 %1540
        %vm1543 = vcmask 261120
        %v1545 = vsel %vm1543, %v1504, 0
        %1547 = vmatpush.msra.mxu0 0.0
        %1548 = vmatpush.msra.mxu0 0.0
        %1549 = vmatpush.msra.mxu0 0.0
        %1550 = vmatpush.msra.mxu0 0.0
        %1551 = vmatpush.msra.mxu0 0.0
        %1552 = vmatpush.msra.mxu0 0.0
        %1553 = vmatpush.msra.mxu0 0.0
        %1554 = vmatpush.msra.mxu0 0.0
        %1555 = vmatpush.msra.mxu0 0.0
        %1556 = vmatpush.msra.mxu0 0.0
        %1557 = vmatpush.msra.mxu0 0.0
        %1558 = vmatpush.msra.mxu0 0.0
        %1559 = vmatpush.msra.mxu0 %v1529
        %1560 = vmatpush.msra.mxu0 %v1521
        %1561 = vmatpush.msra.mxu0 %v1513
        %1562 = vmatpush.msra.mxu0 %v1505
        %1563 = vmatmul.f32.gmra.mxu0 %v1545
        %v1564 = vpop.f32.mrf.mxu0
        %v1565 = vadd.f32 %v1541, %v1564
        %1566 = vdwg.mxu0
        %1567 = vmatpush.msra.mxu0 0.0
        %1568 = vmatpush.msra.mxu0 0.0
        %1569 = vmatpush.msra.mxu0 0.0
        %1570 = vmatpush.msra.mxu0 0.0
        %1571 = vmatpush.msra.mxu0 0.0
        %1572 = vmatpush.msra.mxu0 0.0
        %1573 = vmatpush.msra.mxu0 0.0
        %1574 = vmatpush.msra.mxu0 0.0
        %1575 = vmatpush.msra.mxu0 0.0
        %1576 = vmatpush.msra.mxu0 0.0
        %1577 = vmatpush.msra.mxu0 0.0
        %1578 = vmatpush.msra.mxu0 0.0
        %1579 = vmatpush.msra.mxu0 %v1530
        %1580 = vmatpush.msra.mxu0 %v1522
        %1581 = vmatpush.msra.mxu0 %v1514
        %1582 = vmatpush.msra.mxu0 %v1506
        %1583 = vmatmul.f32.gmra.mxu0 %v1545
        %v1584 = vpop.f32.mrf.mxu0
        %v1585 = vadd.f32 %v1541, %v1584
        %1586 = vdwg.mxu0
        %1587 = vmatpush.msra.mxu0 0.0
        %1588 = vmatpush.msra.mxu0 0.0
        %1589 = vmatpush.msra.mxu0 0.0
        %1590 = vmatpush.msra.mxu0 0.0
        %1591 = vmatpush.msra.mxu0 0.0
        %1592 = vmatpush.msra.mxu0 0.0
        %1593 = vmatpush.msra.mxu0 0.0
        %1594 = vmatpush.msra.mxu0 0.0
        %1595 = vmatpush.msra.mxu0 0.0
        %1596 = vmatpush.msra.mxu0 0.0
        %1597 = vmatpush.msra.mxu0 0.0
        %1598 = vmatpush.msra.mxu0 0.0
        %1599 = vmatpush.msra.mxu0 %v1531
        %1600 = vmatpush.msra.mxu0 %v1523
        %1601 = vmatpush.msra.mxu0 %v1515
        %1602 = vmatpush.msra.mxu0 %v1507
        %1603 = vmatmul.f32.gmra.mxu0 %v1545
        %v1604 = vpop.f32.mrf.mxu0
        %v1605 = vadd.f32 %v1541, %v1604
        %1606 = vdwg.mxu0
        %1607 = vmatpush.msra.mxu0 0.0
        %1608 = vmatpush.msra.mxu0 0.0
        %1609 = vmatpush.msra.mxu0 0.0
        %1610 = vmatpush.msra.mxu0 0.0
        %1611 = vmatpush.msra.mxu0 0.0
        %1612 = vmatpush.msra.mxu0 0.0
        %1613 = vmatpush.msra.mxu0 0.0
        %1614 = vmatpush.msra.mxu0 0.0
        %1615 = vmatpush.msra.mxu0 0.0
        %1616 = vmatpush.msra.mxu0 0.0
        %1617 = vmatpush.msra.mxu0 0.0
        %1618 = vmatpush.msra.mxu0 0.0
        %1619 = vmatpush.msra.mxu0 %v1532
        %1620 = vmatpush.msra.mxu0 %v1524
        %1621 = vmatpush.msra.mxu0 %v1516
        %1622 = vmatpush.msra.mxu0 %v1508
        %1623 = vmatmul.f32.gmra.mxu0 %v1545
        %v1624 = vpop.f32.mrf.mxu0
        %v1625 = vadd.f32 %v1541, %v1624
        %1626 = vdwg.mxu0
        %1627 = vmatpush.msra.mxu0 0.0
        %1628 = vmatpush.msra.mxu0 0.0
        %1629 = vmatpush.msra.mxu0 0.0
        %1630 = vmatpush.msra.mxu0 0.0
        %1631 = vmatpush.msra.mxu0 0.0
        %1632 = vmatpush.msra.mxu0 0.0
        %1633 = vmatpush.msra.mxu0 0.0
        %1634 = vmatpush.msra.mxu0 0.0
        %1635 = vmatpush.msra.mxu0 0.0
        %1636 = vmatpush.msra.mxu0 0.0
        %1637 = vmatpush.msra.mxu0 0.0
        %1638 = vmatpush.msra.mxu0 0.0
        %1639 = vmatpush.msra.mxu0 %v1533
        %1640 = vmatpush.msra.mxu0 %v1525
        %1641 = vmatpush.msra.mxu0 %v1517
        %1642 = vmatpush.msra.mxu0 %v1509
        %1643 = vmatmul.f32.gmra.mxu0 %v1545
        %v1644 = vpop.f32.mrf.mxu0
        %v1645 = vadd.f32 %v1541, %v1644
        %1646 = vdwg.mxu0
        %1647 = vmatpush.msra.mxu0 0.0
        %1648 = vmatpush.msra.mxu0 0.0
        %1649 = vmatpush.msra.mxu0 0.0
        %1650 = vmatpush.msra.mxu0 0.0
        %1651 = vmatpush.msra.mxu0 0.0
        %1652 = vmatpush.msra.mxu0 0.0
        %1653 = vmatpush.msra.mxu0 0.0
        %1654 = vmatpush.msra.mxu0 0.0
        %1655 = vmatpush.msra.mxu0 0.0
        %1656 = vmatpush.msra.mxu0 0.0
        %1657 = vmatpush.msra.mxu0 0.0
        %1658 = vmatpush.msra.mxu0 0.0
        %1659 = vmatpush.msra.mxu0 %v1534
        %1660 = vmatpush.msra.mxu0 %v1526
        %1661 = vmatpush.msra.mxu0 %v1518
        %1662 = vmatpush.msra.mxu0 %v1510
        %1663 = vmatmul.f32.gmra.mxu0 %v1545
        %v1664 = vpop.f32.mrf.mxu0
        %v1665 = vadd.f32 %v1541, %v1664
        %1666 = vdwg.mxu0
        %1667 = vmatpush.msra.mxu0 0.0
        %1668 = vmatpush.msra.mxu0 0.0
        %1669 = vmatpush.msra.mxu0 0.0
        %1670 = vmatpush.msra.mxu0 0.0
        %1671 = vmatpush.msra.mxu0 0.0
        %1672 = vmatpush.msra.mxu0 0.0
        %1673 = vmatpush.msra.mxu0 0.0
        %1674 = vmatpush.msra.mxu0 0.0
        %1675 = vmatpush.msra.mxu0 0.0
        %1676 = vmatpush.msra.mxu0 0.0
        %1677 = vmatpush.msra.mxu0 0.0
        %1678 = vmatpush.msra.mxu0 0.0
        %1679 = vmatpush.msra.mxu0 %v1535
        %1680 = vmatpush.msra.mxu0 %v1527
        %1681 = vmatpush.msra.mxu0 %v1519
        %1682 = vmatpush.msra.mxu0 %v1511
        %1683 = vmatmul.f32.gmra.mxu0 %v1545
        %v1684 = vpop.f32.mrf.mxu0
        %v1685 = vadd.f32 %v1541, %v1684
        %1686 = vdwg.mxu0
        %1687 = vmatpush.msra.mxu0 0.0
        %1688 = vmatpush.msra.mxu0 0.0
        %1689 = vmatpush.msra.mxu0 0.0
        %1690 = vmatpush.msra.mxu0 0.0
        %1691 = vmatpush.msra.mxu0 0.0
        %1692 = vmatpush.msra.mxu0 0.0
        %1693 = vmatpush.msra.mxu0 0.0
        %1694 = vmatpush.msra.mxu0 0.0
        %1695 = vmatpush.msra.mxu0 0.0
        %1696 = vmatpush.msra.mxu0 0.0
        %1697 = vmatpush.msra.mxu0 0.0
        %1698 = vmatpush.msra.mxu0 0.0
        %1699 = vmatpush.msra.mxu0 %v1536
        %1700 = vmatpush.msra.mxu0 %v1528
        %1701 = vmatpush.msra.mxu0 %v1520
        %1702 = vmatpush.msra.mxu0 %v1512
        %1703 = vmatmul.f32.gmra.mxu0 %v1545
        %v1704 = vpop.f32.mrf.mxu0
        %v1705 = vadd.f32 %v1541, %v1704
        %1706 = vdwg.mxu0
        %v1707 = vtanh.pop %v1565
        %v1708 = vtanh.pop %v1585
        %v1709 = vtanh.pop %v1605
        %v1710 = vtanh.pop %v1625
        %v1711 = vtanh.pop %v1645
        %v1712 = vtanh.pop %v1665
        %v1713 = vtanh.pop %v1685
        %v1714 = vtanh.pop %v1705
        %1715 = vrot.lane.b32.xlu0 %v1707, 127
        %v1716 = vpop.permute.xlu0 %1715
        %1717 = vrot.lane.b32.xlu0 %v1708, 127
        %v1718 = vpop.permute.xlu0 %1717
        %1719 = vrot.lane.b32.xlu0 %v1709, 127
        %v1720 = vpop.permute.xlu0 %1719
        %1721 = vrot.lane.b32.xlu0 %v1710, 127
        %v1722 = vpop.permute.xlu0 %1721
        %1723 = vrot.lane.b32.xlu0 %v1711, 127
        %v1724 = vpop.permute.xlu0 %1723
        %1725 = vrot.lane.b32.xlu0 %v1712, 127
        %v1726 = vpop.permute.xlu0 %1725
        %1727 = vrot.lane.b32.xlu0 %v1713, 127
        %v1728 = vpop.permute.xlu0 %1727
        %1729 = vrot.lane.b32.xlu0 %v1714, 127
        %v1730 = vpop.permute.xlu0 %1729
        %v1731 = vsel %vm454, %v1728, %v1730
        %v1732 = vsel %vm454, %v1726, %v1728
        %v1733 = vsel %vm454, %v1724, %v1726
        %v1734 = vsel %vm454, %v1722, %v1724
        %v1735 = vsel %vm454, %v1720, %v1722
        %v1736 = vsel %vm454, %v1718, %v1720
        %v1737 = vsel %vm454, %v1716, %v1718
        %v1738 = vsel %vm454, %v1730, %v1716
        %v1739 = vadd.f32 %v1707, %v1737
        %v1740 = vadd.f32 %v1708, %v1736
        %v1741 = vadd.f32 %v1709, %v1735
        %v1742 = vadd.f32 %v1710, %v1734
        %v1743 = vadd.f32 %v1711, %v1733
        %v1744 = vadd.f32 %v1712, %v1732
        %v1745 = vadd.f32 %v1713, %v1731
        %v1746 = vadd.f32 %v1714, %v1738
        %1747 = vrot.lane.b32.xlu0 %v1707, 96
        %v1748 = vpop.permute.xlu0 %1747
        %1749 = vrot.lane.b32.xlu0 %v1708, 96
        %v1750 = vpop.permute.xlu0 %1749
        %1751 = vrot.lane.b32.xlu0 %v1709, 96
        %v1752 = vpop.permute.xlu0 %1751
        %1753 = vrot.lane.b32.xlu0 %v1710, 96
        %v1754 = vpop.permute.xlu0 %1753
        %1755 = vrot.lane.b32.xlu0 %v1711, 96
        %v1756 = vpop.permute.xlu0 %1755
        %1757 = vrot.lane.b32.xlu0 %v1712, 96
        %v1758 = vpop.permute.xlu0 %1757
        %1759 = vrot.lane.b32.xlu0 %v1713, 96
        %v1760 = vpop.permute.xlu0 %1759
        %1761 = vrot.lane.b32.xlu0 %v1714, 96
        %v1762 = vpop.permute.xlu0 %1761
        %v1763 = vsel %vm665, %v1760, %v1762
        %v1764 = vsel %vm665, %v1758, %v1760
        %v1765 = vsel %vm665, %v1756, %v1758
        %v1766 = vsel %vm665, %v1754, %v1756
        %v1767 = vsel %vm665, %v1752, %v1754
        %v1768 = vsel %vm665, %v1750, %v1752
        %v1769 = vsel %vm665, %v1748, %v1750
        %v1770 = vsel %vm665, %v1762, %v1748
        %v1771 = vadd.f32 %v1739, %v1769
        %v1772 = vadd.f32 %v1740, %v1768
        %v1773 = vadd.f32 %v1741, %v1767
        %v1774 = vadd.f32 %v1742, %v1766
        %v1775 = vadd.f32 %v1743, %v1765
        %v1776 = vadd.f32 %v1744, %v1764
        %v1777 = vadd.f32 %v1745, %v1763
        %v1778 = vadd.f32 %v1746, %v1770
        %1779 = vrot.lane.b32.xlu0 %v1707, 95
        %v1780 = vpop.permute.xlu0 %1779
        %1781 = vrot.lane.b32.xlu0 %v1708, 95
        %v1782 = vpop.permute.xlu0 %1781
        %1783 = vrot.lane.b32.xlu0 %v1709, 95
        %v1784 = vpop.permute.xlu0 %1783
        %1785 = vrot.lane.b32.xlu0 %v1710, 95
        %v1786 = vpop.permute.xlu0 %1785
        %1787 = vrot.lane.b32.xlu0 %v1711, 95
        %v1788 = vpop.permute.xlu0 %1787
        %1789 = vrot.lane.b32.xlu0 %v1712, 95
        %v1790 = vpop.permute.xlu0 %1789
        %1791 = vrot.lane.b32.xlu0 %v1713, 95
        %v1792 = vpop.permute.xlu0 %1791
        %1793 = vrot.lane.b32.xlu0 %v1714, 95
        %v1794 = vpop.permute.xlu0 %1793
        %v1795 = vsel %vm716, %v1792, %v1794
        %v1796 = vsel %vm716, %v1790, %v1792
        %v1797 = vsel %vm716, %v1788, %v1790
        %v1798 = vsel %vm716, %v1786, %v1788
        %v1799 = vsel %vm716, %v1784, %v1786
        %v1800 = vsel %vm716, %v1782, %v1784
        %v1801 = vsel %vm716, %v1780, %v1782
        %v1802 = vsel %vm716, %v1794, %v1780
        %v1803 = vadd.f32 %v1771, %v1801
        %v1804 = vadd.f32 %v1772, %v1800
        %v1805 = vadd.f32 %v1773, %v1799
        %v1806 = vadd.f32 %v1774, %v1798
        %v1807 = vadd.f32 %v1775, %v1797
        %v1808 = vadd.f32 %v1776, %v1796
        %v1809 = vadd.f32 %v1777, %v1795
        %v1810 = vadd.f32 %v1778, %v1802
        %v1811 = vmul.f32 %v1803, 0.25
        %v1812 = vmul.f32 %v1804, 0.25
        %v1813 = vmul.f32 %v1805, 0.25
        %v1814 = vmul.f32 %v1806, 0.25
        %v1815 = vmul.f32 %v1807, 0.25
        %v1816 = vmul.f32 %v1808, 0.25
        %v1817 = vmul.f32 %v1809, 0.25
        %v1818 = vmul.f32 %v1810, 0.25
        %1819 = vst [vmem:[#allocation3] sm:$0xff] %v1811
        %1820 = vst [vmem:[#allocation3 + $0x8] sm:$0xff] %v1812
        %1821 = vst [vmem:[#allocation3 + $0x10] sm:$0xff] %v1813
        %1822 = vst [vmem:[#allocation3 + $0x18] sm:$0xff] %v1814
        %1823 = vst [vmem:[#allocation3 + $0x20] sm:$0xff] %v1815
        %1824 = vst [vmem:[#allocation3 + $0x28] sm:$0xff] %v1816
        %1825 = vst [vmem:[#allocation3 + $0x30] sm:$0xff] %v1817
        %1826 = vst [vmem:[#allocation3 + $0x38] sm:$0xff] %v1818
        %1827 = vrot.lane.b32.xlu0 %v1811, 126
        %v1828 = vpop.permute.xlu0 %1827
        %1829 = vrot.lane.b32.xlu0 %v1812, 126
        %v1830 = vpop.permute.xlu0 %1829
        %1831 = vrot.lane.b32.xlu0 %v1813, 126
        %v1832 = vpop.permute.xlu0 %1831
        %1833 = vrot.lane.b32.xlu0 %v1814, 126
        %v1834 = vpop.permute.xlu0 %1833
        %1835 = vrot.lane.b32.xlu0 %v1815, 126
        %v1836 = vpop.permute.xlu0 %1835
        %1837 = vrot.lane.b32.xlu0 %v1816, 126
        %v1838 = vpop.permute.xlu0 %1837
        %1839 = vrot.lane.b32.xlu0 %v1817, 126
        %v1840 = vpop.permute.xlu0 %1839
        %1841 = vrot.lane.b32.xlu0 %v1818, 126
        %v1842 = vpop.permute.xlu0 %1841
        %v1843 = vsel %vm512, %v1840, %v1842
        %v1844 = vsel %vm512, %v1838, %v1840
        %v1845 = vsel %vm512, %v1836, %v1838
        %v1846 = vsel %vm512, %v1834, %v1836
        %v1847 = vsel %vm512, %v1832, %v1834
        %v1848 = vsel %vm512, %v1830, %v1832
        %v1849 = vsel %vm512, %v1828, %v1830
        %v1850 = vsel %vm512, %v1842, %v1828
        %1851 = vst [vmem:[#allocation3 + $0x40] sm:$0xff] %v1849
        %1852 = vst [vmem:[#allocation3 + $0x48] sm:$0xff] %v1848
        %1853 = vst [vmem:[#allocation3 + $0x50] sm:$0xff] %v1847
        %1854 = vst [vmem:[#allocation3 + $0x58] sm:$0xff] %v1846
        %1855 = vst [vmem:[#allocation3 + $0x60] sm:$0xff] %v1845
        %1856 = vst [vmem:[#allocation3 + $0x68] sm:$0xff] %v1844
        %1857 = vst [vmem:[#allocation3 + $0x70] sm:$0xff] %v1843
        %1858 = vst [vmem:[#allocation3 + $0x78] sm:$0xff] %v1850
        %1859 = vrot.lane.b32.xlu0 %v1811, 124
        %v1860 = vpop.permute.xlu0 %1859
        %1861 = vrot.lane.b32.xlu0 %v1812, 124
        %v1862 = vpop.permute.xlu0 %1861
        %1863 = vrot.lane.b32.xlu0 %v1813, 124
        %v1864 = vpop.permute.xlu0 %1863
        %1865 = vrot.lane.b32.xlu0 %v1814, 124
        %v1866 = vpop.permute.xlu0 %1865
        %1867 = vrot.lane.b32.xlu0 %v1815, 124
        %v1868 = vpop.permute.xlu0 %1867
        %1869 = vrot.lane.b32.xlu0 %v1816, 124
        %v1870 = vpop.permute.xlu0 %1869
        %1871 = vrot.lane.b32.xlu0 %v1817, 124
        %v1872 = vpop.permute.xlu0 %1871
        %1873 = vrot.lane.b32.xlu0 %v1818, 124
        %v1874 = vpop.permute.xlu0 %1873
        %v1875 = vsel %vm614, %v1872, %v1874
        %v1876 = vsel %vm614, %v1870, %v1872
        %v1877 = vsel %vm614, %v1868, %v1870
        %v1878 = vsel %vm614, %v1866, %v1868
        %v1879 = vsel %vm614, %v1864, %v1866
        %v1880 = vsel %vm614, %v1862, %v1864
        %v1881 = vsel %vm614, %v1860, %v1862
        %v1882 = vsel %vm614, %v1874, %v1860
        %1883 = vst [vmem:[#allocation3 + $0x80] sm:$0xff] %v1881
        %1884 = vst [vmem:[#allocation3 + $0x88] sm:$0xff] %v1880
        %1885 = vst [vmem:[#allocation3 + $0x90] sm:$0xff] %v1879
        %1886 = vst [vmem:[#allocation3 + $0x98] sm:$0xff] %v1878
        %1887 = vst [vmem:[#allocation3 + $0xa0] sm:$0xff] %v1877
        %1888 = vst [vmem:[#allocation3 + $0xa8] sm:$0xff] %v1876
        %1889 = vst [vmem:[#allocation3 + $0xb0] sm:$0xff] %v1875
        %1890 = vst [vmem:[#allocation3 + $0xb8] sm:$0xff] %v1882
        %1891 = vrot.lane.b32.xlu0 %v1811, 122
        %v1892 = vpop.permute.xlu0 %1891
        %1893 = vrot.lane.b32.xlu0 %v1812, 122
        %v1894 = vpop.permute.xlu0 %1893
        %1895 = vrot.lane.b32.xlu0 %v1813, 122
        %v1896 = vpop.permute.xlu0 %1895
        %1897 = vrot.lane.b32.xlu0 %v1814, 122
        %v1898 = vpop.permute.xlu0 %1897
        %1899 = vrot.lane.b32.xlu0 %v1815, 122
        %v1900 = vpop.permute.xlu0 %1899
        %1901 = vrot.lane.b32.xlu0 %v1816, 122
        %v1902 = vpop.permute.xlu0 %1901
        %1903 = vrot.lane.b32.xlu0 %v1817, 122
        %v1904 = vpop.permute.xlu0 %1903
        %1905 = vrot.lane.b32.xlu0 %v1818, 122
        %v1906 = vpop.permute.xlu0 %1905
        %vm1907 = vcmp.lt.s32.totalorder %v453, 122
        %v1908 = vsel %vm1907, %v1904, %v1906
        %v1909 = vsel %vm1907, %v1902, %v1904
        %v1910 = vsel %vm1907, %v1900, %v1902
        %v1911 = vsel %vm1907, %v1898, %v1900
        %v1912 = vsel %vm1907, %v1896, %v1898
        %v1913 = vsel %vm1907, %v1894, %v1896
        %v1914 = vsel %vm1907, %v1892, %v1894
        %v1915 = vsel %vm1907, %v1906, %v1892
        %1916 = vst [vmem:[#allocation3 + $0xc0] sm:$0xff] %v1914
        %1917 = vst [vmem:[#allocation3 + $0xc8] sm:$0xff] %v1913
        %1918 = vst [vmem:[#allocation3 + $0xd0] sm:$0xff] %v1912
        %1919 = vst [vmem:[#allocation3 + $0xd8] sm:$0xff] %v1911
        %1920 = vst [vmem:[#allocation3 + $0xe0] sm:$0xff] %v1910
        %1921 = vst [vmem:[#allocation3 + $0xe8] sm:$0xff] %v1909
        %1922 = vst [vmem:[#allocation3 + $0xf0] sm:$0xff] %v1908
        %1923 = vst [vmem:[#allocation3 + $0xf8] sm:$0xff] %v1915
        %1924 = vrot.lane.b32.xlu0 %v1811, 120
        %v1925 = vpop.permute.xlu0 %1924
        %1926 = vrot.lane.b32.xlu0 %v1812, 120
        %v1927 = vpop.permute.xlu0 %1926
        %1928 = vrot.lane.b32.xlu0 %v1813, 120
        %v1929 = vpop.permute.xlu0 %1928
        %1930 = vrot.lane.b32.xlu0 %v1814, 120
        %v1931 = vpop.permute.xlu0 %1930
        %1932 = vrot.lane.b32.xlu0 %v1815, 120
        %v1933 = vpop.permute.xlu0 %1932
        %1934 = vrot.lane.b32.xlu0 %v1816, 120
        %v1935 = vpop.permute.xlu0 %1934
        %1936 = vrot.lane.b32.xlu0 %v1817, 120
        %v1937 = vpop.permute.xlu0 %1936
        %1938 = vrot.lane.b32.xlu0 %v1818, 120
        %v1939 = vpop.permute.xlu0 %1938
        %vm1940 = vcmp.lt.s32.totalorder %v453, 120
        %v1941 = vsel %vm1940, %v1937, %v1939
        %v1942 = vsel %vm1940, %v1935, %v1937
        %v1943 = vsel %vm1940, %v1933, %v1935
        %v1944 = vsel %vm1940, %v1931, %v1933
        %v1945 = vsel %vm1940, %v1929, %v1931
        %v1946 = vsel %vm1940, %v1927, %v1929
        %v1947 = vsel %vm1940, %v1925, %v1927
        %v1948 = vsel %vm1940, %v1939, %v1925
        %1949 = vst [vmem:[#allocation3 + $0x100] sm:$0xff] %v1947
        %1950 = vst [vmem:[#allocation3 + $0x108] sm:$0xff] %v1946
        %1951 = vst [vmem:[#allocation3 + $0x110] sm:$0xff] %v1945
        %1952 = vst [vmem:[#allocation3 + $0x118] sm:$0xff] %v1944
        %1953 = vst [vmem:[#allocation3 + $0x120] sm:$0xff] %v1943
        %1954 = vst [vmem:[#allocation3 + $0x128] sm:$0xff] %v1942
        %1955 = vst [vmem:[#allocation3 + $0x130] sm:$0xff] %v1941
        %1956 = vst [vmem:[#allocation3 + $0x138] sm:$0xff] %v1948
        %1957 = vrot.lane.b32.xlu0 %v1811, 64
        %v1958 = vpop.permute.xlu0 %1957
        %1959 = vrot.lane.b32.xlu0 %v1812, 64
        %v1960 = vpop.permute.xlu0 %1959
        %1961 = vrot.lane.b32.xlu0 %v1813, 64
        %v1962 = vpop.permute.xlu0 %1961
        %1963 = vrot.lane.b32.xlu0 %v1814, 64
        %v1964 = vpop.permute.xlu0 %1963
        %1965 = vrot.lane.b32.xlu0 %v1815, 64
        %v1966 = vpop.permute.xlu0 %1965
        %1967 = vrot.lane.b32.xlu0 %v1816, 64
        %v1968 = vpop.permute.xlu0 %1967
        %1969 = vrot.lane.b32.xlu0 %v1817, 64
        %v1970 = vpop.permute.xlu0 %1969
        %1971 = vrot.lane.b32.xlu0 %v1818, 64
        %v1972 = vpop.permute.xlu0 %1971
        %v1973 = vsel %vm920, %v1970, %v1972
        %v1974 = vsel %vm920, %v1968, %v1970
        %v1975 = vsel %vm920, %v1966, %v1968
        %v1976 = vsel %vm920, %v1964, %v1966
        %v1977 = vsel %vm920, %v1962, %v1964
        %v1978 = vsel %vm920, %v1960, %v1962
        %v1979 = vsel %vm920, %v1958, %v1960
        %v1980 = vsel %vm920, %v1972, %v1958
        %1981 = vst [vmem:[#allocation3 + $0x140] sm:$0xff] %v1979
        %1982 = vst [vmem:[#allocation3 + $0x148] sm:$0xff] %v1978
        %1983 = vst [vmem:[#allocation3 + $0x150] sm:$0xff] %v1977
        %1984 = vst [vmem:[#allocation3 + $0x158] sm:$0xff] %v1976
        %1985 = vst [vmem:[#allocation3 + $0x160] sm:$0xff] %v1975
        %1986 = vst [vmem:[#allocation3 + $0x168] sm:$0xff] %v1974
        %1987 = vst [vmem:[#allocation3 + $0x170] sm:$0xff] %v1973
        %1988 = vst [vmem:[#allocation3 + $0x178] sm:$0xff] %v1980
        %1989 = vrot.lane.b32.xlu0 %v1811, 62
        %v1990 = vpop.permute.xlu0 %1989
        %1991 = vrot.lane.b32.xlu0 %v1812, 62
        %v1992 = vpop.permute.xlu0 %1991
        %1993 = vrot.lane.b32.xlu0 %v1813, 62
        %v1994 = vpop.permute.xlu0 %1993
        %1995 = vrot.lane.b32.xlu0 %v1814, 62
        %v1996 = vpop.permute.xlu0 %1995
        %1997 = vrot.lane.b32.xlu0 %v1815, 62
        %v1998 = vpop.permute.xlu0 %1997
        %1999 = vrot.lane.b32.xlu0 %v1816, 62
        %v2000 = vpop.permute.xlu0 %1999
        %2001 = vrot.lane.b32.xlu0 %v1817, 62
        %v2002 = vpop.permute.xlu0 %2001
        %2003 = vrot.lane.b32.xlu0 %v1818, 62
        %v2004 = vpop.permute.xlu0 %2003
        %v2005 = vsel %vm1022, %v2002, %v2004
        %v2006 = vsel %vm1022, %v2000, %v2002
        %v2007 = vsel %vm1022, %v1998, %v2000
        %v2008 = vsel %vm1022, %v1996, %v1998
        %v2009 = vsel %vm1022, %v1994, %v1996
        %v2010 = vsel %vm1022, %v1992, %v1994
        %v2011 = vsel %vm1022, %v1990, %v1992
        %v2012 = vsel %vm1022, %v2004, %v1990
        %2013 = vst [vmem:[#allocation3 + $0x180] sm:$0xff] %v2011
        %2014 = vst [vmem:[#allocation3 + $0x188] sm:$0xff] %v2010
        %2015 = vst [vmem:[#allocation3 + $0x190] sm:$0xff] %v2009
        %2016 = vst [vmem:[#allocation3 + $0x198] sm:$0xff] %v2008
        %2017 = vst [vmem:[#allocation3 + $0x1a0] sm:$0xff] %v2007
        %2018 = vst [vmem:[#allocation3 + $0x1a8] sm:$0xff] %v2006
        %2019 = vst [vmem:[#allocation3 + $0x1b0] sm:$0xff] %v2005
        %2020 = vst [vmem:[#allocation3 + $0x1b8] sm:$0xff] %v2012
        %2021 = vrot.lane.b32.xlu0 %v1811, 60
        %v2022 = vpop.permute.xlu0 %2021
        %2023 = vrot.lane.b32.xlu0 %v1812, 60
        %v2024 = vpop.permute.xlu0 %2023
        %2025 = vrot.lane.b32.xlu0 %v1813, 60
        %v2026 = vpop.permute.xlu0 %2025
        %2027 = vrot.lane.b32.xlu0 %v1814, 60
        %v2028 = vpop.permute.xlu0 %2027
        %2029 = vrot.lane.b32.xlu0 %v1815, 60
        %v2030 = vpop.permute.xlu0 %2029
        %2031 = vrot.lane.b32.xlu0 %v1816, 60
        %v2032 = vpop.permute.xlu0 %2031
        %2033 = vrot.lane.b32.xlu0 %v1817, 60
        %v2034 = vpop.permute.xlu0 %2033
        %2035 = vrot.lane.b32.xlu0 %v1818, 60
        %v2036 = vpop.permute.xlu0 %2035
        %v2037 = vsel %vm1124, %v2034, %v2036
        %v2038 = vsel %vm1124, %v2032, %v2034
        %v2039 = vsel %vm1124, %v2030, %v2032
        %v2040 = vsel %vm1124, %v2028, %v2030
        %v2041 = vsel %vm1124, %v2026, %v2028
        %v2042 = vsel %vm1124, %v2024, %v2026
        %v2043 = vsel %vm1124, %v2022, %v2024
        %v2044 = vsel %vm1124, %v2036, %v2022
        %2045 = vst [vmem:[#allocation3 + $0x1c0] sm:$0xff] %v2043
        %2046 = vst [vmem:[#allocation3 + $0x1c8] sm:$0xff] %v2042
        %2047 = vst [vmem:[#allocation3 + $0x1d0] sm:$0xff] %v2041
        %2048 = vst [vmem:[#allocation3 + $0x1d8] sm:$0xff] %v2040
        %2049 = vst [vmem:[#allocation3 + $0x1e0] sm:$0xff] %v2039
        %2050 = vst [vmem:[#allocation3 + $0x1e8] sm:$0xff] %v2038
        %2051 = vst [vmem:[#allocation3 + $0x1f0] sm:$0xff] %v2037
        %2052 = vst [vmem:[#allocation3 + $0x1f8] sm:$0xff] %v2044
        %2053 = vrot.lane.b32.xlu0 %v1811, 58
        %v2054 = vpop.permute.xlu0 %2053
        %2055 = vrot.lane.b32.xlu0 %v1812, 58
        %v2056 = vpop.permute.xlu0 %2055
        %2057 = vrot.lane.b32.xlu0 %v1813, 58
        %v2058 = vpop.permute.xlu0 %2057
        %2059 = vrot.lane.b32.xlu0 %v1814, 58
        %v2060 = vpop.permute.xlu0 %2059
        %2061 = vrot.lane.b32.xlu0 %v1815, 58
        %v2062 = vpop.permute.xlu0 %2061
        %2063 = vrot.lane.b32.xlu0 %v1816, 58
        %v2064 = vpop.permute.xlu0 %2063
        %2065 = vrot.lane.b32.xlu0 %v1817, 58
        %v2066 = vpop.permute.xlu0 %2065
        %2067 = vrot.lane.b32.xlu0 %v1818, 58
        %v2068 = vpop.permute.xlu0 %2067
        %vm2069 = vcmp.lt.s32.totalorder %v453, 58
        %v2070 = vsel %vm2069, %v2066, %v2068
        %v2071 = vsel %vm2069, %v2064, %v2066
        %v2072 = vsel %vm2069, %v2062, %v2064
        %v2073 = vsel %vm2069, %v2060, %v2062
        %v2074 = vsel %vm2069, %v2058, %v2060
        %v2075 = vsel %vm2069, %v2056, %v2058
        %v2076 = vsel %vm2069, %v2054, %v2056
        %v2077 = vsel %vm2069, %v2068, %v2054
        %2078 = vst [vmem:[#allocation3 + $0x200] sm:$0xff] %v2076
        %2079 = vst [vmem:[#allocation3 + $0x208] sm:$0xff] %v2075
        %2080 = vst [vmem:[#allocation3 + $0x210] sm:$0xff] %v2074
        %2081 = vst [vmem:[#allocation3 + $0x218] sm:$0xff] %v2073
        %2082 = vst [vmem:[#allocation3 + $0x220] sm:$0xff] %v2072
        %2083 = vst [vmem:[#allocation3 + $0x228] sm:$0xff] %v2071
        %2084 = vst [vmem:[#allocation3 + $0x230] sm:$0xff] %v2070
        %2085 = vst [vmem:[#allocation3 + $0x238] sm:$0xff] %v2077
        %2086 = vrot.lane.b32.xlu0 %v1811, 56
        %v2087 = vpop.permute.xlu0 %2086
        %2088 = vrot.lane.b32.xlu0 %v1812, 56
        %v2089 = vpop.permute.xlu0 %2088
        %2090 = vrot.lane.b32.xlu0 %v1813, 56
        %v2091 = vpop.permute.xlu0 %2090
        %2092 = vrot.lane.b32.xlu0 %v1814, 56
        %v2093 = vpop.permute.xlu0 %2092
        %2094 = vrot.lane.b32.xlu0 %v1815, 56
        %v2095 = vpop.permute.xlu0 %2094
        %2096 = vrot.lane.b32.xlu0 %v1816, 56
        %v2097 = vpop.permute.xlu0 %2096
        %2098 = vrot.lane.b32.xlu0 %v1817, 56
        %v2099 = vpop.permute.xlu0 %2098
        %2100 = vrot.lane.b32.xlu0 %v1818, 56
        %v2101 = vpop.permute.xlu0 %2100
        %vm2102 = vcmp.lt.s32.totalorder %v453, 56
        %v2103 = vsel %vm2102, %v2099, %v2101
        %v2104 = vsel %vm2102, %v2097, %v2099
        %v2105 = vsel %vm2102, %v2095, %v2097
        %v2106 = vsel %vm2102, %v2093, %v2095
        %v2107 = vsel %vm2102, %v2091, %v2093
        %v2108 = vsel %vm2102, %v2089, %v2091
        %v2109 = vsel %vm2102, %v2087, %v2089
        %v2110 = vsel %vm2102, %v2101, %v2087
        %2111 = vst [vmem:[#allocation3 + $0x240] sm:$0xff] %v2109
        %2112 = vst [vmem:[#allocation3 + $0x248] sm:$0xff] %v2108
        %2113 = vst [vmem:[#allocation3 + $0x250] sm:$0xff] %v2107
        %2114 = vst [vmem:[#allocation3 + $0x258] sm:$0xff] %v2106
        %2115 = vst [vmem:[#allocation3 + $0x260] sm:$0xff] %v2105
        %2116 = vst [vmem:[#allocation3 + $0x268] sm:$0xff] %v2104
        %2117 = vst [vmem:[#allocation3 + $0x270] sm:$0xff] %v2103
        %2118 = vst [vmem:[#allocation3 + $0x278] sm:$0xff] %v2110
        %2119 = vst [vmem:[#allocation3 + $0x280] sm:$0xff] %v1812
        %2120 = vst [vmem:[#allocation3 + $0x288] sm:$0xff] %v1813
        %2121 = vst [vmem:[#allocation3 + $0x290] sm:$0xff] %v1814
        %2122 = vst [vmem:[#allocation3 + $0x298] sm:$0xff] %v1815
        %2123 = vst [vmem:[#allocation3 + $0x2a0] sm:$0xff] %v1816
        %2124 = vst [vmem:[#allocation3 + $0x2a8] sm:$0xff] %v1817
        %2125 = vst [vmem:[#allocation3 + $0x2b0] sm:$0xff] %v1818
        %2126 = vst [vmem:[#allocation3 + $0x2b8] sm:$0xff] %v1811
        %2127 = vst [vmem:[#allocation3 + $0x2c0] sm:$0xff] %v1848
        %2128 = vst [vmem:[#allocation3 + $0x2c8] sm:$0xff] %v1847
        %2129 = vst [vmem:[#allocation3 + $0x2d0] sm:$0xff] %v1846
        %2130 = vst [vmem:[#allocation3 + $0x2d8] sm:$0xff] %v1845
        %2131 = vst [vmem:[#allocation3 + $0x2e0] sm:$0xff] %v1844
        %2132 = vst [vmem:[#allocation3 + $0x2e8] sm:$0xff] %v1843
        %2133 = vst [vmem:[#allocation3 + $0x2f0] sm:$0xff] %v1850
        %2134 = vst [vmem:[#allocation3 + $0x2f8] sm:$0xff] %v1849
        %2135 = vst [vmem:[#allocation3 + $0x300] sm:$0xff] %v1880
        %2136 = vst [vmem:[#allocation3 + $0x308] sm:$0xff] %v1879
        %2137 = vst [vmem:[#allocation3 + $0x310] sm:$0xff] %v1878
        %2138 = vst [vmem:[#allocation3 + $0x318] sm:$0xff] %v1877
        %2139 = vst [vmem:[#allocation3 + $0x320] sm:$0xff] %v1876
        %2140 = vst [vmem:[#allocation3 + $0x328] sm:$0xff] %v1875
        %2141 = vst [vmem:[#allocation3 + $0x330] sm:$0xff] %v1882
        %2142 = vst [vmem:[#allocation3 + $0x338] sm:$0xff] %v1881
        %2143 = vst [vmem:[#allocation3 + $0x340] sm:$0xff] %v1913
        %2144 = vst [vmem:[#allocation3 + $0x348] sm:$0xff] %v1912
        %2145 = vst [vmem:[#allocation3 + $0x350] sm:$0xff] %v1911
        %2146 = vst [vmem:[#allocation3 + $0x358] sm:$0xff] %v1910
        %2147 = vst [vmem:[#allocation3 + $0x360] sm:$0xff] %v1909
        %2148 = vst [vmem:[#allocation3 + $0x368] sm:$0xff] %v1908
        %2149 = vst [vmem:[#allocation3 + $0x370] sm:$0xff] %v1915
        %2150 = vst [vmem:[#allocation3 + $0x378] sm:$0xff] %v1914
        %2151 = vst [vmem:[#allocation3 + $0x380] sm:$0xff] %v1946
        %2152 = vst [vmem:[#allocation3 + $0x388] sm:$0xff] %v1945
        %2153 = vst [vmem:[#allocation3 + $0x390] sm:$0xff] %v1944
        %2154 = vst [vmem:[#allocation3 + $0x398] sm:$0xff] %v1943
        %2155 = vst [vmem:[#allocation3 + $0x3a0] sm:$0xff] %v1942
        %2156 = vst [vmem:[#allocation3 + $0x3a8] sm:$0xff] %v1941
        %2157 = vst [vmem:[#allocation3 + $0x3b0] sm:$0xff] %v1948
        %2158 = vst [vmem:[#allocation3 + $0x3b8] sm:$0xff] %v1947
        %2159 = vst [vmem:[#allocation3 + $0x3c0] sm:$0xff] %v1978
        %2160 = vst [vmem:[#allocation3 + $0x3c8] sm:$0xff] %v1977
        %2161 = vst [vmem:[#allocation3 + $0x3d0] sm:$0xff] %v1976
        %2162 = vst [vmem:[#allocation3 + $0x3d8] sm:$0xff] %v1975
        %2163 = vst [vmem:[#allocation3 + $0x3e0] sm:$0xff] %v1974
        %2164 = vst [vmem:[#allocation3 + $0x3e8] sm:$0xff] %v1973
        %2165 = vst [vmem:[#allocation3 + $0x3f0] sm:$0xff] %v1980
        %2166 = vst [vmem:[#allocation3 + $0x3f8] sm:$0xff] %v1979
        %2167 = vst [vmem:[#allocation3 + $0x400] sm:$0xff] %v2010
        %2168 = vst [vmem:[#allocation3 + $0x408] sm:$0xff] %v2009
        %2169 = vst [vmem:[#allocation3 + $0x410] sm:$0xff] %v2008
        %2170 = vst [vmem:[#allocation3 + $0x418] sm:$0xff] %v2007
        %2171 = vst [vmem:[#allocation3 + $0x420] sm:$0xff] %v2006
        %2172 = vst [vmem:[#allocation3 + $0x428] sm:$0xff] %v2005
        %2173 = vst [vmem:[#allocation3 + $0x430] sm:$0xff] %v2012
        %2174 = vst [vmem:[#allocation3 + $0x438] sm:$0xff] %v2011
        %2175 = vst [vmem:[#allocation3 + $0x440] sm:$0xff] %v2042
        %2176 = vst [vmem:[#allocation3 + $0x448] sm:$0xff] %v2041
        %2177 = vst [vmem:[#allocation3 + $0x450] sm:$0xff] %v2040
        %2178 = vst [vmem:[#allocation3 + $0x458] sm:$0xff] %v2039
        %2179 = vst [vmem:[#allocation3 + $0x460] sm:$0xff] %v2038
        %2180 = vst [vmem:[#allocation3 + $0x468] sm:$0xff] %v2037
        %2181 = vst [vmem:[#allocation3 + $0x470] sm:$0xff] %v2044
        %2182 = vst [vmem:[#allocation3 + $0x478] sm:$0xff] %v2043
        %2183 = vst [vmem:[#allocation3 + $0x480] sm:$0xff] %v2075
        %2184 = vst [vmem:[#allocation3 + $0x488] sm:$0xff] %v2074
        %2185 = vst [vmem:[#allocation3 + $0x490] sm:$0xff] %v2073
        %2186 = vst [vmem:[#allocation3 + $0x498] sm:$0xff] %v2072
        %2187 = vst [vmem:[#allocation3 + $0x4a0] sm:$0xff] %v2071
        %2188 = vst [vmem:[#allocation3 + $0x4a8] sm:$0xff] %v2070
        %2189 = vst [vmem:[#allocation3 + $0x4b0] sm:$0xff] %v2077
        %2190 = vst [vmem:[#allocation3 + $0x4b8] sm:$0xff] %v2076
        %2191 = vst [vmem:[#allocation3 + $0x4c0] sm:$0xff] %v2108
        %2192 = vst [vmem:[#allocation3 + $0x4c8] sm:$0xff] %v2107
        %2193 = vst [vmem:[#allocation3 + $0x4d0] sm:$0xff] %v2106
        %2194 = vst [vmem:[#allocation3 + $0x4d8] sm:$0xff] %v2105
        %2195 = vst [vmem:[#allocation3 + $0x4e0] sm:$0xff] %v2104
        %2196 = vst [vmem:[#allocation3 + $0x4e8] sm:$0xff] %v2103
        %2197 = vst [vmem:[#allocation3 + $0x4f0] sm:$0xff] %v2110
        %2198 = vst [vmem:[#allocation3 + $0x4f8] sm:$0xff] %v2109
        %2199 = vst [vmem:[#allocation3 + $0x500] sm:$0xff] %v1813
        %2200 = vst [vmem:[#allocation3 + $0x508] sm:$0xff] %v1814
        %2201 = vst [vmem:[#allocation3 + $0x510] sm:$0xff] %v1815
        %2202 = vst [vmem:[#allocation3 + $0x518] sm:$0xff] %v1816
        %2203 = vst [vmem:[#allocation3 + $0x520] sm:$0xff] %v1817
        %2204 = vst [vmem:[#allocation3 + $0x528] sm:$0xff] %v1818
        %2205 = vst [vmem:[#allocation3 + $0x530] sm:$0xff] %v1811
        %2206 = vst [vmem:[#allocation3 + $0x538] sm:$0xff] %v1812
        %2207 = vst [vmem:[#allocation3 + $0x540] sm:$0xff] %v1847
        %2208 = vst [vmem:[#allocation3 + $0x548] sm:$0xff] %v1846
        %2209 = vst [vmem:[#allocation3 + $0x550] sm:$0xff] %v1845
        %2210 = vst [vmem:[#allocation3 + $0x558] sm:$0xff] %v1844
        %2211 = vst [vmem:[#allocation3 + $0x560] sm:$0xff] %v1843
        %2212 = vst [vmem:[#allocation3 + $0x568] sm:$0xff] %v1850
        %2213 = vst [vmem:[#allocation3 + $0x570] sm:$0xff] %v1849
        %2214 = vst [vmem:[#allocation3 + $0x578] sm:$0xff] %v1848
        %2215 = vst [vmem:[#allocation3 + $0x580] sm:$0xff] %v1879
        %2216 = vst [vmem:[#allocation3 + $0x588] sm:$0xff] %v1878
        %2217 = vst [vmem:[#allocation3 + $0x590] sm:$0xff] %v1877
        %2218 = vst [vmem:[#allocation3 + $0x598] sm:$0xff] %v1876
        %2219 = vst [vmem:[#allocation3 + $0x5a0] sm:$0xff] %v1875
        %2220 = vst [vmem:[#allocation3 + $0x5a8] sm:$0xff] %v1882
        %2221 = vst [vmem:[#allocation3 + $0x5b0] sm:$0xff] %v1881
        %2222 = vst [vmem:[#allocation3 + $0x5b8] sm:$0xff] %v1880
        %2223 = vst [vmem:[#allocation3 + $0x5c0] sm:$0xff] %v1912
        %2224 = vst [vmem:[#allocation3 + $0x5c8] sm:$0xff] %v1911
        %2225 = vst [vmem:[#allocation3 + $0x5d0] sm:$0xff] %v1910
        %2226 = vst [vmem:[#allocation3 + $0x5d8] sm:$0xff] %v1909
        %2227 = vst [vmem:[#allocation3 + $0x5e0] sm:$0xff] %v1908
        %2228 = vst [vmem:[#allocation3 + $0x5e8] sm:$0xff] %v1915
        %2229 = vst [vmem:[#allocation3 + $0x5f0] sm:$0xff] %v1914
        %2230 = vst [vmem:[#allocation3 + $0x5f8] sm:$0xff] %v1913
        %2231 = vst [vmem:[#allocation3 + $0x600] sm:$0xff] %v1945
        %2232 = vst [vmem:[#allocation3 + $0x608] sm:$0xff] %v1944
        %2233 = vst [vmem:[#allocation3 + $0x610] sm:$0xff] %v1943
        %2234 = vst [vmem:[#allocation3 + $0x618] sm:$0xff] %v1942
        %2235 = vst [vmem:[#allocation3 + $0x620] sm:$0xff] %v1941
        %2236 = vst [vmem:[#allocation3 + $0x628] sm:$0xff] %v1948
        %2237 = vst [vmem:[#allocation3 + $0x630] sm:$0xff] %v1947
        %2238 = vst [vmem:[#allocation3 + $0x638] sm:$0xff] %v1946
        %v2239 = vld [vmem:[%s3] sm:$0xff]
        %v2240 = vld [vmem:[%s3 + $0x8] sm:$0xff]
        %v2241 = vld [vmem:[%s3 + $0x10] sm:$0xff]
        %v2242 = vld [vmem:[%s3 + $0x18] sm:$0xff]
        %v2243 = vld [vmem:[#allocation3] sm:$0xff]
        %v2244 = vld [vmem:[#allocation3 + $0x8] sm:$0xff]
        %v2245 = vld [vmem:[#allocation3 + $0x10] sm:$0xff]
        %v2246 = vld [vmem:[#allocation3 + $0x18] sm:$0xff]
        %v2247 = vld [vmem:[#allocation3 + $0x20] sm:$0xff]
        %v2248 = vld [vmem:[#allocation3 + $0x28] sm:$0xff]
        %v2249 = vld [vmem:[#allocation3 + $0x30] sm:$0xff]
        %v2250 = vld [vmem:[#allocation3 + $0x38] sm:$0xff]
        %v2251 = vld [vmem:[#allocation3 + $0x40] sm:$0xff]
        %v2252 = vld [vmem:[#allocation3 + $0x48] sm:$0xff]
        %v2253 = vld [vmem:[#allocation3 + $0x50] sm:$0xff]
        %v2254 = vld [vmem:[#allocation3 + $0x58] sm:$0xff]
        %v2255 = vld [vmem:[#allocation3 + $0x60] sm:$0xff]
        %v2256 = vld [vmem:[#allocation3 + $0x68] sm:$0xff]
        %v2257 = vld [vmem:[#allocation3 + $0x70] sm:$0xff]
        %v2258 = vld [vmem:[#allocation3 + $0x78] sm:$0xff]
        %v2259 = vld [vmem:[#allocation3 + $0x80] sm:$0xff]
        %v2260 = vld [vmem:[#allocation3 + $0x88] sm:$0xff]
        %v2261 = vld [vmem:[#allocation3 + $0x90] sm:$0xff]
        %v2262 = vld [vmem:[#allocation3 + $0x98] sm:$0xff]
        %v2263 = vld [vmem:[#allocation3 + $0xa0] sm:$0xff]
        %v2264 = vld [vmem:[#allocation3 + $0xa8] sm:$0xff]
        %v2265 = vld [vmem:[#allocation3 + $0xb0] sm:$0xff]
        %v2266 = vld [vmem:[#allocation3 + $0xb8] sm:$0xff]
        %v2267 = vld [vmem:[#allocation3 + $0xc0] sm:$0xff]
        %v2268 = vld [vmem:[#allocation3 + $0xc8] sm:$0xff]
        %v2269 = vld [vmem:[#allocation3 + $0xd0] sm:$0xff]
        %v2270 = vld [vmem:[#allocation3 + $0xd8] sm:$0xff]
        %v2271 = vld [vmem:[#allocation3 + $0xe0] sm:$0xff]
        %v2272 = vld [vmem:[#allocation3 + $0xe8] sm:$0xff]
        %v2273 = vld [vmem:[#allocation3 + $0xf0] sm:$0xff]
        %v2274 = vld [vmem:[#allocation3 + $0xf8] sm:$0xff]
        %v2275 = vld [vmem:[#allocation3 + $0x100] sm:$0xff]
        %v2276 = vld [vmem:[#allocation3 + $0x108] sm:$0xff]
        %v2277 = vld [vmem:[#allocation3 + $0x110] sm:$0xff]
        %v2278 = vld [vmem:[#allocation3 + $0x118] sm:$0xff]
        %v2279 = vld [vmem:[#allocation3 + $0x120] sm:$0xff]
        %v2280 = vld [vmem:[#allocation3 + $0x128] sm:$0xff]
        %v2281 = vld [vmem:[#allocation3 + $0x130] sm:$0xff]
        %v2282 = vld [vmem:[#allocation3 + $0x138] sm:$0xff]
        %v2283 = vld [vmem:[#allocation3 + $0x140] sm:$0xff]
        %v2284 = vld [vmem:[#allocation3 + $0x148] sm:$0xff]
        %v2285 = vld [vmem:[#allocation3 + $0x150] sm:$0xff]
        %v2286 = vld [vmem:[#allocation3 + $0x158] sm:$0xff]
        %v2287 = vld [vmem:[#allocation3 + $0x160] sm:$0xff]
        %v2288 = vld [vmem:[#allocation3 + $0x168] sm:$0xff]
        %v2289 = vld [vmem:[#allocation3 + $0x170] sm:$0xff]
        %v2290 = vld [vmem:[#allocation3 + $0x178] sm:$0xff]
        %v2291 = vld [vmem:[#allocation3 + $0x180] sm:$0xff]
        %v2292 = vld [vmem:[#allocation3 + $0x188] sm:$0xff]
        %v2293 = vld [vmem:[#allocation3 + $0x190] sm:$0xff]
        %v2294 = vld [vmem:[#allocation3 + $0x198] sm:$0xff]
        %v2295 = vld [vmem:[#allocation3 + $0x1a0] sm:$0xff]
        %v2296 = vld [vmem:[#allocation3 + $0x1a8] sm:$0xff]
        %v2297 = vld [vmem:[#allocation3 + $0x1b0] sm:$0xff]
        %v2298 = vld [vmem:[#allocation3 + $0x1b8] sm:$0xff]
        %v2299 = vld [vmem:[#allocation3 + $0x1c0] sm:$0xff]
        %v2300 = vld [vmem:[#allocation3 + $0x1c8] sm:$0xff]
        %v2301 = vld [vmem:[#allocation3 + $0x1d0] sm:$0xff]
        %v2302 = vld [vmem:[#allocation3 + $0x1d8] sm:$0xff]
        %v2303 = vld [vmem:[#allocation3 + $0x1e0] sm:$0xff]
        %v2304 = vld [vmem:[#allocation3 + $0x1e8] sm:$0xff]
        %v2305 = vld [vmem:[#allocation3 + $0x1f0] sm:$0xff]
        %v2306 = vld [vmem:[#allocation3 + $0x1f8] sm:$0xff]
        %v2307 = vld [vmem:[#allocation3 + $0x200] sm:$0xff]
        %v2308 = vld [vmem:[#allocation3 + $0x208] sm:$0xff]
        %v2309 = vld [vmem:[#allocation3 + $0x210] sm:$0xff]
        %v2310 = vld [vmem:[#allocation3 + $0x218] sm:$0xff]
        %v2311 = vld [vmem:[#allocation3 + $0x220] sm:$0xff]
        %v2312 = vld [vmem:[#allocation3 + $0x228] sm:$0xff]
        %v2313 = vld [vmem:[#allocation3 + $0x230] sm:$0xff]
        %v2314 = vld [vmem:[#allocation3 + $0x238] sm:$0xff]
        %v2315 = vld [vmem:[#allocation3 + $0x240] sm:$0xff]
        %v2316 = vld [vmem:[#allocation3 + $0x248] sm:$0xff]
        %v2317 = vld [vmem:[#allocation3 + $0x250] sm:$0xff]
        %v2318 = vld [vmem:[#allocation3 + $0x258] sm:$0xff]
        %v2319 = vld [vmem:[#allocation3 + $0x260] sm:$0xff]
        %v2320 = vld [vmem:[#allocation3 + $0x268] sm:$0xff]
        %v2321 = vld [vmem:[#allocation3 + $0x270] sm:$0xff]
        %v2322 = vld [vmem:[#allocation3 + $0x278] sm:$0xff]
        %v2323 = vld [vmem:[#allocation3 + $0x280] sm:$0xff]
        %v2324 = vld [vmem:[#allocation3 + $0x288] sm:$0xff]
        %v2325 = vld [vmem:[#allocation3 + $0x290] sm:$0xff]
        %v2326 = vld [vmem:[#allocation3 + $0x298] sm:$0xff]
        %v2327 = vld [vmem:[#allocation3 + $0x2a0] sm:$0xff]
        %v2328 = vld [vmem:[#allocation3 + $0x2a8] sm:$0xff]
        %v2329 = vld [vmem:[#allocation3 + $0x2b0] sm:$0xff]
        %v2330 = vld [vmem:[#allocation3 + $0x2b8] sm:$0xff]
        %v2331 = vld [vmem:[#allocation3 + $0x2c0] sm:$0xff]
        %v2332 = vld [vmem:[#allocation3 + $0x2c8] sm:$0xff]
        %v2333 = vld [vmem:[#allocation3 + $0x2d0] sm:$0xff]
        %v2334 = vld [vmem:[#allocation3 + $0x2d8] sm:$0xff]
        %v2335 = vld [vmem:[#allocation3 + $0x2e0] sm:$0xff]
        %v2336 = vld [vmem:[#allocation3 + $0x2e8] sm:$0xff]
        %v2337 = vld [vmem:[#allocation3 + $0x2f0] sm:$0xff]
        %v2338 = vld [vmem:[#allocation3 + $0x2f8] sm:$0xff]
        %v2339 = vld [vmem:[#allocation3 + $0x300] sm:$0xff]
        %v2340 = vld [vmem:[#allocation3 + $0x308] sm:$0xff]
        %v2341 = vld [vmem:[#allocation3 + $0x310] sm:$0xff]
        %v2342 = vld [vmem:[#allocation3 + $0x318] sm:$0xff]
        %v2343 = vld [vmem:[#allocation3 + $0x320] sm:$0xff]
        %v2344 = vld [vmem:[#allocation3 + $0x328] sm:$0xff]
        %v2345 = vld [vmem:[#allocation3 + $0x330] sm:$0xff]
        %v2346 = vld [vmem:[#allocation3 + $0x338] sm:$0xff]
        %v2347 = vld [vmem:[#allocation3 + $0x340] sm:$0xff]
        %v2348 = vld [vmem:[#allocation3 + $0x348] sm:$0xff]
        %v2349 = vld [vmem:[#allocation3 + $0x350] sm:$0xff]
        %v2350 = vld [vmem:[#allocation3 + $0x358] sm:$0xff]
        %v2351 = vld [vmem:[#allocation3 + $0x360] sm:$0xff]
        %v2352 = vld [vmem:[#allocation3 + $0x368] sm:$0xff]
        %v2353 = vld [vmem:[#allocation3 + $0x370] sm:$0xff]
        %v2354 = vld [vmem:[#allocation3 + $0x378] sm:$0xff]
        %v2355 = vld [vmem:[#allocation3 + $0x380] sm:$0xff]
        %v2356 = vld [vmem:[#allocation3 + $0x388] sm:$0xff]
        %v2357 = vld [vmem:[#allocation3 + $0x390] sm:$0xff]
        %v2358 = vld [vmem:[#allocation3 + $0x398] sm:$0xff]
        %v2359 = vld [vmem:[#allocation3 + $0x3a0] sm:$0xff]
        %v2360 = vld [vmem:[#allocation3 + $0x3a8] sm:$0xff]
        %v2361 = vld [vmem:[#allocation3 + $0x3b0] sm:$0xff]
        %v2362 = vld [vmem:[#allocation3 + $0x3b8] sm:$0xff]
        %v2363 = vld [vmem:[#allocation3 + $0x3c0] sm:$0xff]
        %v2364 = vld [vmem:[#allocation3 + $0x3c8] sm:$0xff]
        %v2365 = vld [vmem:[#allocation3 + $0x3d0] sm:$0xff]
        %v2366 = vld [vmem:[#allocation3 + $0x3d8] sm:$0xff]
        %v2367 = vld [vmem:[#allocation3 + $0x3e0] sm:$0xff]
        %v2368 = vld [vmem:[#allocation3 + $0x3e8] sm:$0xff]
        %v2369 = vld [vmem:[#allocation3 + $0x3f0] sm:$0xff]
        %v2370 = vld [vmem:[#allocation3 + $0x3f8] sm:$0xff]
        %v2371 = vld [vmem:[#allocation3 + $0x400] sm:$0xff]
        %v2372 = vld [vmem:[#allocation3 + $0x408] sm:$0xff]
        %v2373 = vld [vmem:[#allocation3 + $0x410] sm:$0xff]
        %v2374 = vld [vmem:[#allocation3 + $0x418] sm:$0xff]
        %v2375 = vld [vmem:[#allocation3 + $0x420] sm:$0xff]
        %v2376 = vld [vmem:[#allocation3 + $0x428] sm:$0xff]
        %v2377 = vld [vmem:[#allocation3 + $0x430] sm:$0xff]
        %v2378 = vld [vmem:[#allocation3 + $0x438] sm:$0xff]
        %v2379 = vld [vmem:[#allocation3 + $0x440] sm:$0xff]
        %v2380 = vld [vmem:[#allocation3 + $0x448] sm:$0xff]
        %v2381 = vld [vmem:[#allocation3 + $0x450] sm:$0xff]
        %v2382 = vld [vmem:[#allocation3 + $0x458] sm:$0xff]
        %v2383 = vld [vmem:[#allocation3 + $0x460] sm:$0xff]
        %v2384 = vld [vmem:[#allocation3 + $0x468] sm:$0xff]
        %v2385 = vld [vmem:[#allocation3 + $0x470] sm:$0xff]
        %v2386 = vld [vmem:[#allocation3 + $0x478] sm:$0xff]
        %v2387 = vld [vmem:[#allocation3 + $0x480] sm:$0xff]
        %v2388 = vld [vmem:[#allocation3 + $0x488] sm:$0xff]
        %v2389 = vld [vmem:[#allocation3 + $0x490] sm:$0xff]
        %v2390 = vld [vmem:[#allocation3 + $0x498] sm:$0xff]
        %v2391 = vld [vmem:[#allocation3 + $0x4a0] sm:$0xff]
        %v2392 = vld [vmem:[#allocation3 + $0x4a8] sm:$0xff]
        %v2393 = vld [vmem:[#allocation3 + $0x4b0] sm:$0xff]
        %v2394 = vld [vmem:[#allocation3 + $0x4b8] sm:$0xff]
        %v2395 = vld [vmem:[#allocation3 + $0x4c0] sm:$0xff]
        %v2396 = vld [vmem:[#allocation3 + $0x4c8] sm:$0xff]
        %v2397 = vld [vmem:[#allocation3 + $0x4d0] sm:$0xff]
        %v2398 = vld [vmem:[#allocation3 + $0x4d8] sm:$0xff]
        %v2399 = vld [vmem:[#allocation3 + $0x4e0] sm:$0xff]
        %v2400 = vld [vmem:[#allocation3 + $0x4e8] sm:$0xff]
        %v2401 = vld [vmem:[#allocation3 + $0x4f0] sm:$0xff]
        %v2402 = vld [vmem:[#allocation3 + $0x4f8] sm:$0xff]
        %v2403 = vld [vmem:[#allocation3 + $0x500] sm:$0xff]
        %v2404 = vld [vmem:[#allocation3 + $0x508] sm:$0xff]
        %v2405 = vld [vmem:[#allocation3 + $0x510] sm:$0xff]
        %v2406 = vld [vmem:[#allocation3 + $0x518] sm:$0xff]
        %v2407 = vld [vmem:[#allocation3 + $0x520] sm:$0xff]
        %v2408 = vld [vmem:[#allocation3 + $0x528] sm:$0xff]
        %v2409 = vld [vmem:[#allocation3 + $0x530] sm:$0xff]
        %v2410 = vld [vmem:[#allocation3 + $0x538] sm:$0xff]
        %v2411 = vld [vmem:[#allocation3 + $0x540] sm:$0xff]
        %v2412 = vld [vmem:[#allocation3 + $0x548] sm:$0xff]
        %v2413 = vld [vmem:[#allocation3 + $0x550] sm:$0xff]
        %v2414 = vld [vmem:[#allocation3 + $0x558] sm:$0xff]
        %v2415 = vld [vmem:[#allocation3 + $0x560] sm:$0xff]
        %v2416 = vld [vmem:[#allocation3 + $0x568] sm:$0xff]
        %v2417 = vld [vmem:[#allocation3 + $0x570] sm:$0xff]
        %v2418 = vld [vmem:[#allocation3 + $0x578] sm:$0xff]
        %v2419 = vld [vmem:[#allocation3 + $0x580] sm:$0xff]
        %v2420 = vld [vmem:[#allocation3 + $0x588] sm:$0xff]
        %v2421 = vld [vmem:[#allocation3 + $0x590] sm:$0xff]
        %v2422 = vld [vmem:[#allocation3 + $0x598] sm:$0xff]
        %v2423 = vld [vmem:[#allocation3 + $0x5a0] sm:$0xff]
        %v2424 = vld [vmem:[#allocation3 + $0x5a8] sm:$0xff]
        %v2425 = vld [vmem:[#allocation3 + $0x5b0] sm:$0xff]
        %v2426 = vld [vmem:[#allocation3 + $0x5b8] sm:$0xff]
        %v2427 = vld [vmem:[#allocation3 + $0x5c0] sm:$0xff]
        %v2428 = vld [vmem:[#allocation3 + $0x5c8] sm:$0xff]
        %v2429 = vld [vmem:[#allocation3 + $0x5d0] sm:$0xff]
        %v2430 = vld [vmem:[#allocation3 + $0x5d8] sm:$0xff]
        %v2431 = vld [vmem:[#allocation3 + $0x5e0] sm:$0xff]
        %v2432 = vld [vmem:[#allocation3 + $0x5e8] sm:$0xff]
        %v2433 = vld [vmem:[#allocation3 + $0x5f0] sm:$0xff]
        %v2434 = vld [vmem:[#allocation3 + $0x5f8] sm:$0xff]
        %v2435 = vld [vmem:[#allocation3 + $0x600] sm:$0xff]
        %v2436 = vld [vmem:[#allocation3 + $0x608] sm:$0xff]
        %v2437 = vld [vmem:[#allocation3 + $0x610] sm:$0xff]
        %v2438 = vld [vmem:[#allocation3 + $0x618] sm:$0xff]
        %v2439 = vld [vmem:[#allocation3 + $0x620] sm:$0xff]
        %v2440 = vld [vmem:[#allocation3 + $0x628] sm:$0xff]
        %v2441 = vld [vmem:[#allocation3 + $0x630] sm:$0xff]
        %v2442 = vld [vmem:[#allocation3 + $0x638] sm:$0xff]
        %v2443 = vld [vmem:[%s4] sm:$0xff]
        %v2444 = vld [vmem:[%s4 + $0x8] sm:$0xff]
        %2446 = vset.pattern.permute.xlu0 0
        %2447 = vperm.xlu0 %2446, %v2443
        %v2448 = vpop.permute.xlu0 %2447
        %2451 = vset.pattern.permute.xlu0 0
        %2452 = vperm.xlu0 %2451, %v2444
        %v2453 = vpop.permute.xlu0 %2452
        %vm2455 = vcmask 588800
        %v2457 = vsel %vm2455, %v2240, 0
        %v2460 = vsel %vm2455, %v2242, 0
        %2462 = vmatpush.msra.mxu0 %v2363
        %2463 = vmatpush.msra.mxu0 %v2355
        %2464 = vmatpush.msra.mxu0 %v2347
        %2465 = vmatpush.msra.mxu0 %v2339
        %2466 = vmatpush.msra.mxu0 %v2331
        %2467 = vmatpush.msra.mxu0 %v2323
        %2468 = vmatpush.msra.mxu0 %v2315
        %2469 = vmatpush.msra.mxu0 %v2307
        %2470 = vmatpush.msra.mxu0 %v2299
        %2471 = vmatpush.msra.mxu0 %v2291
        %2472 = vmatpush.msra.mxu0 %v2283
        %2473 = vmatpush.msra.mxu0 %v2275
        %2474 = vmatpush.msra.mxu0 %v2267
        %2475 = vmatpush.msra.mxu0 %v2259
        %2476 = vmatpush.msra.mxu0 %v2251
        %2477 = vmatpush.msra.mxu0 %v2243
        %2478 = vmatmul.f32.gmra.mxu0 %v2239
        %v2479 = vpop.f32.mrf.mxu0
        %v2480 = vadd.f32 %v2448, %v2479
        %2481 = vmatmul.f32.gmra.mxu0 %v2241
        %v2482 = vpop.f32.mrf.mxu0
        %v2483 = vadd.f32 %v2453, %v2482
        %2484 = vdwg.mxu0
        %2485 = vmatpush.msra.mxu0 0.0
        %2486 = vmatpush.msra.mxu0 0.0
        %2487 = vmatpush.msra.mxu0 0.0
        %2488 = vmatpush.msra.mxu0 0.0
        %2489 = vmatpush.msra.mxu0 0.0
        %2490 = vmatpush.msra.mxu0 0.0
        %2491 = vmatpush.msra.mxu0 0.0
        %2492 = vmatpush.msra.mxu0 %v2435
        %2493 = vmatpush.msra.mxu0 %v2427
        %2494 = vmatpush.msra.mxu0 %v2419
        %2495 = vmatpush.msra.mxu0 %v2411
        %2496 = vmatpush.msra.mxu0 %v2403
        %2497 = vmatpush.msra.mxu0 %v2395
        %2498 = vmatpush.msra.mxu0 %v2387
        %2499 = vmatpush.msra.mxu0 %v2379
        %2500 = vmatpush.msra.mxu0 %v2371
        %2501 = vmatmul.f32.gmra.mxu0 %v2457
        %v2502 = vpop.f32.mrf.mxu0
        %v2503 = vadd.f32 %v2480, %v2502
        %2504 = vmatmul.f32.gmra.mxu0 %v2460
        %v2505 = vpop.f32.mrf.mxu0
        %v2506 = vadd.f32 %v2483, %v2505
        %2507 = vdwg.mxu0
        %2508 = vmatpush.msra.mxu0 %v2364
        %2509 = vmatpush.msra.mxu0 %v2356
        %2510 = vmatpush.msra.mxu0 %v2348
        %2511 = vmatpush.msra.mxu0 %v2340
        %2512 = vmatpush.msra.mxu0 %v2332
        %2513 = vmatpush.msra.mxu0 %v2324
        %2514 = vmatpush.msra.mxu0 %v2316
        %2515 = vmatpush.msra.mxu0 %v2308
        %2516 = vmatpush.msra.mxu0 %v2300
        %2517 = vmatpush.msra.mxu0 %v2292
        %2518 = vmatpush.msra.mxu0 %v2284
        %2519 = vmatpush.msra.mxu0 %v2276
        %2520 = vmatpush.msra.mxu0 %v2268
        %2521 = vmatpush.msra.mxu0 %v2260
        %2522 = vmatpush.msra.mxu0 %v2252
        %2523 = vmatpush.msra.mxu0 %v2244
        %2524 = vmatmul.f32.gmra.mxu0 %v2239
        %v2525 = vpop.f32.mrf.mxu0
        %v2526 = vadd.f32 %v2448, %v2525
        %2527 = vmatmul.f32.gmra.mxu0 %v2241
        %v2528 = vpop.f32.mrf.mxu0
        %v2529 = vadd.f32 %v2453, %v2528
        %2530 = vdwg.mxu0
        %2531 = vmatpush.msra.mxu0 0.0
        %2532 = vmatpush.msra.mxu0 0.0
        %2533 = vmatpush.msra.mxu0 0.0
        %2534 = vmatpush.msra.mxu0 0.0
        %2535 = vmatpush.msra.mxu0 0.0
        %2536 = vmatpush.msra.mxu0 0.0
        %2537 = vmatpush.msra.mxu0 0.0
        %2538 = vmatpush.msra.mxu0 %v2436
        %2539 = vmatpush.msra.mxu0 %v2428
        %2540 = vmatpush.msra.mxu0 %v2420
        %2541 = vmatpush.msra.mxu0 %v2412
        %2542 = vmatpush.msra.mxu0 %v2404
        %2543 = vmatpush.msra.mxu0 %v2396
        %2544 = vmatpush.msra.mxu0 %v2388
        %2545 = vmatpush.msra.mxu0 %v2380
        %2546 = vmatpush.msra.mxu0 %v2372
        %2547 = vmatmul.f32.gmra.mxu0 %v2457
        %v2548 = vpop.f32.mrf.mxu0
        %v2549 = vadd.f32 %v2526, %v2548
        %2550 = vmatmul.f32.gmra.mxu0 %v2460
        %v2551 = vpop.f32.mrf.mxu0
        %v2552 = vadd.f32 %v2529, %v2551
        %2553 = vdwg.mxu0
        %2554 = vmatpush.msra.mxu0 %v2365
        %2555 = vmatpush.msra.mxu0 %v2357
        %2556 = vmatpush.msra.mxu0 %v2349
        %2557 = vmatpush.msra.mxu0 %v2341
        %2558 = vmatpush.msra.mxu0 %v2333
        %2559 = vmatpush.msra.mxu0 %v2325
        %2560 = vmatpush.msra.mxu0 %v2317
        %2561 = vmatpush.msra.mxu0 %v2309
        %2562 = vmatpush.msra.mxu0 %v2301
        %2563 = vmatpush.msra.mxu0 %v2293
        %2564 = vmatpush.msra.mxu0 %v2285
        %2565 = vmatpush.msra.mxu0 %v2277
        %2566 = vmatpush.msra.mxu0 %v2269
        %2567 = vmatpush.msra.mxu0 %v2261
        %2568 = vmatpush.msra.mxu0 %v2253
        %2569 = vmatpush.msra.mxu0 %v2245
        %2570 = vmatmul.f32.gmra.mxu0 %v2239
        %v2571 = vpop.f32.mrf.mxu0
        %v2572 = vadd.f32 %v2448, %v2571
        %2573 = vmatmul.f32.gmra.mxu0 %v2241
        %v2574 = vpop.f32.mrf.mxu0
        %v2575 = vadd.f32 %v2453, %v2574
        %2576 = vdwg.mxu0
        %2577 = vmatpush.msra.mxu0 0.0
        %2578 = vmatpush.msra.mxu0 0.0
        %2579 = vmatpush.msra.mxu0 0.0
        %2580 = vmatpush.msra.mxu0 0.0
        %2581 = vmatpush.msra.mxu0 0.0
        %2582 = vmatpush.msra.mxu0 0.0
        %2583 = vmatpush.msra.mxu0 0.0
        %2584 = vmatpush.msra.mxu0 %v2437
        %2585 = vmatpush.msra.mxu0 %v2429
        %2586 = vmatpush.msra.mxu0 %v2421
        %2587 = vmatpush.msra.mxu0 %v2413
        %2588 = vmatpush.msra.mxu0 %v2405
        %2589 = vmatpush.msra.mxu0 %v2397
        %2590 = vmatpush.msra.mxu0 %v2389
        %2591 = vmatpush.msra.mxu0 %v2381
        %2592 = vmatpush.msra.mxu0 %v2373
        %2593 = vmatmul.f32.gmra.mxu0 %v2457
        %v2594 = vpop.f32.mrf.mxu0
        %v2595 = vadd.f32 %v2572, %v2594
        %2596 = vmatmul.f32.gmra.mxu0 %v2460
        %v2597 = vpop.f32.mrf.mxu0
        %v2598 = vadd.f32 %v2575, %v2597
        %2599 = vdwg.mxu0
        %2600 = vmatpush.msra.mxu0 %v2366
        %2601 = vmatpush.msra.mxu0 %v2358
        %2602 = vmatpush.msra.mxu0 %v2350
        %2603 = vmatpush.msra.mxu0 %v2342
        %2604 = vmatpush.msra.mxu0 %v2334
        %2605 = vmatpush.msra.mxu0 %v2326
        %2606 = vmatpush.msra.mxu0 %v2318
        %2607 = vmatpush.msra.mxu0 %v2310
        %2608 = vmatpush.msra.mxu0 %v2302
        %2609 = vmatpush.msra.mxu0 %v2294
        %2610 = vmatpush.msra.mxu0 %v2286
        %2611 = vmatpush.msra.mxu0 %v2278
        %2612 = vmatpush.msra.mxu0 %v2270
        %2613 = vmatpush.msra.mxu0 %v2262
        %2614 = vmatpush.msra.mxu0 %v2254
        %2615 = vmatpush.msra.mxu0 %v2246
        %2616 = vmatmul.f32.gmra.mxu0 %v2239
        %v2617 = vpop.f32.mrf.mxu0
        %v2618 = vadd.f32 %v2448, %v2617
        %2619 = vmatmul.f32.gmra.mxu0 %v2241
        %v2620 = vpop.f32.mrf.mxu0
        %v2621 = vadd.f32 %v2453, %v2620
        %2622 = vdwg.mxu0
        %2623 = vmatpush.msra.mxu0 0.0
        %2624 = vmatpush.msra.mxu0 0.0
        %2625 = vmatpush.msra.mxu0 0.0
        %2626 = vmatpush.msra.mxu0 0.0
        %2627 = vmatpush.msra.mxu0 0.0
        %2628 = vmatpush.msra.mxu0 0.0
        %2629 = vmatpush.msra.mxu0 0.0
        %2630 = vmatpush.msra.mxu0 %v2438
        %2631 = vmatpush.msra.mxu0 %v2430
        %2632 = vmatpush.msra.mxu0 %v2422
        %2633 = vmatpush.msra.mxu0 %v2414
        %2634 = vmatpush.msra.mxu0 %v2406
        %2635 = vmatpush.msra.mxu0 %v2398
        %2636 = vmatpush.msra.mxu0 %v2390
        %2637 = vmatpush.msra.mxu0 %v2382
        %2638 = vmatpush.msra.mxu0 %v2374
        %2639 = vmatmul.f32.gmra.mxu0 %v2457
        %v2640 = vpop.f32.mrf.mxu0
        %v2641 = vadd.f32 %v2618, %v2640
        %2642 = vmatmul.f32.gmra.mxu0 %v2460
        %v2643 = vpop.f32.mrf.mxu0
        %v2644 = vadd.f32 %v2621, %v2643
        %2645 = vdwg.mxu0
        %2646 = vmatpush.msra.mxu0 %v2367
        %2647 = vmatpush.msra.mxu0 %v2359
        %2648 = vmatpush.msra.mxu0 %v2351
        %2649 = vmatpush.msra.mxu0 %v2343
        %2650 = vmatpush.msra.mxu0 %v2335
        %2651 = vmatpush.msra.mxu0 %v2327
        %2652 = vmatpush.msra.mxu0 %v2319
        %2653 = vmatpush.msra.mxu0 %v2311
        %2654 = vmatpush.msra.mxu0 %v2303
        %2655 = vmatpush.msra.mxu0 %v2295
        %2656 = vmatpush.msra.mxu0 %v2287
        %2657 = vmatpush.msra.mxu0 %v2279
        %2658 = vmatpush.msra.mxu0 %v2271
        %2659 = vmatpush.msra.mxu0 %v2263
        %2660 = vmatpush.msra.mxu0 %v2255
        %2661 = vmatpush.msra.mxu0 %v2247
        %2662 = vmatmul.f32.gmra.mxu0 %v2239
        %v2663 = vpop.f32.mrf.mxu0
        %v2664 = vadd.f32 %v2448, %v2663
        %2665 = vmatmul.f32.gmra.mxu0 %v2241
        %v2666 = vpop.f32.mrf.mxu0
        %v2667 = vadd.f32 %v2453, %v2666
        %2668 = vdwg.mxu0
        %2669 = vmatpush.msra.mxu0 0.0
        %2670 = vmatpush.msra.mxu0 0.0
        %2671 = vmatpush.msra.mxu0 0.0
        %2672 = vmatpush.msra.mxu0 0.0
        %2673 = vmatpush.msra.mxu0 0.0
        %2674 = vmatpush.msra.mxu0 0.0
        %2675 = vmatpush.msra.mxu0 0.0
        %2676 = vmatpush.msra.mxu0 %v2439
        %2677 = vmatpush.msra.mxu0 %v2431
        %2678 = vmatpush.msra.mxu0 %v2423
        %2679 = vmatpush.msra.mxu0 %v2415
        %2680 = vmatpush.msra.mxu0 %v2407
        %2681 = vmatpush.msra.mxu0 %v2399
        %2682 = vmatpush.msra.mxu0 %v2391
        %2683 = vmatpush.msra.mxu0 %v2383
        %2684 = vmatpush.msra.mxu0 %v2375
        %2685 = vmatmul.f32.gmra.mxu0 %v2457
        %v2686 = vpop.f32.mrf.mxu0
        %v2687 = vadd.f32 %v2664, %v2686
        %2688 = vmatmul.f32.gmra.mxu0 %v2460
        %v2689 = vpop.f32.mrf.mxu0
        %v2690 = vadd.f32 %v2667, %v2689
        %2691 = vdwg.mxu0
        %2692 = vmatpush.msra.mxu0 %v2368
        %2693 = vmatpush.msra.mxu0 %v2360
        %2694 = vmatpush.msra.mxu0 %v2352
        %2695 = vmatpush.msra.mxu0 %v2344
        %2696 = vmatpush.msra.mxu0 %v2336
        %2697 = vmatpush.msra.mxu0 %v2328
        %2698 = vmatpush.msra.mxu0 %v2320
        %2699 = vmatpush.msra.mxu0 %v2312
        %2700 = vmatpush.msra.mxu0 %v2304
        %2701 = vmatpush.msra.mxu0 %v2296
        %2702 = vmatpush.msra.mxu0 %v2288
        %2703 = vmatpush.msra.mxu0 %v2280
        %2704 = vmatpush.msra.mxu0 %v2272
        %2705 = vmatpush.msra.mxu0 %v2264
        %2706 = vmatpush.msra.mxu0 %v2256
        %2707 = vmatpush.msra.mxu0 %v2248
        %2708 = vmatmul.f32.gmra.mxu0 %v2239
        %v2709 = vpop.f32.mrf.mxu0
        %v2710 = vadd.f32 %v2448, %v2709
        %2711 = vmatmul.f32.gmra.mxu0 %v2241
        %v2712 = vpop.f32.mrf.mxu0
        %v2713 = vadd.f32 %v2453, %v2712
        %2714 = vdwg.mxu0
        %2715 = vmatpush.msra.mxu0 0.0
        %2716 = vmatpush.msra.mxu0 0.0
        %2717 = vmatpush.msra.mxu0 0.0
        %2718 = vmatpush.msra.mxu0 0.0
        %2719 = vmatpush.msra.mxu0 0.0
        %2720 = vmatpush.msra.mxu0 0.0
        %2721 = vmatpush.msra.mxu0 0.0
        %2722 = vmatpush.msra.mxu0 %v2440
        %2723 = vmatpush.msra.mxu0 %v2432
        %2724 = vmatpush.msra.mxu0 %v2424
        %2725 = vmatpush.msra.mxu0 %v2416
        %2726 = vmatpush.msra.mxu0 %v2408
        %2727 = vmatpush.msra.mxu0 %v2400
        %2728 = vmatpush.msra.mxu0 %v2392
        %2729 = vmatpush.msra.mxu0 %v2384
        %2730 = vmatpush.msra.mxu0 %v2376
        %2731 = vmatmul.f32.gmra.mxu0 %v2457
        %v2732 = vpop.f32.mrf.mxu0
        %v2733 = vadd.f32 %v2710, %v2732
        %2734 = vmatmul.f32.gmra.mxu0 %v2460
        %v2735 = vpop.f32.mrf.mxu0
        %v2736 = vadd.f32 %v2713, %v2735
        %2737 = vdwg.mxu0
        %2738 = vmatpush.msra.mxu0 %v2369
        %2739 = vmatpush.msra.mxu0 %v2361
        %2740 = vmatpush.msra.mxu0 %v2353
        %2741 = vmatpush.msra.mxu0 %v2345
        %2742 = vmatpush.msra.mxu0 %v2337
        %2743 = vmatpush.msra.mxu0 %v2329
        %2744 = vmatpush.msra.mxu0 %v2321
        %2745 = vmatpush.msra.mxu0 %v2313
        %2746 = vmatpush.msra.mxu0 %v2305
        %2747 = vmatpush.msra.mxu0 %v2297
        %2748 = vmatpush.msra.mxu0 %v2289
        %2749 = vmatpush.msra.mxu0 %v2281
        %2750 = vmatpush.msra.mxu0 %v2273
        %2751 = vmatpush.msra.mxu0 %v2265
        %2752 = vmatpush.msra.mxu0 %v2257
        %2753 = vmatpush.msra.mxu0 %v2249
        %2754 = vmatmul.f32.gmra.mxu0 %v2239
        %v2755 = vpop.f32.mrf.mxu0
        %v2756 = vadd.f32 %v2448, %v2755
        %2757 = vmatmul.f32.gmra.mxu0 %v2241
        %v2758 = vpop.f32.mrf.mxu0
        %v2759 = vadd.f32 %v2453, %v2758
        %2760 = vdwg.mxu0
        %2761 = vmatpush.msra.mxu0 0.0
        %2762 = vmatpush.msra.mxu0 0.0
        %2763 = vmatpush.msra.mxu0 0.0
        %2764 = vmatpush.msra.mxu0 0.0
        %2765 = vmatpush.msra.mxu0 0.0
        %2766 = vmatpush.msra.mxu0 0.0
        %2767 = vmatpush.msra.mxu0 0.0
        %2768 = vmatpush.msra.mxu0 %v2441
        %2769 = vmatpush.msra.mxu0 %v2433
        %2770 = vmatpush.msra.mxu0 %v2425
        %2771 = vmatpush.msra.mxu0 %v2417
        %2772 = vmatpush.msra.mxu0 %v2409
        %2773 = vmatpush.msra.mxu0 %v2401
        %2774 = vmatpush.msra.mxu0 %v2393
        %2775 = vmatpush.msra.mxu0 %v2385
        %2776 = vmatpush.msra.mxu0 %v2377
        %2777 = vmatmul.f32.gmra.mxu0 %v2457
        %v2778 = vpop.f32.mrf.mxu0
        %v2779 = vadd.f32 %v2756, %v2778
        %2780 = vmatmul.f32.gmra.mxu0 %v2460
        %v2781 = vpop.f32.mrf.mxu0
        %v2782 = vadd.f32 %v2759, %v2781
        %2783 = vdwg.mxu0
        %2784 = vmatpush.msra.mxu0 %v2370
        %2785 = vmatpush.msra.mxu0 %v2362
        %2786 = vmatpush.msra.mxu0 %v2354
        %2787 = vmatpush.msra.mxu0 %v2346
        %2788 = vmatpush.msra.mxu0 %v2338
        %2789 = vmatpush.msra.mxu0 %v2330
        %2790 = vmatpush.msra.mxu0 %v2322
        %2791 = vmatpush.msra.mxu0 %v2314
        %2792 = vmatpush.msra.mxu0 %v2306
        %2793 = vmatpush.msra.mxu0 %v2298
        %2794 = vmatpush.msra.mxu0 %v2290
        %2795 = vmatpush.msra.mxu0 %v2282
        %2796 = vmatpush.msra.mxu0 %v2274
        %2797 = vmatpush.msra.mxu0 %v2266
        %2798 = vmatpush.msra.mxu0 %v2258
        %2799 = vmatpush.msra.mxu0 %v2250
        %2800 = vmatmul.f32.gmra.mxu0 %v2239
        %v2801 = vpop.f32.mrf.mxu0
        %v2802 = vadd.f32 %v2448, %v2801
        %2803 = vmatmul.f32.gmra.mxu0 %v2241
        %v2804 = vpop.f32.mrf.mxu0
        %v2805 = vadd.f32 %v2453, %v2804
        %2806 = vdwg.mxu0
        %2807 = vmatpush.msra.mxu0 0.0
        %2808 = vmatpush.msra.mxu0 0.0
        %2809 = vmatpush.msra.mxu0 0.0
        %2810 = vmatpush.msra.mxu0 0.0
        %2811 = vmatpush.msra.mxu0 0.0
        %2812 = vmatpush.msra.mxu0 0.0
        %2813 = vmatpush.msra.mxu0 0.0
        %2814 = vmatpush.msra.mxu0 %v2442
        %2815 = vmatpush.msra.mxu0 %v2434
        %2816 = vmatpush.msra.mxu0 %v2426
        %2817 = vmatpush.msra.mxu0 %v2418
        %2818 = vmatpush.msra.mxu0 %v2410
        %2819 = vmatpush.msra.mxu0 %v2402
        %2820 = vmatpush.msra.mxu0 %v2394
        %2821 = vmatpush.msra.mxu0 %v2386
        %2822 = vmatpush.msra.mxu0 %v2378
        %2823 = vmatmul.f32.gmra.mxu0 %v2457
        %v2824 = vpop.f32.mrf.mxu0
        %v2825 = vadd.f32 %v2802, %v2824
        %2826 = vmatmul.f32.gmra.mxu0 %v2460
        %v2827 = vpop.f32.mrf.mxu0
        %v2828 = vadd.f32 %v2805, %v2827
        %2829 = vdwg.mxu0
        %v2830 = vtanh.pop %v2503
        %v2831 = vtanh.pop %v2549
        %v2832 = vtanh.pop %v2595
        %v2833 = vtanh.pop %v2641
        %v2834 = vtanh.pop %v2687
        %v2835 = vtanh.pop %v2733
        %v2836 = vtanh.pop %v2779
        %v2837 = vtanh.pop %v2825
        %v2838 = vtanh.pop %v2506
        %v2839 = vtanh.pop %v2552
        %v2840 = vtanh.pop %v2598
        %v2841 = vtanh.pop %v2644
        %v2842 = vtanh.pop %v2690
        %v2843 = vtanh.pop %v2736
        %v2844 = vtanh.pop %v2782
        %v2845 = vtanh.pop %v2828
        %v2846 = vld [vmem:[%s5] sm:$0xff]
        %v2847 = vld [vmem:[%s5 + $0x8] sm:$0xff]
        %v2848 = vld [vmem:[%s5 + $0x10] sm:$0xff]
        %v2849 = vld [vmem:[%s5 + $0x18] sm:$0xff]
        %v2850 = vld [vmem:[%s5 + $0x20] sm:$0xff]
        %v2851 = vld [vmem:[%s5 + $0x28] sm:$0xff]
        %v2852 = vld [vmem:[%s5 + $0x30] sm:$0xff]
        %v2853 = vld [vmem:[%s5 + $0x38] sm:$0xff]
        %v2854 = vld [vmem:[%s5 + $0x40] sm:$0xff]
        %v2855 = vld [vmem:[%s5 + $0x48] sm:$0xff]
        %v2856 = vld [vmem:[%s5 + $0x50] sm:$0xff]
        %v2857 = vld [vmem:[%s5 + $0x58] sm:$0xff]
        %v2858 = vld [vmem:[%s5 + $0x60] sm:$0xff]
        %v2859 = vld [vmem:[%s5 + $0x68] sm:$0xff]
        %v2860 = vld [vmem:[%s5 + $0x70] sm:$0xff]
        %v2861 = vld [vmem:[%s5 + $0x78] sm:$0xff]
        %v2862 = vld [vmem:[%s5 + $0x80] sm:$0xff]
        %v2863 = vld [vmem:[%s5 + $0x88] sm:$0xff]
        %v2864 = vld [vmem:[%s5 + $0x90] sm:$0xff]
        %v2865 = vld [vmem:[%s5 + $0x98] sm:$0xff]
        %v2866 = vld [vmem:[%s5 + $0xa0] sm:$0xff]
        %v2867 = vld [vmem:[%s5 + $0xa8] sm:$0xff]
        %v2868 = vld [vmem:[%s5 + $0xb0] sm:$0xff]
        %v2869 = vld [vmem:[%s5 + $0xb8] sm:$0xff]
        %v2870 = vld [vmem:[%s5 + $0xc0] sm:$0xff]
        %v2871 = vld [vmem:[%s5 + $0xc8] sm:$0xff]
        %v2872 = vld [vmem:[%s5 + $0xd0] sm:$0xff]
        %v2873 = vld [vmem:[%s5 + $0xd8] sm:$0xff]
        %v2874 = vld [vmem:[%s5 + $0xe0] sm:$0xff]
        %v2875 = vld [vmem:[%s5 + $0xe8] sm:$0xff]
        %v2876 = vld [vmem:[%s5 + $0xf0] sm:$0xff]
        %v2877 = vld [vmem:[%s5 + $0xf8] sm:$0xff]
        %v2878 = vld [vmem:[%s5 + $0x100] sm:$0xff]
        %v2879 = vld [vmem:[%s5 + $0x108] sm:$0xff]
        %v2880 = vld [vmem:[%s5 + $0x110] sm:$0xff]
        %v2881 = vld [vmem:[%s5 + $0x118] sm:$0xff]
        %v2882 = vld [vmem:[%s5 + $0x120] sm:$0xff]
        %v2883 = vld [vmem:[%s5 + $0x128] sm:$0xff]
        %v2884 = vld [vmem:[%s5 + $0x130] sm:$0xff]
        %v2885 = vld [vmem:[%s5 + $0x138] sm:$0xff]
        %v2886 = vld [vmem:[%s5 + $0x140] sm:$0xff]
        %v2887 = vld [vmem:[%s5 + $0x148] sm:$0xff]
        %v2888 = vld [vmem:[%s5 + $0x150] sm:$0xff]
        %v2889 = vld [vmem:[%s5 + $0x158] sm:$0xff]
        %v2890 = vld [vmem:[%s5 + $0x160] sm:$0xff]
        %v2891 = vld [vmem:[%s5 + $0x168] sm:$0xff]
        %v2892 = vld [vmem:[%s5 + $0x170] sm:$0xff]
        %v2893 = vld [vmem:[%s5 + $0x178] sm:$0xff]
        %v2894 = vld [vmem:[%s5 + $0x180] sm:$0xff]
        %v2895 = vld [vmem:[%s5 + $0x188] sm:$0xff]
        %v2896 = vld [vmem:[%s5 + $0x190] sm:$0xff]
        %v2897 = vld [vmem:[%s5 + $0x198] sm:$0xff]
        %v2898 = vld [vmem:[%s5 + $0x1a0] sm:$0xff]
        %v2899 = vld [vmem:[%s5 + $0x1a8] sm:$0xff]
        %v2900 = vld [vmem:[%s5 + $0x1b0] sm:$0xff]
        %v2901 = vld [vmem:[%s5 + $0x1b8] sm:$0xff]
        %v2902 = vld [vmem:[%s5 + $0x1c0] sm:$0xff]
        %v2903 = vld [vmem:[%s5 + $0x1c8] sm:$0xff]
        %v2904 = vld [vmem:[%s5 + $0x1d0] sm:$0xff]
        %v2905 = vld [vmem:[%s5 + $0x1d8] sm:$0xff]
        %v2906 = vld [vmem:[%s5 + $0x1e0] sm:$0xff]
        %v2907 = vld [vmem:[%s5 + $0x1e8] sm:$0xff]
        %v2908 = vld [vmem:[%s5 + $0x1f0] sm:$0xff]
        %v2909 = vld [vmem:[%s5 + $0x1f8] sm:$0xff]
        %v2910 = vld [vmem:[%s5 + $0x200] sm:$0xff]
        %v2911 = vld [vmem:[%s5 + $0x208] sm:$0xff]
        %v2912 = vld [vmem:[%s5 + $0x210] sm:$0xff]
        %v2913 = vld [vmem:[%s5 + $0x218] sm:$0xff]
        %v2914 = vld [vmem:[%s5 + $0x220] sm:$0xff]
        %v2915 = vld [vmem:[%s5 + $0x228] sm:$0xff]
        %v2916 = vld [vmem:[%s5 + $0x230] sm:$0xff]
        %v2917 = vld [vmem:[%s5 + $0x238] sm:$0xff]
        %v2918 = vld [vmem:[%s5 + $0x240] sm:$0xff]
        %v2919 = vld [vmem:[%s5 + $0x248] sm:$0xff]
        %v2920 = vld [vmem:[%s5 + $0x250] sm:$0xff]
        %v2921 = vld [vmem:[%s5 + $0x258] sm:$0xff]
        %v2922 = vld [vmem:[%s5 + $0x260] sm:$0xff]
        %v2923 = vld [vmem:[%s5 + $0x268] sm:$0xff]
        %v2924 = vld [vmem:[%s5 + $0x270] sm:$0xff]
        %v2925 = vld [vmem:[%s5 + $0x278] sm:$0xff]
        %v2926 = vld [vmem:[%s5 + $0x280] sm:$0xff]
        %v2927 = vld [vmem:[%s5 + $0x288] sm:$0xff]
        %v2928 = vld [vmem:[%s5 + $0x290] sm:$0xff]
        %v2929 = vld [vmem:[%s5 + $0x298] sm:$0xff]
        %v2930 = vld [vmem:[%s5 + $0x2a0] sm:$0xff]
        %v2931 = vld [vmem:[%s5 + $0x2a8] sm:$0xff]
        %v2932 = vld [vmem:[%s5 + $0x2b0] sm:$0xff]
        %v2933 = vld [vmem:[%s5 + $0x2b8] sm:$0xff]
        %v2934 = vld [vmem:[%s5 + $0x2c0] sm:$0xff]
        %v2935 = vld [vmem:[%s5 + $0x2c8] sm:$0xff]
        %v2936 = vld [vmem:[%s5 + $0x2d0] sm:$0xff]
        %v2937 = vld [vmem:[%s5 + $0x2d8] sm:$0xff]
        %v2938 = vld [vmem:[%s5 + $0x2e0] sm:$0xff]
        %v2939 = vld [vmem:[%s5 + $0x2e8] sm:$0xff]
        %v2940 = vld [vmem:[%s5 + $0x2f0] sm:$0xff]
        %v2941 = vld [vmem:[%s5 + $0x2f8] sm:$0xff]
        %v2942 = vld [vmem:[%s5 + $0x300] sm:$0xff]
        %v2943 = vld [vmem:[%s5 + $0x308] sm:$0xff]
        %v2944 = vld [vmem:[%s5 + $0x310] sm:$0xff]
        %v2945 = vld [vmem:[%s5 + $0x318] sm:$0xff]
        %v2946 = vld [vmem:[%s5 + $0x320] sm:$0xff]
        %v2947 = vld [vmem:[%s5 + $0x328] sm:$0xff]
        %v2948 = vld [vmem:[%s5 + $0x330] sm:$0xff]
        %v2949 = vld [vmem:[%s5 + $0x338] sm:$0xff]
        %v2950 = vld [vmem:[%s5 + $0x340] sm:$0xff]
        %v2951 = vld [vmem:[%s5 + $0x348] sm:$0xff]
        %v2952 = vld [vmem:[%s5 + $0x350] sm:$0xff]
        %v2953 = vld [vmem:[%s5 + $0x358] sm:$0xff]
        %v2954 = vld [vmem:[%s5 + $0x360] sm:$0xff]
        %v2955 = vld [vmem:[%s5 + $0x368] sm:$0xff]
        %v2956 = vld [vmem:[%s5 + $0x370] sm:$0xff]
        %v2957 = vld [vmem:[%s5 + $0x378] sm:$0xff]
        %v2958 = vld [vmem:[%s5 + $0x380] sm:$0xff]
        %v2959 = vld [vmem:[%s5 + $0x388] sm:$0xff]
        %v2960 = vld [vmem:[%s5 + $0x390] sm:$0xff]
        %v2961 = vld [vmem:[%s5 + $0x398] sm:$0xff]
        %v2962 = vld [vmem:[%s5 + $0x3a0] sm:$0xff]
        %v2963 = vld [vmem:[%s5 + $0x3a8] sm:$0xff]
        %v2964 = vld [vmem:[%s5 + $0x3b0] sm:$0xff]
        %v2965 = vld [vmem:[%s5 + $0x3b8] sm:$0xff]
        %v2966 = vld [vmem:[%s5 + $0x3c0] sm:$0xff]
        %v2967 = vld [vmem:[%s5 + $0x3c8] sm:$0xff]
        %v2968 = vld [vmem:[%s5 + $0x3d0] sm:$0xff]
        %v2969 = vld [vmem:[%s5 + $0x3d8] sm:$0xff]
        %v2970 = vld [vmem:[%s5 + $0x3e0] sm:$0xff]
        %v2971 = vld [vmem:[%s5 + $0x3e8] sm:$0xff]
        %v2972 = vld [vmem:[%s5 + $0x3f0] sm:$0xff]
        %v2973 = vld [vmem:[%s5 + $0x3f8] sm:$0xff]
        %2974 = vmatpush.msra.mxu0 %v2861
        %2975 = vmatpush.msra.mxu0 %v2860
        %2976 = vmatpush.msra.mxu0 %v2859
        %2977 = vmatpush.msra.mxu0 %v2858
        %2978 = vmatpush.msra.mxu0 %v2857
        %2979 = vmatpush.msra.mxu0 %v2856
        %2980 = vmatpush.msra.mxu0 %v2855
        %2981 = vmatpush.msra.mxu0 %v2854
        %2982 = vmatpush.msra.mxu0 %v2853
        %2983 = vmatpush.msra.mxu0 %v2852
        %2984 = vmatpush.msra.mxu0 %v2851
        %2985 = vmatpush.msra.mxu0 %v2850
        %2986 = vmatpush.msra.mxu0 %v2849
        %2987 = vmatpush.msra.mxu0 %v2848
        %2988 = vmatpush.msra.mxu0 %v2847
        %2989 = vmatpush.msra.mxu0 %v2846
        %2990 = vmatmul.f32.gmra.mxu0 %v2830
        %v2991 = vpop.f32.mrf.mxu0
        %v2992 = vadd.f32 0.0, %v2991
        %2993 = vmatmul.f32.gmra.mxu0 %v2838
        %v2994 = vpop.f32.mrf.mxu0
        %v2995 = vadd.f32 0.0, %v2994
        %2996 = vdwg.mxu0
        %2997 = vmatpush.msra.mxu0 %v2877
        %2998 = vmatpush.msra.mxu0 %v2876
        %2999 = vmatpush.msra.mxu0 %v2875
        %3000 = vmatpush.msra.mxu0 %v2874
        %3001 = vmatpush.msra.mxu0 %v2873
        %3002 = vmatpush.msra.mxu0 %v2872
        %3003 = vmatpush.msra.mxu0 %v2871
        %3004 = vmatpush.msra.mxu0 %v2870
        %3005 = vmatpush.msra.mxu0 %v2869
        %3006 = vmatpush.msra.mxu0 %v2868
        %3007 = vmatpush.msra.mxu0 %v2867
        %3008 = vmatpush.msra.mxu0 %v2866
        %3009 = vmatpush.msra.mxu0 %v2865
        %3010 = vmatpush.msra.mxu0 %v2864
        %3011 = vmatpush.msra.mxu0 %v2863
        %3012 = vmatpush.msra.mxu0 %v2862
        %3013 = vmatmul.f32.gmra.mxu0 %v2831
        %v3014 = vpop.f32.mrf.mxu0
        %v3015 = vadd.f32 %v2992, %v3014
        %3016 = vmatmul.f32.gmra.mxu0 %v2839
        %v3017 = vpop.f32.mrf.mxu0
        %v3018 = vadd.f32 %v2995, %v3017
        %3019 = vdwg.mxu0
        %3020 = vmatpush.msra.mxu0 %v2893
        %3021 = vmatpush.msra.mxu0 %v2892
        %3022 = vmatpush.msra.mxu0 %v2891
        %3023 = vmatpush.msra.mxu0 %v2890
        %3024 = vmatpush.msra.mxu0 %v2889
        %3025 = vmatpush.msra.mxu0 %v2888
        %3026 = vmatpush.msra.mxu0 %v2887
        %3027 = vmatpush.msra.mxu0 %v2886
        %3028 = vmatpush.msra.mxu0 %v2885
        %3029 = vmatpush.msra.mxu0 %v2884
        %3030 = vmatpush.msra.mxu0 %v2883
        %3031 = vmatpush.msra.mxu0 %v2882
        %3032 = vmatpush.msra.mxu0 %v2881
        %3033 = vmatpush.msra.mxu0 %v2880
        %3034 = vmatpush.msra.mxu0 %v2879
        %3035 = vmatpush.msra.mxu0 %v2878
        %3036 = vmatmul.f32.gmra.mxu0 %v2832
        %v3037 = vpop.f32.mrf.mxu0
        %v3038 = vadd.f32 %v3015, %v3037
        %3039 = vmatmul.f32.gmra.mxu0 %v2840
        %v3040 = vpop.f32.mrf.mxu0
        %v3041 = vadd.f32 %v3018, %v3040
        %3042 = vdwg.mxu0
        %3043 = vmatpush.msra.mxu0 %v2909
        %3044 = vmatpush.msra.mxu0 %v2908
        %3045 = vmatpush.msra.mxu0 %v2907
        %3046 = vmatpush.msra.mxu0 %v2906
        %3047 = vmatpush.msra.mxu0 %v2905
        %3048 = vmatpush.msra.mxu0 %v2904
        %3049 = vmatpush.msra.mxu0 %v2903
        %3050 = vmatpush.msra.mxu0 %v2902
        %3051 = vmatpush.msra.mxu0 %v2901
        %3052 = vmatpush.msra.mxu0 %v2900
        %3053 = vmatpush.msra.mxu0 %v2899
        %3054 = vmatpush.msra.mxu0 %v2898
        %3055 = vmatpush.msra.mxu0 %v2897
        %3056 = vmatpush.msra.mxu0 %v2896
        %3057 = vmatpush.msra.mxu0 %v2895
        %3058 = vmatpush.msra.mxu0 %v2894
        %3059 = vmatmul.f32.gmra.mxu0 %v2833
        %v3060 = vpop.f32.mrf.mxu0
        %v3061 = vadd.f32 %v3038, %v3060
        %3062 = vmatmul.f32.gmra.mxu0 %v2841
        %v3063 = vpop.f32.mrf.mxu0
        %v3064 = vadd.f32 %v3041, %v3063
        %3065 = vdwg.mxu0
        %3066 = vmatpush.msra.mxu0 %v2925
        %3067 = vmatpush.msra.mxu0 %v2924
        %3068 = vmatpush.msra.mxu0 %v2923
        %3069 = vmatpush.msra.mxu0 %v2922
        %3070 = vmatpush.msra.mxu0 %v2921
        %3071 = vmatpush.msra.mxu0 %v2920
        %3072 = vmatpush.msra.mxu0 %v2919
        %3073 = vmatpush.msra.mxu0 %v2918
        %3074 = vmatpush.msra.mxu0 %v2917
        %3075 = vmatpush.msra.mxu0 %v2916
        %3076 = vmatpush.msra.mxu0 %v2915
        %3077 = vmatpush.msra.mxu0 %v2914
        %3078 = vmatpush.msra.mxu0 %v2913
        %3079 = vmatpush.msra.mxu0 %v2912
        %3080 = vmatpush.msra.mxu0 %v2911
        %3081 = vmatpush.msra.mxu0 %v2910
        %3082 = vmatmul.f32.gmra.mxu0 %v2834
        %v3083 = vpop.f32.mrf.mxu0
        %v3084 = vadd.f32 %v3061, %v3083
        %3085 = vmatmul.f32.gmra.mxu0 %v2842
        %v3086 = vpop.f32.mrf.mxu0
        %v3087 = vadd.f32 %v3064, %v3086
        %3088 = vdwg.mxu0
        %3089 = vmatpush.msra.mxu0 %v2941
        %3090 = vmatpush.msra.mxu0 %v2940
        %3091 = vmatpush.msra.mxu0 %v2939
        %3092 = vmatpush.msra.mxu0 %v2938
        %3093 = vmatpush.msra.mxu0 %v2937
        %3094 = vmatpush.msra.mxu0 %v2936
        %3095 = vmatpush.msra.mxu0 %v2935
        %3096 = vmatpush.msra.mxu0 %v2934
        %3097 = vmatpush.msra.mxu0 %v2933
        %3098 = vmatpush.msra.mxu0 %v2932
        %3099 = vmatpush.msra.mxu0 %v2931
        %3100 = vmatpush.msra.mxu0 %v2930
        %3101 = vmatpush.msra.mxu0 %v2929
        %3102 = vmatpush.msra.mxu0 %v2928
        %3103 = vmatpush.msra.mxu0 %v2927
        %3104 = vmatpush.msra.mxu0 %v2926
        %3105 = vmatmul.f32.gmra.mxu0 %v2835
        %v3106 = vpop.f32.mrf.mxu0
        %v3107 = vadd.f32 %v3084, %v3106
        %3108 = vmatmul.f32.gmra.mxu0 %v2843
        %v3109 = vpop.f32.mrf.mxu0
        %v3110 = vadd.f32 %v3087, %v3109
        %3111 = vdwg.mxu0
        %3112 = vmatpush.msra.mxu0 %v2957
        %3113 = vmatpush.msra.mxu0 %v2956
        %3114 = vmatpush.msra.mxu0 %v2955
        %3115 = vmatpush.msra.mxu0 %v2954
        %3116 = vmatpush.msra.mxu0 %v2953
        %3117 = vmatpush.msra.mxu0 %v2952
        %3118 = vmatpush.msra.mxu0 %v2951
        %3119 = vmatpush.msra.mxu0 %v2950
        %3120 = vmatpush.msra.mxu0 %v2949
        %3121 = vmatpush.msra.mxu0 %v2948
        %3122 = vmatpush.msra.mxu0 %v2947
        %3123 = vmatpush.msra.mxu0 %v2946
        %3124 = vmatpush.msra.mxu0 %v2945
        %3125 = vmatpush.msra.mxu0 %v2944
        %3126 = vmatpush.msra.mxu0 %v2943
        %3127 = vmatpush.msra.mxu0 %v2942
        %3128 = vmatmul.f32.gmra.mxu0 %v2836
        %v3129 = vpop.f32.mrf.mxu0
        %v3130 = vadd.f32 %v3107, %v3129
        %3131 = vmatmul.f32.gmra.mxu0 %v2844
        %v3132 = vpop.f32.mrf.mxu0
        %v3133 = vadd.f32 %v3110, %v3132
        %3134 = vdwg.mxu0
        %3135 = vmatpush.msra.mxu0 %v2973
        %3136 = vmatpush.msra.mxu0 %v2972
        %3137 = vmatpush.msra.mxu0 %v2971
        %3138 = vmatpush.msra.mxu0 %v2970
        %3139 = vmatpush.msra.mxu0 %v2969
        %3140 = vmatpush.msra.mxu0 %v2968
        %3141 = vmatpush.msra.mxu0 %v2967
        %3142 = vmatpush.msra.mxu0 %v2966
        %3143 = vmatpush.msra.mxu0 %v2965
        %3144 = vmatpush.msra.mxu0 %v2964
        %3145 = vmatpush.msra.mxu0 %v2963
        %3146 = vmatpush.msra.mxu0 %v2962
        %3147 = vmatpush.msra.mxu0 %v2961
        %3148 = vmatpush.msra.mxu0 %v2960
        %3149 = vmatpush.msra.mxu0 %v2959
        %3150 = vmatpush.msra.mxu0 %v2958
        %3151 = vmatmul.f32.gmra.mxu0 %v2837
        %v3152 = vpop.f32.mrf.mxu0
        %v3153 = vadd.f32 %v3130, %v3152
        %3154 = vmatmul.f32.gmra.mxu0 %v2845
        %v3155 = vpop.f32.mrf.mxu0
        %v3156 = vadd.f32 %v3133, %v3155
        %3157 = vdwg.mxu0
        %v3158 = vld [vmem:[%s7] sm:$0x1]
        %v3159 = vld [vmem:[%s6] sm:$0xff]
        %v3160 = vld [vmem:[%s6 + $0x8] sm:$0xff]
        %v3161 = vld [vmem:[%s6 + $0x10] sm:$0xff]
        %v3162 = vld [vmem:[%s6 + $0x18] sm:$0xff]
        %v3164 = vsel %vm1543, %v3153, 0
        %v3167 = vsel %vm1543, %v3156, 0
        %3169 = vmatpush.msra.mxu0 0.0
        %3170 = vmatpush.msra.mxu0 0.0
        %3171 = vmatpush.msra.mxu0 0.0
        %3172 = vmatpush.msra.mxu0 0.0
        %3173 = vmatpush.msra.mxu0 0.0
        %3174 = vmatpush.msra.mxu0 0.0
        %3175 = vmatpush.msra.mxu0 0.0
        %3176 = vmatpush.msra.mxu0 0.0
        %3177 = vmatpush.msra.mxu0 0.0
        %3178 = vmatpush.msra.mxu0 0.0
        %3179 = vmatpush.msra.mxu0 0.0
        %3180 = vmatpush.msra.mxu0 0.0
        %3181 = vmatpush.msra.mxu0 %v3162
        %3182 = vmatpush.msra.mxu0 %v3161
        %3183 = vmatpush.msra.mxu0 %v3160
        %3184 = vmatpush.msra.mxu0 %v3159
        %3185 = vmatmul.f32.gmra.mxu0 %v3164
        %v3186 = vpop.f32.mrf.mxu0
        %v3187 = vadd.f32 0.0, %v3186
        %3188 = vmatmul.f32.gmra.mxu0 %v3167
        %v3189 = vpop.f32.mrf.mxu0
        %3190 = vdwg.mxu0
        %v3191 = vadd.f32 %v3158, %v3187
        %s3192 = scalar_lea.vmem %s6, 32
        %v3193 = vld [vmem:[%s3192] sm:$0xff]
        %v3194 = vld [vmem:[%s3192 + $0x8] sm:$0xff]
        %v3195 = vld [vmem:[%s3192 + $0x10] sm:$0xff]
        %v3196 = vld [vmem:[%s3192 + $0x18] sm:$0xff]
        %3197 = vmatpush.msra.mxu0 0.0
        %3198 = vmatpush.msra.mxu0 0.0
        %3199 = vmatpush.msra.mxu0 0.0
        %3200 = vmatpush.msra.mxu0 0.0
        %3201 = vmatpush.msra.mxu0 0.0
        %3202 = vmatpush.msra.mxu0 0.0
        %3203 = vmatpush.msra.mxu0 0.0
        %3204 = vmatpush.msra.mxu0 0.0
        %3205 = vmatpush.msra.mxu0 0.0
        %3206 = vmatpush.msra.mxu0 0.0
        %3207 = vmatpush.msra.mxu0 0.0
        %3208 = vmatpush.msra.mxu0 0.0
        %3209 = vmatpush.msra.mxu0 %v3196
        %3210 = vmatpush.msra.mxu0 %v3195
        %3211 = vmatpush.msra.mxu0 %v3194
        %3212 = vmatpush.msra.mxu0 %v3193
        %3213 = vmatmul.f32.gmra.mxu0 %v3164
        %v3214 = vpop.f32.mrf.mxu0
        %v3215 = vadd.f32 0.0, %v3214
        %3216 = vmatmul.f32.gmra.mxu0 %v3167
        %v3217 = vpop.f32.mrf.mxu0
        %3218 = vdwg.mxu0
        %3220 = vst [vmem:[#allocation1] sm:$0xff] %v3215
        %s3221 = scalar_lea.vmem [#allocation1], 1
        %v3222 = vld [vmem:[%s3221] ss:$9 sm:$0xff]
        %v3224 = vadd.f32 %v3191, %v3222
        %s3225 = scalar_lea.vmem %s6, 64
        %v3226 = vld [vmem:[%s3225] sm:$0xff]
        %v3227 = vld [vmem:[%s3225 + $0x8] sm:$0xff]
        %v3228 = vld [vmem:[%s3225 + $0x10] sm:$0xff]
        %v3229 = vld [vmem:[%s3225 + $0x18] sm:$0xff]
        %3230 = vmatpush.msra.mxu0 0.0
        %3231 = vmatpush.msra.mxu0 0.0
        %3232 = vmatpush.msra.mxu0 0.0
        %3233 = vmatpush.msra.mxu0 0.0
        %3234 = vmatpush.msra.mxu0 0.0
        %3235 = vmatpush.msra.mxu0 0.0
        %3236 = vmatpush.msra.mxu0 0.0
        %3237 = vmatpush.msra.mxu0 0.0
        %3238 = vmatpush.msra.mxu0 0.0
        %3239 = vmatpush.msra.mxu0 0.0
        %3240 = vmatpush.msra.mxu0 0.0
        %3241 = vmatpush.msra.mxu0 0.0
        %3242 = vmatpush.msra.mxu0 %v3229
        %3243 = vmatpush.msra.mxu0 %v3228
        %3244 = vmatpush.msra.mxu0 %v3227
        %3245 = vmatpush.msra.mxu0 %v3226
        %3246 = vmatmul.f32.gmra.mxu0 %v3164
        %v3247 = vpop.f32.mrf.mxu0
        %v3248 = vadd.f32 0.0, %v3247
        %3249 = vmatmul.f32.gmra.mxu0 %v3167
        %v3250 = vpop.f32.mrf.mxu0
        %3251 = vdwg.mxu0
        %3253 = vst [vmem:[#allocation1] sm:$0xff] %v3248
        %s3254 = scalar_lea.vmem [#allocation1], 2
        %v3255 = vld [vmem:[%s3254] ss:$9 sm:$0xff]
        %v3257 = vadd.f32 %v3224, %v3255
        %s3258 = scalar_lea.vmem %s6, 96
        %v3259 = vld [vmem:[%s3258] sm:$0xff]
        %v3260 = vld [vmem:[%s3258 + $0x8] sm:$0xff]
        %v3261 = vld [vmem:[%s3258 + $0x10] sm:$0xff]
        %v3262 = vld [vmem:[%s3258 + $0x18] sm:$0xff]
        %3263 = vmatpush.msra.mxu0 0.0
        %3264 = vmatpush.msra.mxu0 0.0
        %3265 = vmatpush.msra.mxu0 0.0
        %3266 = vmatpush.msra.mxu0 0.0
        %3267 = vmatpush.msra.mxu0 0.0
        %3268 = vmatpush.msra.mxu0 0.0
        %3269 = vmatpush.msra.mxu0 0.0
        %3270 = vmatpush.msra.mxu0 0.0
        %3271 = vmatpush.msra.mxu0 0.0
        %3272 = vmatpush.msra.mxu0 0.0
        %3273 = vmatpush.msra.mxu0 0.0
        %3274 = vmatpush.msra.mxu0 0.0
        %3275 = vmatpush.msra.mxu0 %v3262
        %3276 = vmatpush.msra.mxu0 %v3261
        %3277 = vmatpush.msra.mxu0 %v3260
        %3278 = vmatpush.msra.mxu0 %v3259
        %3279 = vmatmul.f32.gmra.mxu0 %v3164
        %v3280 = vpop.f32.mrf.mxu0
        %v3281 = vadd.f32 0.0, %v3280
        %3282 = vmatmul.f32.gmra.mxu0 %v3167
        %v3283 = vpop.f32.mrf.mxu0
        %3284 = vdwg.mxu0
        %3286 = vst [vmem:[#allocation1] sm:$0xff] %v3281
        %s3287 = scalar_lea.vmem [#allocation1], 3
        %v3288 = vld [vmem:[%s3287] ss:$9 sm:$0xff]
        %v3290 = vadd.f32 %v3257, %v3288
        %s3291 = scalar_lea.vmem %s6, 128
        %v3292 = vld [vmem:[%s3291] sm:$0xff]
        %v3293 = vld [vmem:[%s3291 + $0x8] sm:$0xff]
        %v3294 = vld [vmem:[%s3291 + $0x10] sm:$0xff]
        %v3295 = vld [vmem:[%s3291 + $0x18] sm:$0xff]
        %3296 = vmatpush.msra.mxu0 0.0
        %3297 = vmatpush.msra.mxu0 0.0
        %3298 = vmatpush.msra.mxu0 0.0
        %3299 = vmatpush.msra.mxu0 0.0
        %3300 = vmatpush.msra.mxu0 0.0
        %3301 = vmatpush.msra.mxu0 0.0
        %3302 = vmatpush.msra.mxu0 0.0
        %3303 = vmatpush.msra.mxu0 0.0
        %3304 = vmatpush.msra.mxu0 0.0
        %3305 = vmatpush.msra.mxu0 0.0
        %3306 = vmatpush.msra.mxu0 0.0
        %3307 = vmatpush.msra.mxu0 0.0
        %3308 = vmatpush.msra.mxu0 %v3295
        %3309 = vmatpush.msra.mxu0 %v3294
        %3310 = vmatpush.msra.mxu0 %v3293
        %3311 = vmatpush.msra.mxu0 %v3292
        %3312 = vmatmul.f32.gmra.mxu0 %v3164
        %v3313 = vpop.f32.mrf.mxu0
        %v3314 = vadd.f32 0.0, %v3313
        %3315 = vmatmul.f32.gmra.mxu0 %v3167
        %v3316 = vpop.f32.mrf.mxu0
        %3317 = vdwg.mxu0
        %3319 = vst [vmem:[#allocation1] sm:$0xff] %v3314
        %s3320 = scalar_lea.vmem [#allocation1], 4
        %v3321 = vld [vmem:[%s3320] ss:$9 sm:$0xff]
        %v3323 = vadd.f32 %v3290, %v3321
        %s3324 = scalar_lea.vmem %s6, 160
        %v3325 = vld [vmem:[%s3324] sm:$0xff]
        %v3326 = vld [vmem:[%s3324 + $0x8] sm:$0xff]
        %v3327 = vld [vmem:[%s3324 + $0x10] sm:$0xff]
        %v3328 = vld [vmem:[%s3324 + $0x18] sm:$0xff]
        %3329 = vmatpush.msra.mxu0 0.0
        %3330 = vmatpush.msra.mxu0 0.0
        %3331 = vmatpush.msra.mxu0 0.0
        %3332 = vmatpush.msra.mxu0 0.0
        %3333 = vmatpush.msra.mxu0 0.0
        %3334 = vmatpush.msra.mxu0 0.0
        %3335 = vmatpush.msra.mxu0 0.0
        %3336 = vmatpush.msra.mxu0 0.0
        %3337 = vmatpush.msra.mxu0 0.0
        %3338 = vmatpush.msra.mxu0 0.0
        %3339 = vmatpush.msra.mxu0 0.0
        %3340 = vmatpush.msra.mxu0 0.0
        %3341 = vmatpush.msra.mxu0 %v3328
        %3342 = vmatpush.msra.mxu0 %v3327
        %3343 = vmatpush.msra.mxu0 %v3326
        %3344 = vmatpush.msra.mxu0 %v3325
        %3345 = vmatmul.f32.gmra.mxu0 %v3164
        %v3346 = vpop.f32.mrf.mxu0
        %v3347 = vadd.f32 0.0, %v3346
        %3348 = vmatmul.f32.gmra.mxu0 %v3167
        %v3349 = vpop.f32.mrf.mxu0
        %3350 = vdwg.mxu0
        %3352 = vst [vmem:[#allocation1] sm:$0xff] %v3347
        %s3353 = scalar_lea.vmem [#allocation1], 5
        %v3354 = vld [vmem:[%s3353] ss:$9 sm:$0xff]
        %v3356 = vadd.f32 %v3323, %v3354
        %s3357 = scalar_lea.vmem %s6, 192
        %v3358 = vld [vmem:[%s3357] sm:$0xff]
        %v3359 = vld [vmem:[%s3357 + $0x8] sm:$0xff]
        %v3360 = vld [vmem:[%s3357 + $0x10] sm:$0xff]
        %v3361 = vld [vmem:[%s3357 + $0x18] sm:$0xff]
        %3362 = vmatpush.msra.mxu0 0.0
        %3363 = vmatpush.msra.mxu0 0.0
        %3364 = vmatpush.msra.mxu0 0.0
        %3365 = vmatpush.msra.mxu0 0.0
        %3366 = vmatpush.msra.mxu0 0.0
        %3367 = vmatpush.msra.mxu0 0.0
        %3368 = vmatpush.msra.mxu0 0.0
        %3369 = vmatpush.msra.mxu0 0.0
        %3370 = vmatpush.msra.mxu0 0.0
        %3371 = vmatpush.msra.mxu0 0.0
        %3372 = vmatpush.msra.mxu0 0.0
        %3373 = vmatpush.msra.mxu0 0.0
        %3374 = vmatpush.msra.mxu0 %v3361
        %3375 = vmatpush.msra.mxu0 %v3360
        %3376 = vmatpush.msra.mxu0 %v3359
        %3377 = vmatpush.msra.mxu0 %v3358
        %3378 = vmatmul.f32.gmra.mxu0 %v3164
        %v3379 = vpop.f32.mrf.mxu0
        %v3380 = vadd.f32 0.0, %v3379
        %3381 = vmatmul.f32.gmra.mxu0 %v3167
        %v3382 = vpop.f32.mrf.mxu0
        %3383 = vdwg.mxu0
        %3385 = vst [vmem:[#allocation1] sm:$0xff] %v3380
        %s3386 = scalar_lea.vmem [#allocation1], 6
        %v3387 = vld [vmem:[%s3386] ss:$9 sm:$0xff]
        %v3389 = vadd.f32 %v3356, %v3387
        %s3390 = scalar_lea.vmem %s6, 224
        %v3391 = vld [vmem:[%s3390] sm:$0xff]
        %v3392 = vld [vmem:[%s3390 + $0x8] sm:$0xff]
        %v3393 = vld [vmem:[%s3390 + $0x10] sm:$0xff]
        %v3394 = vld [vmem:[%s3390 + $0x18] sm:$0xff]
        %3395 = vmatpush.msra.mxu0 0.0
        %3396 = vmatpush.msra.mxu0 0.0
        %3397 = vmatpush.msra.mxu0 0.0
        %3398 = vmatpush.msra.mxu0 0.0
        %3399 = vmatpush.msra.mxu0 0.0
        %3400 = vmatpush.msra.mxu0 0.0
        %3401 = vmatpush.msra.mxu0 0.0
        %3402 = vmatpush.msra.mxu0 0.0
        %3403 = vmatpush.msra.mxu0 0.0
        %3404 = vmatpush.msra.mxu0 0.0
        %3405 = vmatpush.msra.mxu0 0.0
        %3406 = vmatpush.msra.mxu0 0.0
        %3407 = vmatpush.msra.mxu0 %v3394
        %3408 = vmatpush.msra.mxu0 %v3393
        %3409 = vmatpush.msra.mxu0 %v3392
        %3410 = vmatpush.msra.mxu0 %v3391
        %3411 = vmatmul.f32.gmra.mxu0 %v3164
        %v3412 = vpop.f32.mrf.mxu0
        %v3413 = vadd.f32 0.0, %v3412
        %3414 = vmatmul.f32.gmra.mxu0 %v3167
        %v3415 = vpop.f32.mrf.mxu0
        %3416 = vdwg.mxu0
        %3418 = vst [vmem:[#allocation1] sm:$0xff] %v3413
        %s3419 = scalar_lea.vmem [#allocation1], 7
        %v3420 = vld [vmem:[%s3419] ss:$9 sm:$0xff]
        %v3422 = vadd.f32 %v3389, %v3420
        %s3423 = scalar_lea.vmem %s6, 256
        %v3424 = vld [vmem:[%s3423] sm:$0xff]
        %v3425 = vld [vmem:[%s3423 + $0x8] sm:$0xff]
        %v3426 = vld [vmem:[%s3423 + $0x10] sm:$0xff]
        %v3427 = vld [vmem:[%s3423 + $0x18] sm:$0xff]
        %3428 = vmatpush.msra.mxu0 0.0
        %3429 = vmatpush.msra.mxu0 0.0
        %3430 = vmatpush.msra.mxu0 0.0
        %3431 = vmatpush.msra.mxu0 0.0
        %3432 = vmatpush.msra.mxu0 0.0
        %3433 = vmatpush.msra.mxu0 0.0
        %3434 = vmatpush.msra.mxu0 0.0
        %3435 = vmatpush.msra.mxu0 0.0
        %3436 = vmatpush.msra.mxu0 0.0
        %3437 = vmatpush.msra.mxu0 0.0
        %3438 = vmatpush.msra.mxu0 0.0
        %3439 = vmatpush.msra.mxu0 0.0
        %3440 = vmatpush.msra.mxu0 %v3427
        %3441 = vmatpush.msra.mxu0 %v3426
        %3442 = vmatpush.msra.mxu0 %v3425
        %3443 = vmatpush.msra.mxu0 %v3424
        %3444 = vmatmul.f32.gmra.mxu0 %v3164
        %v3445 = vpop.f32.mrf.mxu0
        %3446 = vmatmul.f32.gmra.mxu0 %v3167
        %v3447 = vpop.f32.mrf.mxu0
        %v3448 = vadd.f32 0.0, %v3447
        %3449 = vdwg.mxu0
        %v3450 = vadd.f32 %v3422, %v3448
        %s3451 = scalar_lea.vmem %s6, 288
        %v3452 = vld [vmem:[%s3451] sm:$0xff]
        %v3453 = vld [vmem:[%s3451 + $0x8] sm:$0xff]
        %v3454 = vld [vmem:[%s3451 + $0x10] sm:$0xff]
        %v3455 = vld [vmem:[%s3451 + $0x18] sm:$0xff]
        %3456 = vmatpush.msra.mxu0 0.0
        %3457 = vmatpush.msra.mxu0 0.0
        %3458 = vmatpush.msra.mxu0 0.0
        %3459 = vmatpush.msra.mxu0 0.0
        %3460 = vmatpush.msra.mxu0 0.0
        %3461 = vmatpush.msra.mxu0 0.0
        %3462 = vmatpush.msra.mxu0 0.0
        %3463 = vmatpush.msra.mxu0 0.0
        %3464 = vmatpush.msra.mxu0 0.0
        %3465 = vmatpush.msra.mxu0 0.0
        %3466 = vmatpush.msra.mxu0 0.0
        %3467 = vmatpush.msra.mxu0 0.0
        %3468 = vmatpush.msra.mxu0 %v3455
        %3469 = vmatpush.msra.mxu0 %v3454
        %3470 = vmatpush.msra.mxu0 %v3453
        %3471 = vmatpush.msra.mxu0 %v3452
        %3472 = vmatmul.f32.gmra.mxu0 %v3164
        %v3473 = vpop.f32.mrf.mxu0
        %3474 = vmatmul.f32.gmra.mxu0 %v3167
        %v3475 = vpop.f32.mrf.mxu0
        %v3476 = vadd.f32 0.0, %v3475
        %3477 = vdwg.mxu0
        %3479 = vst [vmem:[#allocation1] sm:$0xff] %v3476
        %s3480 = scalar_lea.vmem [#allocation1], 1
        %v3481 = vld [vmem:[%s3480] ss:$9 sm:$0xff]
        %v3483 = vadd.f32 %v3450, %v3481
        %s3484 = scalar_lea.vmem %s6, 320
        %v3485 = vld [vmem:[%s3484] sm:$0xff]
        %v3486 = vld [vmem:[%s3484 + $0x8] sm:$0xff]
        %v3487 = vld [vmem:[%s3484 + $0x10] sm:$0xff]
        %v3488 = vld [vmem:[%s3484 + $0x18] sm:$0xff]
        %3489 = vmatpush.msra.mxu0 0.0
        %3490 = vmatpush.msra.mxu0 0.0
        %3491 = vmatpush.msra.mxu0 0.0
        %3492 = vmatpush.msra.mxu0 0.0
        %3493 = vmatpush.msra.mxu0 0.0
        %3494 = vmatpush.msra.mxu0 0.0
        %3495 = vmatpush.msra.mxu0 0.0
        %3496 = vmatpush.msra.mxu0 0.0
        %3497 = vmatpush.msra.mxu0 0.0
        %3498 = vmatpush.msra.mxu0 0.0
        %3499 = vmatpush.msra.mxu0 0.0
        %3500 = vmatpush.msra.mxu0 0.0
        %3501 = vmatpush.msra.mxu0 %v3488
        %3502 = vmatpush.msra.mxu0 %v3487
        %3503 = vmatpush.msra.mxu0 %v3486
        %3504 = vmatpush.msra.mxu0 %v3485
        %3505 = vmatmul.f32.gmra.mxu0 %v3164
        %v3506 = vpop.f32.mrf.mxu0
        %3507 = vmatmul.f32.gmra.mxu0 %v3167
        %v3508 = vpop.f32.mrf.mxu0
        %v3509 = vadd.f32 0.0, %v3508
        %3510 = vdwg.mxu0
        %3512 = vst [vmem:[#allocation1] sm:$0xff] %v3509
        %s3513 = scalar_lea.vmem [#allocation1], 2
        %v3514 = vld [vmem:[%s3513] ss:$9 sm:$0xff]
        %v3516 = vadd.f32 %v3483, %v3514
        %s3517 = scalar_lea.vmem %s6, 352
        %v3518 = vld [vmem:[%s3517] sm:$0xff]
        %v3519 = vld [vmem:[%s3517 + $0x8] sm:$0xff]
        %v3520 = vld [vmem:[%s3517 + $0x10] sm:$0xff]
        %v3521 = vld [vmem:[%s3517 + $0x18] sm:$0xff]
        %3522 = vmatpush.msra.mxu0 0.0
        %3523 = vmatpush.msra.mxu0 0.0
        %3524 = vmatpush.msra.mxu0 0.0
        %3525 = vmatpush.msra.mxu0 0.0
        %3526 = vmatpush.msra.mxu0 0.0
        %3527 = vmatpush.msra.mxu0 0.0
        %3528 = vmatpush.msra.mxu0 0.0
        %3529 = vmatpush.msra.mxu0 0.0
        %3530 = vmatpush.msra.mxu0 0.0
        %3531 = vmatpush.msra.mxu0 0.0
        %3532 = vmatpush.msra.mxu0 0.0
        %3533 = vmatpush.msra.mxu0 0.0
        %3534 = vmatpush.msra.mxu0 %v3521
        %3535 = vmatpush.msra.mxu0 %v3520
        %3536 = vmatpush.msra.mxu0 %v3519
        %3537 = vmatpush.msra.mxu0 %v3518
        %3538 = vmatmul.f32.gmra.mxu0 %v3164
        %v3539 = vpop.f32.mrf.mxu0
        %3540 = vmatmul.f32.gmra.mxu0 %v3167
        %v3541 = vpop.f32.mrf.mxu0
        %v3542 = vadd.f32 0.0, %v3541
        %3543 = vdwg.mxu0
        %3545 = vst [vmem:[#allocation1] sm:$0xff] %v3542
        %s3546 = scalar_lea.vmem [#allocation1], 3
        %v3547 = vld [vmem:[%s3546] ss:$9 sm:$0xff]
        %v3549 = vadd.f32 %v3516, %v3547
        %s3550 = scalar_lea.vmem %s6, 384
        %v3551 = vld [vmem:[%s3550] sm:$0xff]
        %v3552 = vld [vmem:[%s3550 + $0x8] sm:$0xff]
        %v3553 = vld [vmem:[%s3550 + $0x10] sm:$0xff]
        %v3554 = vld [vmem:[%s3550 + $0x18] sm:$0xff]
        %3555 = vmatpush.msra.mxu0 0.0
        %3556 = vmatpush.msra.mxu0 0.0
        %3557 = vmatpush.msra.mxu0 0.0
        %3558 = vmatpush.msra.mxu0 0.0
        %3559 = vmatpush.msra.mxu0 0.0
        %3560 = vmatpush.msra.mxu0 0.0
        %3561 = vmatpush.msra.mxu0 0.0
        %3562 = vmatpush.msra.mxu0 0.0
        %3563 = vmatpush.msra.mxu0 0.0
        %3564 = vmatpush.msra.mxu0 0.0
        %3565 = vmatpush.msra.mxu0 0.0
        %3566 = vmatpush.msra.mxu0 0.0
        %3567 = vmatpush.msra.mxu0 %v3554
        %3568 = vmatpush.msra.mxu0 %v3553
        %3569 = vmatpush.msra.mxu0 %v3552
        %3570 = vmatpush.msra.mxu0 %v3551
        %3571 = vmatmul.f32.gmra.mxu0 %v3164
        %v3572 = vpop.f32.mrf.mxu0
        %3573 = vmatmul.f32.gmra.mxu0 %v3167
        %v3574 = vpop.f32.mrf.mxu0
        %v3575 = vadd.f32 0.0, %v3574
        %3576 = vdwg.mxu0
        %3578 = vst [vmem:[#allocation1] sm:$0xff] %v3575
        %s3579 = scalar_lea.vmem [#allocation1], 4
        %v3580 = vld [vmem:[%s3579] ss:$9 sm:$0xff]
        %v3582 = vadd.f32 %v3549, %v3580
        %s3583 = scalar_lea.vmem %s6, 416
        %v3584 = vld [vmem:[%s3583] sm:$0xff]
        %v3585 = vld [vmem:[%s3583 + $0x8] sm:$0xff]
        %v3586 = vld [vmem:[%s3583 + $0x10] sm:$0xff]
        %v3587 = vld [vmem:[%s3583 + $0x18] sm:$0xff]
        %3588 = vmatpush.msra.mxu0 0.0
        %3589 = vmatpush.msra.mxu0 0.0
        %3590 = vmatpush.msra.mxu0 0.0
        %3591 = vmatpush.msra.mxu0 0.0
        %3592 = vmatpush.msra.mxu0 0.0
        %3593 = vmatpush.msra.mxu0 0.0
        %3594 = vmatpush.msra.mxu0 0.0
        %3595 = vmatpush.msra.mxu0 0.0
        %3596 = vmatpush.msra.mxu0 0.0
        %3597 = vmatpush.msra.mxu0 0.0
        %3598 = vmatpush.msra.mxu0 0.0
        %3599 = vmatpush.msra.mxu0 0.0
        %3600 = vmatpush.msra.mxu0 %v3587
        %3601 = vmatpush.msra.mxu0 %v3586
        %3602 = vmatpush.msra.mxu0 %v3585
        %3603 = vmatpush.msra.mxu0 %v3584
        %3604 = vmatmul.f32.gmra.mxu0 %v3164
        %v3605 = vpop.f32.mrf.mxu0
        %3606 = vmatmul.f32.gmra.mxu0 %v3167
        %v3607 = vpop.f32.mrf.mxu0
        %v3608 = vadd.f32 0.0, %v3607
        %3609 = vdwg.mxu0
        %3611 = vst [vmem:[#allocation1] sm:$0xff] %v3608
        %s3612 = scalar_lea.vmem [#allocation1], 5
        %v3613 = vld [vmem:[%s3612] ss:$9 sm:$0xff]
        %v3615 = vadd.f32 %v3582, %v3613
        %s3616 = scalar_lea.vmem %s6, 448
        %v3617 = vld [vmem:[%s3616] sm:$0xff]
        %v3618 = vld [vmem:[%s3616 + $0x8] sm:$0xff]
        %v3619 = vld [vmem:[%s3616 + $0x10] sm:$0xff]
        %v3620 = vld [vmem:[%s3616 + $0x18] sm:$0xff]
        %3621 = vmatpush.msra.mxu0 0.0
        %3622 = vmatpush.msra.mxu0 0.0
        %3623 = vmatpush.msra.mxu0 0.0
        %3624 = vmatpush.msra.mxu0 0.0
        %3625 = vmatpush.msra.mxu0 0.0
        %3626 = vmatpush.msra.mxu0 0.0
        %3627 = vmatpush.msra.mxu0 0.0
        %3628 = vmatpush.msra.mxu0 0.0
        %3629 = vmatpush.msra.mxu0 0.0
        %3630 = vmatpush.msra.mxu0 0.0
        %3631 = vmatpush.msra.mxu0 0.0
        %3632 = vmatpush.msra.mxu0 0.0
        %3633 = vmatpush.msra.mxu0 %v3620
        %3634 = vmatpush.msra.mxu0 %v3619
        %3635 = vmatpush.msra.mxu0 %v3618
        %3636 = vmatpush.msra.mxu0 %v3617
        %3637 = vmatmul.f32.gmra.mxu0 %v3164
        %v3638 = vpop.f32.mrf.mxu0
        %3639 = vmatmul.f32.gmra.mxu0 %v3167
        %v3640 = vpop.f32.mrf.mxu0
        %v3641 = vadd.f32 0.0, %v3640
        %3642 = vdwg.mxu0
        %3644 = vst [vmem:[#allocation1] sm:$0xff] %v3641
        %s3645 = scalar_lea.vmem [#allocation1], 6
        %v3646 = vld [vmem:[%s3645] ss:$9 sm:$0xff]
        %v3648 = vadd.f32 %v3615, %v3646
        %s3649 = scalar_lea.vmem %s6, 480
        %v3650 = vld [vmem:[%s3649] sm:$0xff]
        %v3651 = vld [vmem:[%s3649 + $0x8] sm:$0xff]
        %v3652 = vld [vmem:[%s3649 + $0x10] sm:$0xff]
        %v3653 = vld [vmem:[%s3649 + $0x18] sm:$0xff]
        %3654 = vmatpush.msra.mxu0 0.0
        %3655 = vmatpush.msra.mxu0 0.0
        %3656 = vmatpush.msra.mxu0 0.0
        %3657 = vmatpush.msra.mxu0 0.0
        %3658 = vmatpush.msra.mxu0 0.0
        %3659 = vmatpush.msra.mxu0 0.0
        %3660 = vmatpush.msra.mxu0 0.0
        %3661 = vmatpush.msra.mxu0 0.0
        %3662 = vmatpush.msra.mxu0 0.0
        %3663 = vmatpush.msra.mxu0 0.0
        %3664 = vmatpush.msra.mxu0 0.0
        %3665 = vmatpush.msra.mxu0 0.0
        %3666 = vmatpush.msra.mxu0 %v3653
        %3667 = vmatpush.msra.mxu0 %v3652
        %3668 = vmatpush.msra.mxu0 %v3651
        %3669 = vmatpush.msra.mxu0 %v3650
        %3670 = vmatmul.f32.gmra.mxu0 %v3164
        %v3671 = vpop.f32.mrf.mxu0
        %3672 = vmatmul.f32.gmra.mxu0 %v3167
        %v3673 = vpop.f32.mrf.mxu0
        %v3674 = vadd.f32 0.0, %v3673
        %3675 = vdwg.mxu0
        %3677 = vst [vmem:[#allocation1] sm:$0xff] %v3674
        %s3678 = scalar_lea.vmem [#allocation1], 7
        %v3679 = vld [vmem:[%s3678] ss:$9 sm:$0xff]
        %v3681 = vadd.f32 %v3648, %v3679
        %v3682 = vtanh.pop %v3681
        %v3684 = vperm.slane %v3682, 0
        %v3686 = vld [vmem:[%s8] sm:$0xff]
        %v3687 = vld [vmem:[%s8 + $0x8] sm:$0xff]
        %v3688 = vld [vmem:[%s8 + $0x10] sm:$0xff]
        %v3689 = vld [vmem:[%s8 + $0x18] sm:$0xff]
        %v3690 = vld [vmem:[%s8 + $0x20] sm:$0xff]
        %v3691 = vld [vmem:[%s8 + $0x28] sm:$0xff]
        %v3692 = vld [vmem:[%s8 + $0x30] sm:$0xff]
        %v3693 = vld [vmem:[%s8 + $0x38] sm:$0xff]
        %v3694 = vld [vmem:[%s8 + $0x40] sm:$0xff]
        %v3695 = vld [vmem:[%s8 + $0x48] sm:$0xff]
        %v3696 = vld [vmem:[%s8 + $0x50] sm:$0xff]
        %v3697 = vld [vmem:[%s8 + $0x58] sm:$0xff]
        %v3698 = vld [vmem:[%s8 + $0x60] sm:$0xff]
        %v3699 = vld [vmem:[%s8 + $0x68] sm:$0xff]
        %v3700 = vld [vmem:[%s8 + $0x70] sm:$0xff]
        %v3701 = vld [vmem:[%s8 + $0x78] sm:$0xff]
        %v3702 = vld [vmem:[%s9] sm:$0x1]
        %v3704 = vperm.slane %v3702, 0
        %3706 = vmatpush.msra.mxu0 %v3701
        %3707 = vmatpush.msra.mxu0 %v3700
        %3708 = vmatpush.msra.mxu0 %v3699
        %3709 = vmatpush.msra.mxu0 %v3698
        %3710 = vmatpush.msra.mxu0 %v3697
        %3711 = vmatpush.msra.mxu0 %v3696
        %3712 = vmatpush.msra.mxu0 %v3695
        %3713 = vmatpush.msra.mxu0 %v3694
        %3714 = vmatpush.msra.mxu0 %v3693
        %3715 = vmatpush.msra.mxu0 %v3692
        %3716 = vmatpush.msra.mxu0 %v3691
        %3717 = vmatpush.msra.mxu0 %v3690
        %3718 = vmatpush.msra.mxu0 %v3689
        %3719 = vmatpush.msra.mxu0 %v3688
        %3720 = vmatpush.msra.mxu0 %v3687
        %3721 = vmatpush.msra.mxu0 %v3686
        %3722 = vmatmul.f32.gmra.mxu0 %v3684
        %v3723 = vpop.f32.mrf.mxu0
        %v3724 = vadd.f32 %v3704, %v3723
        %3725 = vdwg.mxu0
        %v3726 = vtanh.pop %v3724
        %v3727 = vld [vmem:[%s10] sm:$0xff]
        %v3728 = vld [vmem:[%s10 + $0x8] sm:$0xff]
        %v3729 = vld [vmem:[%s10 + $0x10] sm:$0xff]
        %v3730 = vld [vmem:[%s10 + $0x18] sm:$0xff]
        %v3731 = vld [vmem:[%s10 + $0x20] sm:$0xff]
        %v3732 = vld [vmem:[%s10 + $0x28] sm:$0xff]
        %v3733 = vld [vmem:[%s10 + $0x30] sm:$0xff]
        %v3734 = vld [vmem:[%s10 + $0x38] sm:$0xff]
        %v3735 = vld [vmem:[%s10 + $0x40] sm:$0xff]
        %v3736 = vld [vmem:[%s10 + $0x48] sm:$0xff]
        %v3737 = vld [vmem:[%s10 + $0x50] sm:$0xff]
        %v3738 = vld [vmem:[%s10 + $0x58] sm:$0xff]
        %v3739 = vld [vmem:[%s10 + $0x60] sm:$0xff]
        %v3740 = vld [vmem:[%s10 + $0x68] sm:$0xff]
        %v3741 = vld [vmem:[%s10 + $0x70] sm:$0xff]
        %v3742 = vld [vmem:[%s10 + $0x78] sm:$0xff]
        %v3743 = vld [vmem:[%s11] sm:$0x1]
        %v3745 = vperm.slane %v3743, 0
        %3747 = vmatpush.msra.mxu0 %v3742
        %3748 = vmatpush.msra.mxu0 %v3741
        %3749 = vmatpush.msra.mxu0 %v3740
        %3750 = vmatpush.msra.mxu0 %v3739
        %3751 = vmatpush.msra.mxu0 %v3738
        %3752 = vmatpush.msra.mxu0 %v3737
        %3753 = vmatpush.msra.mxu0 %v3736
        %3754 = vmatpush.msra.mxu0 %v3735
        %3755 = vmatpush.msra.mxu0 %v3734
        %3756 = vmatpush.msra.mxu0 %v3733
        %3757 = vmatpush.msra.mxu0 %v3732
        %3758 = vmatpush.msra.mxu0 %v3731
        %3759 = vmatpush.msra.mxu0 %v3730
        %3760 = vmatpush.msra.mxu0 %v3729
        %3761 = vmatpush.msra.mxu0 %v3728
        %3762 = vmatpush.msra.mxu0 %v3727
        %3763 = vmatmul.f32.gmra.mxu0 %v3726
        %v3764 = vpop.f32.mrf.mxu0
        %v3765 = vadd.f32 %v3745, %v3764
        %3766 = vdwg.mxu0
        %vm3767 = vcmp.lt.s32.totalorder %v453, 10
        %v3768 = vsel %vm3767, %v3765, -1e+30
        %3769 = vmax.xlane.f32.xlu0 %v3768
        %v3770 = vpop.xlane.xlu0 %3769
        %v3771 = vsub.f32 %v3768, %v3770
        %v3772 = vmul.f32 %v3771, 1.442695
        %v3773 = vpow.pop %v3772
        %3774 = vadd.xlane.f32.xlu0 %v3773
        %v3775 = vpop.xlane.xlu0 %3774
        %v3776 = vrcp.pop %v3775
        %v3777 = vmul.f32 %v3775, %v3776
        %v3778 = vsub.f32 1.0, %v3777
        %v3779 = vmul.f32 %v3776, %v3778
        %v3780 = vadd.f32 %v3776, %v3779
        %vm3781 = vweird.f32 %v3775
        %vm3782 = vweird.f32 %v3776
        %vm3783 = vmor %vm3781, %vm3782
        %v3784 = vsel %vm3783, %v3776, %v3780
        %v3785 = vand.u32 2147483647, %v3775
        %vm3786 = vcmp.eq.f32.partialorder %v3785, 8.507059e+37
        %v3787 = vand.u32 %v3775, 2147483648
        %v3788 = vor.u32 1.1754944e-38, %v3787
        %v3789 = vsel %vm3786, %v3788, %v3784
        %v3790 = vmul.f32 %v3773, %v3789
        %3791 = vst [vmem:[%s403] sm:$0x1] %v3790
        %s3792 = sand.u32 %s291, 1
        %s3793 = scalar_lea.sflag [#allocation5], %s3792
        %s3794 = sand.u32 %s291, 1
        %s3795 = scalar_lea.vmem [#allocation4], %s3794
        // Predicated region
        $region69: #{lenet5_forward.1} parent=67 // pred_check
          %p3796 = pneg %p301
        $region70: #{lenet5_forward.1} parent=67 // pred_check_branch
          %3798 = sbr.rel (%p3796) target = $region72
        $region71: #{lenet5_forward.1} parent=67 // pred_region
          %3800 = vsyncadd %s3793, 0
          %s3801 = scalar_lea.hbm %s12, %s26
          %s3803 = sshll.u32 %s3795, 4
          %s3804 = int_to_ptr.vmem [resolvable:$true] %s3803
          %s3805 = sshll.u32 %s3801, 4
          %s3806 = int_to_ptr.hbm [resolvable:$true] %s3805
          %3808 = dma.vmem_to_hbm [thread:$0]  %s3804, 16, %s3806, %s3793
        $region72: #{lenet5_forward.1} parent=67 // pred_fallthru
          _
      $region68: #{lenet5_forward.1} parent=5 // pred_fallthru
        _
      %p3809 = scmp.le.s32.totalorder 2, %s21
      // Predicated region
      $region73: #{lenet5_forward.1} parent=5 // pred_check
        %p3810 = pneg %p3809
      $region74: #{lenet5_forward.1} parent=5 // pred_check_branch
        %3812 = sbr.rel (%p3810) target = $region76
      $region75: #{lenet5_forward.1} parent=5 // pred_region
        %s3813 = ssub.s32 %s21, 2
        // Predicated region
        $region77: #{lenet5_forward.1} parent=75 // pred_check
          %p3814 = pneg %p307
        $region78: #{lenet5_forward.1} parent=75 // pred_check_branch
          %3816 = sbr.rel (%p3814) target = $region80
        $region79: #{lenet5_forward.1} parent=75 // pred_region
          %s3817 = sand.u32 %s292, 1
          %s3818 = scalar_lea.sflag [#allocation5], %s3817
          %s3819 = sand.u32 %s292, 1
          %s3820 = scalar_lea.vmem [#allocation4], %s3819
          %3822 = dma.done %s3818, 16
        $region80: #{lenet5_forward.1} parent=75 // pred_fallthru
          _
      $region76: #{lenet5_forward.1} parent=5 // pred_fallthru
        _
    $region6: #{lenet5_forward.1} parent=1 // loop_footer
      %s25 = sadd.s32 1, %s21
    $region7: #{lenet5_forward.1} parent=1 // loop_footer_branch
      %20 = sbr.rel target = $region3
    $region8: #{lenet5_forward.1} parent=1 // loop_exit
      _
    %3823 = vsyncpa [#allocation5], 1
    %s3824 = scalar_lea.sflag [#allocation5], 1
    %3825 = vsyncpa %s3824, 1

</llo_original>
